<compile_context>
chip_gen: v7x
topology: tpu7x:2x2x1
jax: 0.10.0
libtpu: 0.0.40
codegen_flags: <defaults>
</compile_context>

<pallas_src>
import math

import numpy as np

import jax
import jax.numpy as jnp
from jax.experimental import pallas as pl
from jax.experimental.pallas import tpu as pltpu

# ----------------------------- hyper-parameters ------------------------------
INPUT_DIM = 4
PAD_IN = 16                   # input features zero-padded to the bf16 sublane tile
HIDDEN_DIM = 32
NUM_HEADS = 1
NUM_ENC_BLOCKS = 2
NUM_CLASS_BLOCKS = 3
FC_DIMS = [100, 100]          # class_head_kwargs["fc_params"] widths
N_OUT = 2                     # class_head_kwargs["n_out_nodes"]
SEQ_LEN = 8
BATCH = 2
LN_EPS = 1e-5
LANE = 128                    # slab / padded head lane width
ATTN_SCALE = 1.0 / math.sqrt(HIDDEN_DIM // NUM_HEADS)
WEIGHT_DTYPE = jnp.bfloat16   # MXU operand dtype; all VPU/EUP math stays f32
W_ROW_ALIGN = 16              # bf16 (16,128) tile height -> aligned weight loads
B_ROW_ALIGN = 8               # f32 (8,128) tile height  -> aligned bias reads

assert NUM_HEADS == 1, "kernel is specialized for single-head attention"


# ------------------------------- shared math ----------------------------------
def _normalize(v):
    mu = jnp.mean(v, axis=-1, keepdims=True)
    var = jnp.mean(jnp.square(v - mu), axis=-1, keepdims=True)
    return (v - mu) * jax.lax.rsqrt(var + LN_EPS)


def _ln(v, w, b):
    return _normalize(v) * w + b


# -------------------------- pure-JAX reference path ---------------------------
def _mha_ref(query, kv, kp_bias, attn):
    """torch.nn.MultiheadAttention (batch_first, eval) for one sample, 1 head."""
    Wq, bq = attn["q"]
    Wk, bk = attn["k"]
    Wv, bv = attn["v"]
    Wo, bo = attn["o"]
    q = (query @ Wq + bq) * ATTN_SCALE
    k = kv @ Wk + bk
    v = kv @ Wv + bv
    s = q @ k.T + kp_bias
    s = s - jnp.max(s, axis=-1, keepdims=True)
    p = jnp.exp(s)
    p = p / jnp.sum(p, axis=-1, keepdims=True)
    return (p @ v) @ Wo + bo


def reference(x, mask, P):
    """Per-sample pure-JAX forward with the un-fused / un-padded parameters."""
    outs = []
    for b in range(x.shape[0]):
        xs, m = x[b], mask[b]
        mcol = m[:, None]
        kp = jnp.where(m == 1.0, 0.0, -1e30).astype(jnp.float32)[None, :]

        W, bb = P["in_proj"]
        h = xs @ W + bb
        for blk in P["enc"]:
            hm = h * mcol
            hn = _ln(hm, *blk["ln1"])
            att = _mha_ref(hn, hn, kp, blk["attn"])
            hm = hm + _ln(att, *blk["ln2"])
            z = _ln(hm, *blk["mlp_ln"])
            z = jax.nn.silu(z @ blk["fc1"][0] + blk["fc1"][1])
            h = hm + z @ blk["fc2"][0] + blk["fc2"][1]

        ct = P["class_token"]
        kp_cross = jnp.concatenate([jnp.zeros((1, 1), jnp.float32), kp], axis=-1)
        for blk in P["cross"]:
            x_cat = jnp.concatenate([ct, h * mcol], axis=0)
            xn = _ln(x_cat, *blk["ln1"])
            ct = _mha_ref(ct, xn, kp_cross, blk["attn"])

        z = ct
        for Wf, bf in P["head"][:-1]:
            z = jnp.maximum(z @ Wf + bf, 0.0)
        Wf, bf = P["head"][-1]
        outs.append(z @ Wf + bf)
    return jnp.concatenate(outs, axis=0)


# ------------------------------ parameter init ---------------------------------
def build_params(key):
    keys = iter(jax.random.split(key, 512))

    def lin(din, dout):
        W = jax.random.normal(next(keys), (din, dout), jnp.float32) / math.sqrt(din)
        b = 0.02 * jax.random.normal(next(keys), (1, dout), jnp.float32)
        return W, b

    def ln(dim):
        w = 1.0 + 0.1 * jax.random.normal(next(keys), (1, dim), jnp.float32)
        b = 0.1 * jax.random.normal(next(keys), (1, dim), jnp.float32)
        return w, b

    def mha(dim):
        return dict(q=lin(dim, dim), k=lin(dim, dim), v=lin(dim, dim), o=lin(dim, dim))

    P = dict(
        in_proj=lin(INPUT_DIM, HIDDEN_DIM),
        enc=[dict(ln1=ln(HIDDEN_DIM), attn=mha(HIDDEN_DIM), ln2=ln(HIDDEN_DIM),
                  mlp_ln=ln(HIDDEN_DIM), fc1=lin(HIDDEN_DIM, HIDDEN_DIM),
                  fc2=lin(HIDDEN_DIM, HIDDEN_DIM))
             for _ in range(NUM_ENC_BLOCKS)],
        class_token=jax.random.normal(next(keys), (1, HIDDEN_DIM), jnp.float32),
        cross=[dict(ln1=ln(HIDDEN_DIM), attn=mha(HIDDEN_DIM))
               for _ in range(NUM_CLASS_BLOCKS)],
        head=[lin(d_in, d_out)
              for d_in, d_out in zip([HIDDEN_DIM] + FC_DIMS, FC_DIMS + [N_OUT])],
    )
    return P


# ------------------------------ parameter packing ------------------------------
def _np(a):
    return np.asarray(a, np.float32)


def _fold_ln(ln_w, ln_b, W, b):
    """LN(x) @ W + b  ==  normalize(x) @ (diag(ln_w) @ W) + (ln_b @ W + b)."""
    ln_w = _np(ln_w).reshape(-1)
    ln_b = _np(ln_b).reshape(1, -1)
    W, b = _np(W), _np(b).reshape(1, -1)
    return ln_w[:, None] * W, ln_b @ W + b


class _Packer:
    """Packs 2-D parameter blocks into one zero-padded (rows, 128) slab."""

    def __init__(self, row_align, width=LANE):
        self.row_align = row_align
        self.width = width
        self.blocks = []
        self.n_rows = 0

    def add(self, arr, rows_pad=None):
        a = _np(arr)
        if a.ndim == 1:
            a = a[None, :]
        r, c = a.shape
        rp = rows_pad if rows_pad is not None else r
        rp = ((rp + self.row_align - 1) // self.row_align) * self.row_align
        assert rp >= r and c <= self.width
        blk = np.zeros((rp, self.width), np.float32)
        blk[:r, :c] = a
        off = self.n_rows
        self.blocks.append(blk)
        self.n_rows += rp
        return off, rp

    def finalize(self, dtype):
        return jnp.asarray(np.concatenate(self.blocks, axis=0), dtype)


def pack_params(P):
    wp = _Packer(W_ROW_ALIGN)     # weights: bf16, 16-row aligned blocks
    bp = _Packer(B_ROW_ALIGN)     # biases / LN / class-token: f32, 8-row aligned
    wmeta, bmeta = {}, {}
    H = HIDDEN_DIM

    def addw(name, W, rows_pad=None):
        wmeta[name] = wp.add(W, rows_pad=rows_pad)

    def addb(name, v):
        off, _ = bp.add(_np(v).reshape(1, -1))
        bmeta[name] = off

    # ---- input projection (rows padded to PAD_IN to match wrapper-padded x) ----
    Win, bin_ = P["in_proj"]
    addw("in_proj", Win, rows_pad=PAD_IN)
    addb("in_projb", bin_)

    # ---- encoder blocks: fold ln1 + q-scale into fused Wqkv, mlp_ln into fc1 ----
    for i, blk in enumerate(P["enc"]):
        p = f"enc{i}_"
        Wq, bq = blk["attn"]["q"]; Wk, bk = blk["attn"]["k"]
        Wv, bv = blk["attn"]["v"]; Wo, bo = blk["attn"]["o"]
        Wqkv = np.concatenate([_np(Wq), _np(Wk), _np(Wv)], axis=1)      # (H,3H)
        bqkv = np.concatenate([_np(bq), _np(bk), _np(bv)], axis=1)
        Wqkv, bqkv = _fold_ln(blk["ln1"][0], blk["ln1"][1], Wqkv, bqkv)  # pre-LN fold
        Wqkv[:, :H] *= ATTN_SCALE                                        # q-scale fold
        bqkv[:, :H] *= ATTN_SCALE
        addw(p + "qkv", Wqkv); addb(p + "qkvb", bqkv)
        addw(p + "o", Wo); addb(p + "ob", bo)
        addb(p + "ln2w", blk["ln2"][0]); addb(p + "ln2b", blk["ln2"][1])
        Wf1, bf1 = _fold_ln(blk["mlp_ln"][0], blk["mlp_ln"][1], *blk["fc1"])
        addw(p + "fc1", Wf1); addb(p + "fc1b", bf1)
        addw(p + "fc2", blk["fc2"][0]); addb(p + "fc2b", blk["fc2"][1])

    addb("class_token", P["class_token"])

    # ---- cross blocks: fold scale into Wq, ln1 into fused [Wk|Wv] ----
    for j, blk in enumerate(P["cross"]):
        p = f"cls{j}_"
        Wq, bq = blk["attn"]["q"]; Wk, bk = blk["attn"]["k"]
        Wv, bv = blk["attn"]["v"]; Wo, bo = blk["attn"]["o"]
        addw(p + "q", _np(Wq) * ATTN_SCALE)
        addb(p + "qb", _np(bq) * ATTN_SCALE)
        Wkf, bkf = _fold_ln(blk["ln1"][0], blk["ln1"][1], Wk, bk)
        Wvf, bvf = _fold_ln(blk["ln1"][0], blk["ln1"][1], Wv, bv)
        addw(p + "kv", np.concatenate([Wkf, Wvf], axis=1))               # (H,2H)
        addb(p + "kvb", np.concatenate([bkf, bvf], axis=1))
        addw(p + "o", Wo); addb(p + "ob", bo)

    # ---- classification head: 128-lane padded so matmuls + store are lane-dense.
    # Padded lanes stay exactly 0 through bias + ReLU.
    (W1, b1), (W2, b2), (W3, b3) = P["head"]
    addw("head0", W1);                addb("head0b", b1)
    addw("head1", W2, rows_pad=LANE); addb("head1b", b2)
    addw("head2", W3, rows_pad=LANE); addb("head2b", b3)

    return wp.finalize(WEIGHT_DTYPE), bp.finalize(jnp.float32), wmeta, bmeta


# ------------------------------ in-kernel forward -------------------------------
def forward_packed(xp, mcol, kp, w_ref, b_ref, wmeta, bmeta):
    """Batched forward. xp:(B,S,PAD_IN) mcol:(B,S,1) kp:(B,1,S) -> (B,LANE) logits."""
    GB, S, _ = xp.shape
    H = HIDDEN_DIM

    def W(name):
        off, rows = wmeta[name]
        return w_ref[pl.ds(off, rows), :]            # (rows,128) bf16, tile-aligned

    def B(name, width=LANE):
        row = b_ref[pl.ds(bmeta[name], 1), :]        # (1,128) f32, 8-row aligned
        return row if width == LANE else row[:, :width]

    def lin3(x3, Wm, bv):
        """(B,S,K) @ (K,128) + (1,128) -> (B,S,128); matmul operands in bf16."""
        gb, s, k = x3.shape
        y = jnp.dot(x3.reshape(gb * s, k).astype(Wm.dtype), Wm,
                    preferred_element_type=jnp.float32) + bv
        return y.reshape(gb, s, LANE)

    def lin2(x2, Wm, bv):
        return jnp.dot(x2.astype(Wm.dtype), Wm,
                       preferred_element_type=jnp.float32) + bv

    # ---- input projection (padded input features are zero) ----
    h = lin3(xp, W("in_proj"), B("in_projb"))[..., :H]                  # (B,S,H)

    # ---- encoder NormformerStack ----
    # TODO(synk): NormformerStack source was not provided; implemented as the
    # standard Normformer self-attention block (mask -> pre-LN MHA -> post-LN
    # residual -> pre-LN SiLU MLP residual) with mlp_dim == hidden_dim.
    # ln1 / mlp_ln affines and the 1/sqrt(d) q-scale are folded into the packed
    # qkv / fc1 weights, so only un-affined normalization remains in-kernel.
    for i in range(NUM_ENC_BLOCKS):
        p = f"enc{i}_"
        hm = h * mcol
        qkv = lin3(_normalize(hm), W(p + "qkv"), B(p + "qkvb"))         # (B,S,128)
        q, k, v = qkv[..., :H], qkv[..., H:2 * H], qkv[..., 2 * H:3 * H]
        s = jnp.einsum("bqd,bkd->bqk", q, k,
                       preferred_element_type=jnp.float32) + kp         # (B,S,S)
        s = s - jnp.max(s, axis=-1, keepdims=True)
        e = jnp.exp(s)
        pr = e * pl.reciprocal(jnp.sum(e, axis=-1, keepdims=True), approx=True)
        att = jnp.einsum("bqk,bkd->bqd", pr, v,
                         preferred_element_type=jnp.float32)            # (B,S,H)
        att = lin3(att, W(p + "o"), B(p + "ob"))[..., :H]
        hm = hm + _ln(att, B(p + "ln2w", H), B(p + "ln2b", H))
        z = jax.nn.silu(lin3(_normalize(hm), W(p + "fc1"), B(p + "fc1b"))[..., :H])
        h = hm + lin3(z, W(p + "fc2"), B(p + "fc2b"))[..., :H]

    # ---- class-attention cross blocks ----
    # Hoisted invariants: masked tokens, their un-affined LN statistics and the
    # key-padding bias column. The per-block ln1 affine is folded into the
    # fused K|V weights, so hm_hat is reused untouched by every block; the
    # (never masked) class-token key/value is a separate term, so no in-kernel
    # concatenation is materialized.
    hm = h * mcol                                                        # (B,S,H)
    hm_hat = _normalize(hm)
    kp_col = jnp.where(mcol > 0.5, 0.0, -1e30)                           # (B,S,1)

    ct = jnp.broadcast_to(B("class_token", H).reshape(1, 1, H), (GB, 1, H))
    for j in range(NUM_CLASS_BLOCKS):
        p = f"cls{j}_"
        Wkv, bkv = W(p + "kv"), B(p + "kvb")
        q = lin3(ct, W(p + "q"), B(p + "qb"))[..., :H]                   # scaled query
        kv0 = lin3(_normalize(ct), Wkv, bkv)                             # (B,1,128)
        kvh = lin3(hm_hat, Wkv, bkv)                                     # (B,S,128)
        k0, v0 = kv0[..., :H], kv0[..., H:2 * H]
        kh, vh = kvh[..., :H], kvh[..., H:2 * H]
        s0 = jnp.sum(q * k0, axis=-1, keepdims=True)                     # (B,1,1)
        sh = jnp.sum(q * kh, axis=-1, keepdims=True) + kp_col            # (B,S,1)
        m = jnp.maximum(jnp.max(sh, axis=-2, keepdims=True), s0)         # (B,1,1)
        e0 = jnp.exp(s0 - m)
        eh = jnp.exp(sh - m)
        inv = pl.reciprocal(e0 + jnp.sum(eh, axis=-2, keepdims=True), approx=True)
        att = (e0 * v0 + jnp.sum(eh * vh, axis=-2, keepdims=True)) * inv
        ct = lin3(att, W(p + "o"), B(p + "ob"))[..., :H]

    # ---- classification head (Dropout = identity), 128-lane padded ----
    z = ct.reshape(GB, H)
    z = jnp.maximum(lin2(z, W("head0"), B("head0b")), 0.0)
    z = jnp.maximum(lin2(z, W("head1"), B("head1b")), 0.0)
    return lin2(z, W("head2"), B("head2b"))                              # (B,LANE)


# ------------------------------- Pallas wrapper ---------------------------------
def make_classifier(packed, batch, seq_len):
    wslab, bslab, wmeta, bmeta = packed

    def kernel(x_ref, mc_ref, kp_ref, w_ref, b_ref, out_ref):
        out_ref[...] = forward_packed(x_ref[...], mc_ref[...], kp_ref[...],
                                      w_ref, b_ref, wmeta, bmeta)

    # Single grid step: the whole batch is folded into the matmul M dimension.
    # v5e/v6e have one TensorCore, and at BATCH=2 the per-core fixed cost
    # (weight loads, LN -> matmul -> softmax latency chains) dominates, so a
    # 2-way core split on v7x would not pay for itself either.
    call = pl.pallas_call(
        kernel,
        out_shape=jax.ShapeDtypeStruct((batch, LANE), jnp.float32),
        grid_spec=pltpu.PrefetchScalarGridSpec(
            num_scalar_prefetch=0,
            grid=(1,),
            in_specs=[
                pl.BlockSpec((batch, seq_len, PAD_IN), lambda i: (0, 0, 0)),
                pl.BlockSpec((batch, seq_len, 1), lambda i: (0, 0, 0)),
                pl.BlockSpec((batch, 1, seq_len), lambda i: (0, 0, 0)),
                pl.BlockSpec(wslab.shape, lambda i: (0, 0)),   # packed weight slab
                pl.BlockSpec(bslab.shape, lambda i: (0, 0)),   # packed bias/LN slab
            ],
            out_specs=pl.BlockSpec((batch, LANE), lambda i: (0, 0)),
        ),
        compiler_params=pltpu.CompilerParams(dimension_semantics=("arbitrary",)),
    )

    @jax.jit
    def apply(x, mask):
        xp = jnp.concatenate(
            [x, jnp.zeros((batch, seq_len, PAD_IN - INPUT_DIM), x.dtype)], axis=-1)
        mcol = mask[:, :, None]
        kp = jnp.where(mask == 1.0, 0.0, -1e30).astype(jnp.float32)[:, None, :]
        out = call(xp, mcol, kp, wslab, bslab)
        return out[:, :N_OUT]                   # slice logical logits from padded lanes

    return apply


# ----------------------------------- main ----------------------------------------
if __name__ == "__main__":
    key = jax.random.PRNGKey(0)
    k_params, k_x, k_mask = jax.random.split(key, 3)

    P = build_params(k_params)
    packed = pack_params(P)

    x = jax.random.normal(k_x, (BATCH, SEQ_LEN, INPUT_DIM), jnp.float32)
    mask = (jax.random.uniform(k_mask, (BATCH, SEQ_LEN)) > 0.3).astype(jnp.float32)
    mask = mask.at[:, 0].set(1.0)   # at least one valid token per sample

    classifier = make_classifier(packed, BATCH, SEQ_LEN)
    out = jax.block_until_ready(classifier(x, mask))

    ref = jax.block_until_ready(reference(x, mask, P))
    assert out.shape == (BATCH, N_OUT)
    # tolerance covers bf16 matmul operands + approximate softmax reciprocal
    assert jnp.allclose(out, ref, atol=5e-2, rtol=5e-2), (out, ref)

    print("KERNEL_OK")
</pallas_src>

<mosaic_0001>
module attributes {stable_mosaic.version = 11 : i64} {
  func.func @kernel(%arg0: i32, %arg1: memref<2x8x16xf32, #tpu.memory_space<vmem>>, %arg2: memref<2x8x1xf32, #tpu.memory_space<vmem>>, %arg3: memref<2x1x8xf32, #tpu.memory_space<vmem>>, %arg4: memref<848x128xbf16, #tpu.memory_space<vmem>>, %arg5: memref<208x128xf32, #tpu.memory_space<vmem>>, %arg6: memref<2x128xf32, #tpu.memory_space<vmem>>) attributes {dimension_semantics = [#tpu.dimension_semantics<arbitrary>], iteration_bounds = array<i64: 1>, scalar_prefetch = 0 : i64, scratch_operands = 0 : i64, tpu.core_type = #tpu.core_type<tc>, window_params = [{pipeline_mode = #tpu.pipeline_mode<synchronous>, transform_indices = @transform_0, window_bounds = array<i64: 2, 8, 16>}, {pipeline_mode = #tpu.pipeline_mode<synchronous>, transform_indices = @transform_1, window_bounds = array<i64: 2, 8, 1>}, {pipeline_mode = #tpu.pipeline_mode<synchronous>, transform_indices = @transform_2, window_bounds = array<i64: 2, 1, 8>}, {pipeline_mode = #tpu.pipeline_mode<synchronous>, transform_indices = @transform_3, window_bounds = array<i64: 848, 128>}, {pipeline_mode = #tpu.pipeline_mode<synchronous>, transform_indices = @transform_4, window_bounds = array<i64: 208, 128>}, {pipeline_mode = #tpu.pipeline_mode<synchronous>, transform_indices = @transform_5, window_bounds = array<i64: 2, 128>}]} {
    %c0 = arith.constant 0 : index
    %c0_0 = arith.constant 0 : index
    %c0_1 = arith.constant 0 : index
    %0 = vector.load %arg1[%c0, %c0_0, %c0_1] : memref<2x8x16xf32, #tpu.memory_space<vmem>>, vector<2x8x16xf32>
    %c0_2 = arith.constant 0 : index
    %c0_3 = arith.constant 0 : index
    %c0_4 = arith.constant 0 : index
    %1 = vector.load %arg2[%c0_2, %c0_3, %c0_4] : memref<2x8x1xf32, #tpu.memory_space<vmem>>, vector<2x8x1xf32>
    %c0_5 = arith.constant 0 : index
    %c0_6 = arith.constant 0 : index
    %c0_7 = arith.constant 0 : index
    %2 = vector.load %arg3[%c0_5, %c0_6, %c0_7] : memref<2x1x8xf32, #tpu.memory_space<vmem>>, vector<2x1x8xf32>
    %c0_8 = arith.constant 0 : index
    %c0_9 = arith.constant 0 : index
    %3 = vector.load %arg4[%c0_8, %c0_9] : memref<848x128xbf16, #tpu.memory_space<vmem>>, vector<16x128xbf16>
    %c0_10 = arith.constant 0 : index
    %c0_11 = arith.constant 0 : index
    %4 = vector.load %arg5[%c0_10, %c0_11] : memref<208x128xf32, #tpu.memory_space<vmem>>, vector<1x128xf32>
    %5 = vector.shape_cast %0 : vector<2x8x16xf32> to vector<16x16xf32>
    %6 = arith.truncf %5 : vector<16x16xf32> to vector<16x16xbf16>
    %cst = arith.constant dense<0.000000e+00> : vector<16x128xf32>
    %7 = tpu.matmul %6, %3, %cst {dimension_numbers = #tpu.dot_dimension_numbers<[1], [0], [0], [1], [0, 0, 1, 1], [], []>} : vector<16x16xbf16>, vector<16x128xbf16>, vector<16x128xf32> -> vector<16x128xf32>
    %8 = vector.broadcast %4 : vector<1x128xf32> to vector<16x128xf32>
    %9 = arith.addf %7, %8 : vector<16x128xf32>
    %10 = vector.shape_cast %9 : vector<16x128xf32> to vector<2x8x128xf32>
    %11 = vector.extract_strided_slice %10 {offsets = [0, 0, 0], sizes = [2, 8, 32], strides = [1, 1, 1]} : vector<2x8x128xf32> to vector<2x8x32xf32>
    %12 = vector.broadcast %1 : vector<2x8x1xf32> to vector<2x8x32xf32>
    %13 = arith.mulf %11, %12 : vector<2x8x32xf32>
    %cst_12 = arith.constant dense<0.000000e+00> : vector<2x8xf32>
    %14 = vector.multi_reduction <add>, %13, %cst_12 [2] : vector<2x8x32xf32> to vector<2x8xf32>
    %15 = vector.shape_cast %14 : vector<2x8xf32> to vector<2x8x1xf32>
    %cst_13 = arith.constant 3.200000e+01 : f32
    %16 = vector.broadcast %cst_13 : f32 to vector<2x8x1xf32>
    %17 = arith.divf %15, %16 : vector<2x8x1xf32>
    %18 = vector.broadcast %17 : vector<2x8x1xf32> to vector<2x8x32xf32>
    %19 = arith.subf %13, %18 : vector<2x8x32xf32>
    %20 = arith.mulf %19, %19 : vector<2x8x32xf32>
    %cst_14 = arith.constant dense<0.000000e+00> : vector<2x8xf32>
    %21 = vector.multi_reduction <add>, %20, %cst_14 [2] : vector<2x8x32xf32> to vector<2x8xf32>
    %22 = vector.shape_cast %21 : vector<2x8xf32> to vector<2x8x1xf32>
    %cst_15 = arith.constant 3.200000e+01 : f32
    %23 = vector.broadcast %cst_15 : f32 to vector<2x8x1xf32>
    %24 = arith.divf %22, %23 : vector<2x8x1xf32>
    %25 = vector.broadcast %17 : vector<2x8x1xf32> to vector<2x8x32xf32>
    %26 = arith.subf %13, %25 : vector<2x8x32xf32>
    %cst_16 = arith.constant 9.99999974E-6 : f32
    %27 = vector.broadcast %cst_16 : f32 to vector<2x8x1xf32>
    %28 = arith.addf %24, %27 : vector<2x8x1xf32>
    %29 = math.rsqrt %28 : vector<2x8x1xf32>
    %30 = vector.broadcast %29 : vector<2x8x1xf32> to vector<2x8x32xf32>
    %31 = arith.mulf %26, %30 : vector<2x8x32xf32>
    %c16 = arith.constant 16 : index
    %c0_17 = arith.constant 0 : index
    %32 = vector.load %arg4[%c16, %c0_17] : memref<848x128xbf16, #tpu.memory_space<vmem>>, vector<32x128xbf16>
    %c8 = arith.constant 8 : index
    %c0_18 = arith.constant 0 : index
    %33 = vector.load %arg5[%c8, %c0_18] : memref<208x128xf32, #tpu.memory_space<vmem>>, vector<1x128xf32>
    %34 = vector.shape_cast %31 : vector<2x8x32xf32> to vector<16x32xf32>
    %35 = arith.truncf %34 : vector<16x32xf32> to vector<16x32xbf16>
    %cst_19 = arith.constant dense<0.000000e+00> : vector<16x128xf32>
    %36 = tpu.matmul %35, %32, %cst_19 {dimension_numbers = #tpu.dot_dimension_numbers<[1], [0], [0], [1], [0, 0, 1, 1], [], []>} : vector<16x32xbf16>, vector<32x128xbf16>, vector<16x128xf32> -> vector<16x128xf32>
    %37 = vector.broadcast %33 : vector<1x128xf32> to vector<16x128xf32>
    %38 = arith.addf %36, %37 : vector<16x128xf32>
    %39 = vector.shape_cast %38 : vector<16x128xf32> to vector<2x8x128xf32>
    %40 = vector.extract_strided_slice %39 {offsets = [0, 0, 0], sizes = [2, 8, 32], strides = [1, 1, 1]} : vector<2x8x128xf32> to vector<2x8x32xf32>
    %41 = vector.extract_strided_slice %39 {offsets = [0, 0, 32], sizes = [2, 8, 32], strides = [1, 1, 1]} : vector<2x8x128xf32> to vector<2x8x32xf32>
    %42 = vector.extract_strided_slice %39 {offsets = [0, 0, 64], sizes = [2, 8, 32], strides = [1, 1, 1]} : vector<2x8x128xf32> to vector<2x8x32xf32>
    "tpu.trace_start"() <{level = 10 : i32, message = "bqd,bkd->bqk"}> : () -> ()
    %cst_20 = arith.constant dense<0.000000e+00> : vector<2x8x8xf32>
    %43 = tpu.matmul %40, %41, %cst_20 {dimension_numbers = #tpu.dot_dimension_numbers<[2], [2], [1], [1], [0, 0, 0, 1, 1, 1], [0], [0]>} : vector<2x8x32xf32>, vector<2x8x32xf32>, vector<2x8x8xf32> -> vector<2x8x8xf32>
    "tpu.trace_stop"() : () -> ()
    %44 = vector.broadcast %2 : vector<2x1x8xf32> to vector<2x8x8xf32>
    %45 = arith.addf %43, %44 : vector<2x8x8xf32>
    %cst_21 = arith.constant dense<0xFF800000> : vector<2x8xf32>
    %46 = vector.multi_reduction <maximumf>, %45, %cst_21 [2] : vector<2x8x8xf32> to vector<2x8xf32>
    %47 = vector.shape_cast %46 : vector<2x8xf32> to vector<2x8x1xf32>
    %48 = vector.broadcast %47 : vector<2x8x1xf32> to vector<2x8x8xf32>
    %49 = arith.subf %45, %48 : vector<2x8x8xf32>
    %50 = math.exp %49 : vector<2x8x8xf32>
    %cst_22 = arith.constant dense<0.000000e+00> : vector<2x8xf32>
    %51 = vector.multi_reduction <add>, %50, %cst_22 [2] : vector<2x8x8xf32> to vector<2x8xf32>
    %52 = vector.shape_cast %51 : vector<2x8xf32> to vector<2x8x1xf32>
    %53 = tpu.reciprocal %52 {approx = true} : vector<2x8x1xf32> -> vector<2x8x1xf32>
    %54 = vector.broadcast %53 : vector<2x8x1xf32> to vector<2x8x8xf32>
    %55 = arith.mulf %50, %54 : vector<2x8x8xf32>
    "tpu.trace_start"() <{level = 10 : i32, message = "bqk,bkd->bqd"}> : () -> ()
    %cst_23 = arith.constant dense<0.000000e+00> : vector<2x8x32xf32>
    %56 = tpu.matmul %55, %42, %cst_23 {dimension_numbers = #tpu.dot_dimension_numbers<[2], [1], [1], [2], [0, 0, 0, 1, 1, 2], [0], [0]>} : vector<2x8x8xf32>, vector<2x8x32xf32>, vector<2x8x32xf32> -> vector<2x8x32xf32>
    "tpu.trace_stop"() : () -> ()
    %c48 = arith.constant 48 : index
    %c0_24 = arith.constant 0 : index
    %57 = vector.load %arg4[%c48, %c0_24] : memref<848x128xbf16, #tpu.memory_space<vmem>>, vector<32x128xbf16>
    %c16_25 = arith.constant 16 : index
    %c0_26 = arith.constant 0 : index
    %58 = vector.load %arg5[%c16_25, %c0_26] : memref<208x128xf32, #tpu.memory_space<vmem>>, vector<1x128xf32>
    %59 = vector.shape_cast %56 : vector<2x8x32xf32> to vector<16x32xf32>
    %60 = arith.truncf %59 : vector<16x32xf32> to vector<16x32xbf16>
    %cst_27 = arith.constant dense<0.000000e+00> : vector<16x128xf32>
    %61 = tpu.matmul %60, %57, %cst_27 {dimension_numbers = #tpu.dot_dimension_numbers<[1], [0], [0], [1], [0, 0, 1, 1], [], []>} : vector<16x32xbf16>, vector<32x128xbf16>, vector<16x128xf32> -> vector<16x128xf32>
    %62 = vector.broadcast %58 : vector<1x128xf32> to vector<16x128xf32>
    %63 = arith.addf %61, %62 : vector<16x128xf32>
    %64 = vector.shape_cast %63 : vector<16x128xf32> to vector<2x8x128xf32>
    %65 = vector.extract_strided_slice %64 {offsets = [0, 0, 0], sizes = [2, 8, 32], strides = [1, 1, 1]} : vector<2x8x128xf32> to vector<2x8x32xf32>
    %c24 = arith.constant 24 : index
    %c0_28 = arith.constant 0 : index
    %66 = vector.load %arg5[%c24, %c0_28] : memref<208x128xf32, #tpu.memory_space<vmem>>, vector<1x128xf32>
    %67 = vector.extract_strided_slice %66 {offsets = [0, 0], sizes = [1, 32], strides = [1, 1]} : vector<1x128xf32> to vector<1x32xf32>
    %c32 = arith.constant 32 : index
    %c0_29 = arith.constant 0 : index
    %68 = vector.load %arg5[%c32, %c0_29] : memref<208x128xf32, #tpu.memory_space<vmem>>, vector<1x128xf32>
    %69 = vector.extract_strided_slice %68 {offsets = [0, 0], sizes = [1, 32], strides = [1, 1]} : vector<1x128xf32> to vector<1x32xf32>
    %cst_30 = arith.constant dense<0.000000e+00> : vector<2x8xf32>
    %70 = vector.multi_reduction <add>, %65, %cst_30 [2] : vector<2x8x32xf32> to vector<2x8xf32>
    %71 = vector.shape_cast %70 : vector<2x8xf32> to vector<2x8x1xf32>
    %cst_31 = arith.constant 3.200000e+01 : f32
    %72 = vector.broadcast %cst_31 : f32 to vector<2x8x1xf32>
    %73 = arith.divf %71, %72 : vector<2x8x1xf32>
    %74 = vector.broadcast %73 : vector<2x8x1xf32> to vector<2x8x32xf32>
    %75 = arith.subf %65, %74 : vector<2x8x32xf32>
    %76 = arith.mulf %75, %75 : vector<2x8x32xf32>
    %cst_32 = arith.constant dense<0.000000e+00> : vector<2x8xf32>
    %77 = vector.multi_reduction <add>, %76, %cst_32 [2] : vector<2x8x32xf32> to vector<2x8xf32>
    %78 = vector.shape_cast %77 : vector<2x8xf32> to vector<2x8x1xf32>
    %cst_33 = arith.constant 3.200000e+01 : f32
    %79 = vector.broadcast %cst_33 : f32 to vector<2x8x1xf32>
    %80 = arith.divf %78, %79 : vector<2x8x1xf32>
    %81 = vector.broadcast %73 : vector<2x8x1xf32> to vector<2x8x32xf32>
    %82 = arith.subf %65, %81 : vector<2x8x32xf32>
    %cst_34 = arith.constant 9.99999974E-6 : f32
    %83 = vector.broadcast %cst_34 : f32 to vector<2x8x1xf32>
    %84 = arith.addf %80, %83 : vector<2x8x1xf32>
    %85 = math.rsqrt %84 : vector<2x8x1xf32>
    %86 = vector.broadcast %85 : vector<2x8x1xf32> to vector<2x8x32xf32>
    %87 = arith.mulf %82, %86 : vector<2x8x32xf32>
    %88 = vector.shape_cast %67 : vector<1x32xf32> to vector<1x1x32xf32>
    %89 = vector.broadcast %88 : vector<1x1x32xf32> to vector<2x8x32xf32>
    %90 = arith.mulf %87, %89 : vector<2x8x32xf32>
    %91 = vector.shape_cast %69 : vector<1x32xf32> to vector<1x1x32xf32>
    %92 = vector.broadcast %91 : vector<1x1x32xf32> to vector<2x8x32xf32>
    %93 = arith.addf %90, %92 : vector<2x8x32xf32>
    %94 = arith.addf %13, %93 : vector<2x8x32xf32>
    %cst_35 = arith.constant dense<0.000000e+00> : vector<2x8xf32>
    %95 = vector.multi_reduction <add>, %94, %cst_35 [2] : vector<2x8x32xf32> to vector<2x8xf32>
    %96 = vector.shape_cast %95 : vector<2x8xf32> to vector<2x8x1xf32>
    %cst_36 = arith.constant 3.200000e+01 : f32
    %97 = vector.broadcast %cst_36 : f32 to vector<2x8x1xf32>
    %98 = arith.divf %96, %97 : vector<2x8x1xf32>
    %99 = vector.broadcast %98 : vector<2x8x1xf32> to vector<2x8x32xf32>
    %100 = arith.subf %94, %99 : vector<2x8x32xf32>
    %101 = arith.mulf %100, %100 : vector<2x8x32xf32>
    %cst_37 = arith.constant dense<0.000000e+00> : vector<2x8xf32>
    %102 = vector.multi_reduction <add>, %101, %cst_37 [2] : vector<2x8x32xf32> to vector<2x8xf32>
    %103 = vector.shape_cast %102 : vector<2x8xf32> to vector<2x8x1xf32>
    %cst_38 = arith.constant 3.200000e+01 : f32
    %104 = vector.broadcast %cst_38 : f32 to vector<2x8x1xf32>
    %105 = arith.divf %103, %104 : vector<2x8x1xf32>
    %106 = vector.broadcast %98 : vector<2x8x1xf32> to vector<2x8x32xf32>
    %107 = arith.subf %94, %106 : vector<2x8x32xf32>
    %cst_39 = arith.constant 9.99999974E-6 : f32
    %108 = vector.broadcast %cst_39 : f32 to vector<2x8x1xf32>
    %109 = arith.addf %105, %108 : vector<2x8x1xf32>
    %110 = math.rsqrt %109 : vector<2x8x1xf32>
    %111 = vector.broadcast %110 : vector<2x8x1xf32> to vector<2x8x32xf32>
    %112 = arith.mulf %107, %111 : vector<2x8x32xf32>
    %c80 = arith.constant 80 : index
    %c0_40 = arith.constant 0 : index
    %113 = vector.load %arg4[%c80, %c0_40] : memref<848x128xbf16, #tpu.memory_space<vmem>>, vector<32x128xbf16>
    %c40 = arith.constant 40 : index
    %c0_41 = arith.constant 0 : index
    %114 = vector.load %arg5[%c40, %c0_41] : memref<208x128xf32, #tpu.memory_space<vmem>>, vector<1x128xf32>
    %115 = vector.shape_cast %112 : vector<2x8x32xf32> to vector<16x32xf32>
    %116 = arith.truncf %115 : vector<16x32xf32> to vector<16x32xbf16>
    %cst_42 = arith.constant dense<0.000000e+00> : vector<16x128xf32>
    %117 = tpu.matmul %116, %113, %cst_42 {dimension_numbers = #tpu.dot_dimension_numbers<[1], [0], [0], [1], [0, 0, 1, 1], [], []>} : vector<16x32xbf16>, vector<32x128xbf16>, vector<16x128xf32> -> vector<16x128xf32>
    %118 = vector.broadcast %114 : vector<1x128xf32> to vector<16x128xf32>
    %119 = arith.addf %117, %118 : vector<16x128xf32>
    %120 = vector.shape_cast %119 : vector<16x128xf32> to vector<2x8x128xf32>
    %121 = vector.extract_strided_slice %120 {offsets = [0, 0, 0], sizes = [2, 8, 32], strides = [1, 1, 1]} : vector<2x8x128xf32> to vector<2x8x32xf32>
    %122 = arith.negf %121 : vector<2x8x32xf32>
    %123 = math.exp %122 : vector<2x8x32xf32>
    %cst_43 = arith.constant 1.000000e+00 : f32
    %124 = vector.broadcast %cst_43 : f32 to vector<2x8x32xf32>
    %125 = arith.addf %124, %123 : vector<2x8x32xf32>
    %126 = arith.divf %124, %125 : vector<2x8x32xf32>
    %127 = arith.mulf %121, %126 : vector<2x8x32xf32>
    %c112 = arith.constant 112 : index
    %c0_44 = arith.constant 0 : index
    %128 = vector.load %arg4[%c112, %c0_44] : memref<848x128xbf16, #tpu.memory_space<vmem>>, vector<32x128xbf16>
    %c48_45 = arith.constant 48 : index
    %c0_46 = arith.constant 0 : index
    %129 = vector.load %arg5[%c48_45, %c0_46] : memref<208x128xf32, #tpu.memory_space<vmem>>, vector<1x128xf32>
    %130 = vector.shape_cast %127 : vector<2x8x32xf32> to vector<16x32xf32>
    %131 = arith.truncf %130 : vector<16x32xf32> to vector<16x32xbf16>
    %cst_47 = arith.constant dense<0.000000e+00> : vector<16x128xf32>
    %132 = tpu.matmul %131, %128, %cst_47 {dimension_numbers = #tpu.dot_dimension_numbers<[1], [0], [0], [1], [0, 0, 1, 1], [], []>} : vector<16x32xbf16>, vector<32x128xbf16>, vector<16x128xf32> -> vector<16x128xf32>
    %133 = vector.broadcast %129 : vector<1x128xf32> to vector<16x128xf32>
    %134 = arith.addf %132, %133 : vector<16x128xf32>
    %135 = vector.shape_cast %134 : vector<16x128xf32> to vector<2x8x128xf32>
    %136 = vector.extract_strided_slice %135 {offsets = [0, 0, 0], sizes = [2, 8, 32], strides = [1, 1, 1]} : vector<2x8x128xf32> to vector<2x8x32xf32>
    %137 = arith.addf %94, %136 : vector<2x8x32xf32>
    %138 = vector.broadcast %1 : vector<2x8x1xf32> to vector<2x8x32xf32>
    %139 = arith.mulf %137, %138 : vector<2x8x32xf32>
    %cst_48 = arith.constant dense<0.000000e+00> : vector<2x8xf32>
    %140 = vector.multi_reduction <add>, %139, %cst_48 [2] : vector<2x8x32xf32> to vector<2x8xf32>
    %141 = vector.shape_cast %140 : vector<2x8xf32> to vector<2x8x1xf32>
    %cst_49 = arith.constant 3.200000e+01 : f32
    %142 = vector.broadcast %cst_49 : f32 to vector<2x8x1xf32>
    %143 = arith.divf %141, %142 : vector<2x8x1xf32>
    %144 = vector.broadcast %143 : vector<2x8x1xf32> to vector<2x8x32xf32>
    %145 = arith.subf %139, %144 : vector<2x8x32xf32>
    %146 = arith.mulf %145, %145 : vector<2x8x32xf32>
    %cst_50 = arith.constant dense<0.000000e+00> : vector<2x8xf32>
    %147 = vector.multi_reduction <add>, %146, %cst_50 [2] : vector<2x8x32xf32> to vector<2x8xf32>
    %148 = vector.shape_cast %147 : vector<2x8xf32> to vector<2x8x1xf32>
    %cst_51 = arith.constant 3.200000e+01 : f32
    %149 = vector.broadcast %cst_51 : f32 to vector<2x8x1xf32>
    %150 = arith.divf %148, %149 : vector<2x8x1xf32>
    %151 = vector.broadcast %143 : vector<2x8x1xf32> to vector<2x8x32xf32>
    %152 = arith.subf %139, %151 : vector<2x8x32xf32>
    %cst_52 = arith.constant 9.99999974E-6 : f32
    %153 = vector.broadcast %cst_52 : f32 to vector<2x8x1xf32>
    %154 = arith.addf %150, %153 : vector<2x8x1xf32>
    %155 = math.rsqrt %154 : vector<2x8x1xf32>
    %156 = vector.broadcast %155 : vector<2x8x1xf32> to vector<2x8x32xf32>
    %157 = arith.mulf %152, %156 : vector<2x8x32xf32>
    %c144 = arith.constant 144 : index
    %c0_53 = arith.constant 0 : index
    %158 = vector.load %arg4[%c144, %c0_53] : memref<848x128xbf16, #tpu.memory_space<vmem>>, vector<32x128xbf16>
    %c56 = arith.constant 56 : index
    %c0_54 = arith.constant 0 : index
    %159 = vector.load %arg5[%c56, %c0_54] : memref<208x128xf32, #tpu.memory_space<vmem>>, vector<1x128xf32>
    %160 = vector.shape_cast %157 : vector<2x8x32xf32> to vector<16x32xf32>
    %161 = arith.truncf %160 : vector<16x32xf32> to vector<16x32xbf16>
    %cst_55 = arith.constant dense<0.000000e+00> : vector<16x128xf32>
    %162 = tpu.matmul %161, %158, %cst_55 {dimension_numbers = #tpu.dot_dimension_numbers<[1], [0], [0], [1], [0, 0, 1, 1], [], []>} : vector<16x32xbf16>, vector<32x128xbf16>, vector<16x128xf32> -> vector<16x128xf32>
    %163 = vector.broadcast %159 : vector<1x128xf32> to vector<16x128xf32>
    %164 = arith.addf %162, %163 : vector<16x128xf32>
    %165 = vector.shape_cast %164 : vector<16x128xf32> to vector<2x8x128xf32>
    %166 = vector.extract_strided_slice %165 {offsets = [0, 0, 0], sizes = [2, 8, 32], strides = [1, 1, 1]} : vector<2x8x128xf32> to vector<2x8x32xf32>
    %167 = vector.extract_strided_slice %165 {offsets = [0, 0, 32], sizes = [2, 8, 32], strides = [1, 1, 1]} : vector<2x8x128xf32> to vector<2x8x32xf32>
    %168 = vector.extract_strided_slice %165 {offsets = [0, 0, 64], sizes = [2, 8, 32], strides = [1, 1, 1]} : vector<2x8x128xf32> to vector<2x8x32xf32>
    "tpu.trace_start"() <{level = 10 : i32, message = "bqd,bkd->bqk"}> : () -> ()
    %cst_56 = arith.constant dense<0.000000e+00> : vector<2x8x8xf32>
    %169 = tpu.matmul %166, %167, %cst_56 {dimension_numbers = #tpu.dot_dimension_numbers<[2], [2], [1], [1], [0, 0, 0, 1, 1, 1], [0], [0]>} : vector<2x8x32xf32>, vector<2x8x32xf32>, vector<2x8x8xf32> -> vector<2x8x8xf32>
    "tpu.trace_stop"() : () -> ()
    %170 = vector.broadcast %2 : vector<2x1x8xf32> to vector<2x8x8xf32>
    %171 = arith.addf %169, %170 : vector<2x8x8xf32>
    %cst_57 = arith.constant dense<0xFF800000> : vector<2x8xf32>
    %172 = vector.multi_reduction <maximumf>, %171, %cst_57 [2] : vector<2x8x8xf32> to vector<2x8xf32>
    %173 = vector.shape_cast %172 : vector<2x8xf32> to vector<2x8x1xf32>
    %174 = vector.broadcast %173 : vector<2x8x1xf32> to vector<2x8x8xf32>
    %175 = arith.subf %171, %174 : vector<2x8x8xf32>
    %176 = math.exp %175 : vector<2x8x8xf32>
    %cst_58 = arith.constant dense<0.000000e+00> : vector<2x8xf32>
    %177 = vector.multi_reduction <add>, %176, %cst_58 [2] : vector<2x8x8xf32> to vector<2x8xf32>
    %178 = vector.shape_cast %177 : vector<2x8xf32> to vector<2x8x1xf32>
    %179 = tpu.reciprocal %178 {approx = true} : vector<2x8x1xf32> -> vector<2x8x1xf32>
    %180 = vector.broadcast %179 : vector<2x8x1xf32> to vector<2x8x8xf32>
    %181 = arith.mulf %176, %180 : vector<2x8x8xf32>
    "tpu.trace_start"() <{level = 10 : i32, message = "bqk,bkd->bqd"}> : () -> ()
    %cst_59 = arith.constant dense<0.000000e+00> : vector<2x8x32xf32>
    %182 = tpu.matmul %181, %168, %cst_59 {dimension_numbers = #tpu.dot_dimension_numbers<[2], [1], [1], [2], [0, 0, 0, 1, 1, 2], [0], [0]>} : vector<2x8x8xf32>, vector<2x8x32xf32>, vector<2x8x32xf32> -> vector<2x8x32xf32>
    "tpu.trace_stop"() : () -> ()
    %c176 = arith.constant 176 : index
    %c0_60 = arith.constant 0 : index
    %183 = vector.load %arg4[%c176, %c0_60] : memref<848x128xbf16, #tpu.memory_space<vmem>>, vector<32x128xbf16>
    %c64 = arith.constant 64 : index
    %c0_61 = arith.constant 0 : index
    %184 = vector.load %arg5[%c64, %c0_61] : memref<208x128xf32, #tpu.memory_space<vmem>>, vector<1x128xf32>
    %185 = vector.shape_cast %182 : vector<2x8x32xf32> to vector<16x32xf32>
    %186 = arith.truncf %185 : vector<16x32xf32> to vector<16x32xbf16>
    %cst_62 = arith.constant dense<0.000000e+00> : vector<16x128xf32>
    %187 = tpu.matmul %186, %183, %cst_62 {dimension_numbers = #tpu.dot_dimension_numbers<[1], [0], [0], [1], [0, 0, 1, 1], [], []>} : vector<16x32xbf16>, vector<32x128xbf16>, vector<16x128xf32> -> vector<16x128xf32>
    %188 = vector.broadcast %184 : vector<1x128xf32> to vector<16x128xf32>
    %189 = arith.addf %187, %188 : vector<16x128xf32>
    %190 = vector.shape_cast %189 : vector<16x128xf32> to vector<2x8x128xf32>
    %191 = vector.extract_strided_slice %190 {offsets = [0, 0, 0], sizes = [2, 8, 32], strides = [1, 1, 1]} : vector<2x8x128xf32> to vector<2x8x32xf32>
    %c72 = arith.constant 72 : index
    %c0_63 = arith.constant 0 : index
    %192 = vector.load %arg5[%c72, %c0_63] : memref<208x128xf32, #tpu.memory_space<vmem>>, vector<1x128xf32>
    %193 = vector.extract_strided_slice %192 {offsets = [0, 0], sizes = [1, 32], strides = [1, 1]} : vector<1x128xf32> to vector<1x32xf32>
    %c80_64 = arith.constant 80 : index
    %c0_65 = arith.constant 0 : index
    %194 = vector.load %arg5[%c80_64, %c0_65] : memref<208x128xf32, #tpu.memory_space<vmem>>, vector<1x128xf32>
    %195 = vector.extract_strided_slice %194 {offsets = [0, 0], sizes = [1, 32], strides = [1, 1]} : vector<1x128xf32> to vector<1x32xf32>
    %cst_66 = arith.constant dense<0.000000e+00> : vector<2x8xf32>
    %196 = vector.multi_reduction <add>, %191, %cst_66 [2] : vector<2x8x32xf32> to vector<2x8xf32>
    %197 = vector.shape_cast %196 : vector<2x8xf32> to vector<2x8x1xf32>
    %cst_67 = arith.constant 3.200000e+01 : f32
    %198 = vector.broadcast %cst_67 : f32 to vector<2x8x1xf32>
    %199 = arith.divf %197, %198 : vector<2x8x1xf32>
    %200 = vector.broadcast %199 : vector<2x8x1xf32> to vector<2x8x32xf32>
    %201 = arith.subf %191, %200 : vector<2x8x32xf32>
    %202 = arith.mulf %201, %201 : vector<2x8x32xf32>
    %cst_68 = arith.constant dense<0.000000e+00> : vector<2x8xf32>
    %203 = vector.multi_reduction <add>, %202, %cst_68 [2] : vector<2x8x32xf32> to vector<2x8xf32>
    %204 = vector.shape_cast %203 : vector<2x8xf32> to vector<2x8x1xf32>
    %cst_69 = arith.constant 3.200000e+01 : f32
    %205 = vector.broadcast %cst_69 : f32 to vector<2x8x1xf32>
    %206 = arith.divf %204, %205 : vector<2x8x1xf32>
    %207 = vector.broadcast %199 : vector<2x8x1xf32> to vector<2x8x32xf32>
    %208 = arith.subf %191, %207 : vector<2x8x32xf32>
    %cst_70 = arith.constant 9.99999974E-6 : f32
    %209 = vector.broadcast %cst_70 : f32 to vector<2x8x1xf32>
    %210 = arith.addf %206, %209 : vector<2x8x1xf32>
    %211 = math.rsqrt %210 : vector<2x8x1xf32>
    %212 = vector.broadcast %211 : vector<2x8x1xf32> to vector<2x8x32xf32>
    %213 = arith.mulf %208, %212 : vector<2x8x32xf32>
    %214 = vector.shape_cast %193 : vector<1x32xf32> to vector<1x1x32xf32>
    %215 = vector.broadcast %214 : vector<1x1x32xf32> to vector<2x8x32xf32>
    %216 = arith.mulf %213, %215 : vector<2x8x32xf32>
    %217 = vector.shape_cast %195 : vector<1x32xf32> to vector<1x1x32xf32>
    %218 = vector.broadcast %217 : vector<1x1x32xf32> to vector<2x8x32xf32>
    %219 = arith.addf %216, %218 : vector<2x8x32xf32>
    %220 = arith.addf %139, %219 : vector<2x8x32xf32>
    %cst_71 = arith.constant dense<0.000000e+00> : vector<2x8xf32>
    %221 = vector.multi_reduction <add>, %220, %cst_71 [2] : vector<2x8x32xf32> to vector<2x8xf32>
    %222 = vector.shape_cast %221 : vector<2x8xf32> to vector<2x8x1xf32>
    %cst_72 = arith.constant 3.200000e+01 : f32
    %223 = vector.broadcast %cst_72 : f32 to vector<2x8x1xf32>
    %224 = arith.divf %222, %223 : vector<2x8x1xf32>
    %225 = vector.broadcast %224 : vector<2x8x1xf32> to vector<2x8x32xf32>
    %226 = arith.subf %220, %225 : vector<2x8x32xf32>
    %227 = arith.mulf %226, %226 : vector<2x8x32xf32>
    %cst_73 = arith.constant dense<0.000000e+00> : vector<2x8xf32>
    %228 = vector.multi_reduction <add>, %227, %cst_73 [2] : vector<2x8x32xf32> to vector<2x8xf32>
    %229 = vector.shape_cast %228 : vector<2x8xf32> to vector<2x8x1xf32>
    %cst_74 = arith.constant 3.200000e+01 : f32
    %230 = vector.broadcast %cst_74 : f32 to vector<2x8x1xf32>
    %231 = arith.divf %229, %230 : vector<2x8x1xf32>
    %232 = vector.broadcast %224 : vector<2x8x1xf32> to vector<2x8x32xf32>
    %233 = arith.subf %220, %232 : vector<2x8x32xf32>
    %cst_75 = arith.constant 9.99999974E-6 : f32
    %234 = vector.broadcast %cst_75 : f32 to vector<2x8x1xf32>
    %235 = arith.addf %231, %234 : vector<2x8x1xf32>
    %236 = math.rsqrt %235 : vector<2x8x1xf32>
    %237 = vector.broadcast %236 : vector<2x8x1xf32> to vector<2x8x32xf32>
    %238 = arith.mulf %233, %237 : vector<2x8x32xf32>
    %c208 = arith.constant 208 : index
    %c0_76 = arith.constant 0 : index
    %239 = vector.load %arg4[%c208, %c0_76] : memref<848x128xbf16, #tpu.memory_space<vmem>>, vector<32x128xbf16>
    %c88 = arith.constant 88 : index
    %c0_77 = arith.constant 0 : index
    %240 = vector.load %arg5[%c88, %c0_77] : memref<208x128xf32, #tpu.memory_space<vmem>>, vector<1x128xf32>
    %241 = vector.shape_cast %238 : vector<2x8x32xf32> to vector<16x32xf32>
    %242 = arith.truncf %241 : vector<16x32xf32> to vector<16x32xbf16>
    %cst_78 = arith.constant dense<0.000000e+00> : vector<16x128xf32>
    %243 = tpu.matmul %242, %239, %cst_78 {dimension_numbers = #tpu.dot_dimension_numbers<[1], [0], [0], [1], [0, 0, 1, 1], [], []>} : vector<16x32xbf16>, vector<32x128xbf16>, vector<16x128xf32> -> vector<16x128xf32>
    %244 = vector.broadcast %240 : vector<1x128xf32> to vector<16x128xf32>
    %245 = arith.addf %243, %244 : vector<16x128xf32>
    %246 = vector.shape_cast %245 : vector<16x128xf32> to vector<2x8x128xf32>
    %247 = vector.extract_strided_slice %246 {offsets = [0, 0, 0], sizes = [2, 8, 32], strides = [1, 1, 1]} : vector<2x8x128xf32> to vector<2x8x32xf32>
    %248 = arith.negf %247 : vector<2x8x32xf32>
    %249 = math.exp %248 : vector<2x8x32xf32>
    %cst_79 = arith.constant 1.000000e+00 : f32
    %250 = vector.broadcast %cst_79 : f32 to vector<2x8x32xf32>
    %251 = arith.addf %250, %249 : vector<2x8x32xf32>
    %252 = arith.divf %250, %251 : vector<2x8x32xf32>
    %253 = arith.mulf %247, %252 : vector<2x8x32xf32>
    %c240 = arith.constant 240 : index
    %c0_80 = arith.constant 0 : index
    %254 = vector.load %arg4[%c240, %c0_80] : memref<848x128xbf16, #tpu.memory_space<vmem>>, vector<32x128xbf16>
    %c96 = arith.constant 96 : index
    %c0_81 = arith.constant 0 : index
    %255 = vector.load %arg5[%c96, %c0_81] : memref<208x128xf32, #tpu.memory_space<vmem>>, vector<1x128xf32>
    %256 = vector.shape_cast %253 : vector<2x8x32xf32> to vector<16x32xf32>
    %257 = arith.truncf %256 : vector<16x32xf32> to vector<16x32xbf16>
    %cst_82 = arith.constant dense<0.000000e+00> : vector<16x128xf32>
    %258 = tpu.matmul %257, %254, %cst_82 {dimension_numbers = #tpu.dot_dimension_numbers<[1], [0], [0], [1], [0, 0, 1, 1], [], []>} : vector<16x32xbf16>, vector<32x128xbf16>, vector<16x128xf32> -> vector<16x128xf32>
    %259 = vector.broadcast %255 : vector<1x128xf32> to vector<16x128xf32>
    %260 = arith.addf %258, %259 : vector<16x128xf32>
    %261 = vector.shape_cast %260 : vector<16x128xf32> to vector<2x8x128xf32>
    %262 = vector.extract_strided_slice %261 {offsets = [0, 0, 0], sizes = [2, 8, 32], strides = [1, 1, 1]} : vector<2x8x128xf32> to vector<2x8x32xf32>
    %263 = arith.addf %220, %262 : vector<2x8x32xf32>
    %264 = vector.broadcast %1 : vector<2x8x1xf32> to vector<2x8x32xf32>
    %265 = arith.mulf %263, %264 : vector<2x8x32xf32>
    %cst_83 = arith.constant dense<0.000000e+00> : vector<2x8xf32>
    %266 = vector.multi_reduction <add>, %265, %cst_83 [2] : vector<2x8x32xf32> to vector<2x8xf32>
    %267 = vector.shape_cast %266 : vector<2x8xf32> to vector<2x8x1xf32>
    %cst_84 = arith.constant 3.200000e+01 : f32
    %268 = vector.broadcast %cst_84 : f32 to vector<2x8x1xf32>
    %269 = arith.divf %267, %268 : vector<2x8x1xf32>
    %270 = vector.broadcast %269 : vector<2x8x1xf32> to vector<2x8x32xf32>
    %271 = arith.subf %265, %270 : vector<2x8x32xf32>
    %272 = arith.mulf %271, %271 : vector<2x8x32xf32>
    %cst_85 = arith.constant dense<0.000000e+00> : vector<2x8xf32>
    %273 = vector.multi_reduction <add>, %272, %cst_85 [2] : vector<2x8x32xf32> to vector<2x8xf32>
    %274 = vector.shape_cast %273 : vector<2x8xf32> to vector<2x8x1xf32>
    %cst_86 = arith.constant 3.200000e+01 : f32
    %275 = vector.broadcast %cst_86 : f32 to vector<2x8x1xf32>
    %276 = arith.divf %274, %275 : vector<2x8x1xf32>
    %277 = vector.broadcast %269 : vector<2x8x1xf32> to vector<2x8x32xf32>
    %278 = arith.subf %265, %277 : vector<2x8x32xf32>
    %cst_87 = arith.constant 9.99999974E-6 : f32
    %279 = vector.broadcast %cst_87 : f32 to vector<2x8x1xf32>
    %280 = arith.addf %276, %279 : vector<2x8x1xf32>
    %281 = math.rsqrt %280 : vector<2x8x1xf32>
    %282 = vector.broadcast %281 : vector<2x8x1xf32> to vector<2x8x32xf32>
    %283 = arith.mulf %278, %282 : vector<2x8x32xf32>
    %cst_88 = arith.constant 5.000000e-01 : f32
    %284 = vector.broadcast %cst_88 : f32 to vector<2x8x1xf32>
    %285 = arith.cmpf ogt, %1, %284 : vector<2x8x1xf32>
    %cst_89 = arith.constant 0.000000e+00 : f32
    %cst_90 = arith.constant -1.000000e+30 : f32
    %286 = vector.broadcast %cst_89 : f32 to vector<2x8x1xf32>
    %287 = vector.broadcast %cst_90 : f32 to vector<2x8x1xf32>
    %288 = arith.select %285, %286, %287 : vector<2x8x1xi1>, vector<2x8x1xf32>
    %c104 = arith.constant 104 : index
    %c0_91 = arith.constant 0 : index
    %289 = vector.load %arg5[%c104, %c0_91] : memref<208x128xf32, #tpu.memory_space<vmem>>, vector<1x128xf32>
    %290 = vector.extract_strided_slice %289 {offsets = [0, 0], sizes = [1, 32], strides = [1, 1]} : vector<1x128xf32> to vector<1x32xf32>
    %291 = vector.shape_cast %290 : vector<1x32xf32> to vector<1x1x32xf32>
    %292 = vector.shape_cast %291 : vector<1x1x32xf32> to vector<1x1x32xf32>
    %293 = vector.broadcast %292 : vector<1x1x32xf32> to vector<2x1x32xf32>
    %c304 = arith.constant 304 : index
    %c0_92 = arith.constant 0 : index
    %294 = vector.load %arg4[%c304, %c0_92] : memref<848x128xbf16, #tpu.memory_space<vmem>>, vector<32x128xbf16>
    %c120 = arith.constant 120 : index
    %c0_93 = arith.constant 0 : index
    %295 = vector.load %arg5[%c120, %c0_93] : memref<208x128xf32, #tpu.memory_space<vmem>>, vector<1x128xf32>
    %c272 = arith.constant 272 : index
    %c0_94 = arith.constant 0 : index
    %296 = vector.load %arg4[%c272, %c0_94] : memref<848x128xbf16, #tpu.memory_space<vmem>>, vector<32x128xbf16>
    %c112_95 = arith.constant 112 : index
    %c0_96 = arith.constant 0 : index
    %297 = vector.load %arg5[%c112_95, %c0_96] : memref<208x128xf32, #tpu.memory_space<vmem>>, vector<1x128xf32>
    %298 = vector.shape_cast %293 : vector<2x1x32xf32> to vector<2x32xf32>
    %299 = arith.truncf %298 : vector<2x32xf32> to vector<2x32xbf16>
    %cst_97 = arith.constant dense<0.000000e+00> : vector<2x128xf32>
    %300 = tpu.matmul %299, %296, %cst_97 {dimension_numbers = #tpu.dot_dimension_numbers<[1], [0], [0], [1], [0, 0, 1, 1], [], []>} : vector<2x32xbf16>, vector<32x128xbf16>, vector<2x128xf32> -> vector<2x128xf32>
    %301 = vector.broadcast %297 : vector<1x128xf32> to vector<2x128xf32>
    %302 = arith.addf %300, %301 : vector<2x128xf32>
    %303 = vector.shape_cast %302 : vector<2x128xf32> to vector<2x1x128xf32>
    %304 = vector.extract_strided_slice %303 {offsets = [0, 0, 0], sizes = [2, 1, 32], strides = [1, 1, 1]} : vector<2x1x128xf32> to vector<2x1x32xf32>
    %cst_98 = arith.constant dense<0.000000e+00> : vector<2x1xf32>
    %305 = vector.multi_reduction <add>, %293, %cst_98 [2] : vector<2x1x32xf32> to vector<2x1xf32>
    %306 = vector.shape_cast %305 : vector<2x1xf32> to vector<2x1x1xf32>
    %cst_99 = arith.constant 3.200000e+01 : f32
    %307 = vector.broadcast %cst_99 : f32 to vector<2x1x1xf32>
    %308 = arith.divf %306, %307 : vector<2x1x1xf32>
    %309 = vector.broadcast %308 : vector<2x1x1xf32> to vector<2x1x32xf32>
    %310 = arith.subf %293, %309 : vector<2x1x32xf32>
    %311 = arith.mulf %310, %310 : vector<2x1x32xf32>
    %cst_100 = arith.constant dense<0.000000e+00> : vector<2x1xf32>
    %312 = vector.multi_reduction <add>, %311, %cst_100 [2] : vector<2x1x32xf32> to vector<2x1xf32>
    %313 = vector.shape_cast %312 : vector<2x1xf32> to vector<2x1x1xf32>
    %cst_101 = arith.constant 3.200000e+01 : f32
    %314 = vector.broadcast %cst_101 : f32 to vector<2x1x1xf32>
    %315 = arith.divf %313, %314 : vector<2x1x1xf32>
    %316 = vector.broadcast %308 : vector<2x1x1xf32> to vector<2x1x32xf32>
    %317 = arith.subf %293, %316 : vector<2x1x32xf32>
    %cst_102 = arith.constant 9.99999974E-6 : f32
    %318 = vector.broadcast %cst_102 : f32 to vector<2x1x1xf32>
    %319 = arith.addf %315, %318 : vector<2x1x1xf32>
    %320 = math.rsqrt %319 : vector<2x1x1xf32>
    %321 = vector.broadcast %320 : vector<2x1x1xf32> to vector<2x1x32xf32>
    %322 = arith.mulf %317, %321 : vector<2x1x32xf32>
    %323 = vector.shape_cast %322 : vector<2x1x32xf32> to vector<2x32xf32>
    %324 = arith.truncf %323 : vector<2x32xf32> to vector<2x32xbf16>
    %cst_103 = arith.constant dense<0.000000e+00> : vector<2x128xf32>
    %325 = tpu.matmul %324, %294, %cst_103 {dimension_numbers = #tpu.dot_dimension_numbers<[1], [0], [0], [1], [0, 0, 1, 1], [], []>} : vector<2x32xbf16>, vector<32x128xbf16>, vector<2x128xf32> -> vector<2x128xf32>
    %326 = vector.broadcast %295 : vector<1x128xf32> to vector<2x128xf32>
    %327 = arith.addf %325, %326 : vector<2x128xf32>
    %328 = vector.shape_cast %327 : vector<2x128xf32> to vector<2x1x128xf32>
    %329 = vector.shape_cast %283 : vector<2x8x32xf32> to vector<16x32xf32>
    %330 = arith.truncf %329 : vector<16x32xf32> to vector<16x32xbf16>
    %cst_104 = arith.constant dense<0.000000e+00> : vector<16x128xf32>
    %331 = tpu.matmul %330, %294, %cst_104 {dimension_numbers = #tpu.dot_dimension_numbers<[1], [0], [0], [1], [0, 0, 1, 1], [], []>} : vector<16x32xbf16>, vector<32x128xbf16>, vector<16x128xf32> -> vector<16x128xf32>
    %332 = vector.broadcast %295 : vector<1x128xf32> to vector<16x128xf32>
    %333 = arith.addf %331, %332 : vector<16x128xf32>
    %334 = vector.shape_cast %333 : vector<16x128xf32> to vector<2x8x128xf32>
    %335 = vector.extract_strided_slice %328 {offsets = [0, 0, 0], sizes = [2, 1, 32], strides = [1, 1, 1]} : vector<2x1x128xf32> to vector<2x1x32xf32>
    %336 = vector.extract_strided_slice %328 {offsets = [0, 0, 32], sizes = [2, 1, 32], strides = [1, 1, 1]} : vector<2x1x128xf32> to vector<2x1x32xf32>
    %337 = vector.extract_strided_slice %334 {offsets = [0, 0, 0], sizes = [2, 8, 32], strides = [1, 1, 1]} : vector<2x8x128xf32> to vector<2x8x32xf32>
    %338 = vector.extract_strided_slice %334 {offsets = [0, 0, 32], sizes = [2, 8, 32], strides = [1, 1, 1]} : vector<2x8x128xf32> to vector<2x8x32xf32>
    %339 = arith.mulf %304, %335 : vector<2x1x32xf32>
    %cst_105 = arith.constant dense<0.000000e+00> : vector<2x1xf32>
    %340 = vector.multi_reduction <add>, %339, %cst_105 [2] : vector<2x1x32xf32> to vector<2x1xf32>
    %341 = vector.shape_cast %340 : vector<2x1xf32> to vector<2x1x1xf32>
    %342 = vector.broadcast %304 : vector<2x1x32xf32> to vector<2x8x32xf32>
    %343 = arith.mulf %342, %337 : vector<2x8x32xf32>
    %cst_106 = arith.constant dense<0.000000e+00> : vector<2x8xf32>
    %344 = vector.multi_reduction <add>, %343, %cst_106 [2] : vector<2x8x32xf32> to vector<2x8xf32>
    %345 = vector.shape_cast %344 : vector<2x8xf32> to vector<2x8x1xf32>
    %346 = arith.addf %345, %288 : vector<2x8x1xf32>
    %cst_107 = arith.constant dense<0xFF800000> : vector<2x1xf32>
    %347 = vector.multi_reduction <maximumf>, %346, %cst_107 [1] : vector<2x8x1xf32> to vector<2x1xf32>
    %348 = vector.shape_cast %347 : vector<2x1xf32> to vector<2x1x1xf32>
    %349 = arith.maximumf %348, %341 : vector<2x1x1xf32>
    %350 = arith.subf %341, %349 : vector<2x1x1xf32>
    %351 = math.exp %350 : vector<2x1x1xf32>
    %352 = vector.broadcast %349 : vector<2x1x1xf32> to vector<2x8x1xf32>
    %353 = arith.subf %346, %352 : vector<2x8x1xf32>
    %354 = math.exp %353 : vector<2x8x1xf32>
    %cst_108 = arith.constant dense<0.000000e+00> : vector<2x1xf32>
    %355 = vector.multi_reduction <add>, %354, %cst_108 [1] : vector<2x8x1xf32> to vector<2x1xf32>
    %356 = vector.shape_cast %355 : vector<2x1xf32> to vector<2x1x1xf32>
    %357 = arith.addf %351, %356 : vector<2x1x1xf32>
    %358 = tpu.reciprocal %357 {approx = true} : vector<2x1x1xf32> -> vector<2x1x1xf32>
    %359 = vector.broadcast %351 : vector<2x1x1xf32> to vector<2x1x32xf32>
    %360 = arith.mulf %359, %336 : vector<2x1x32xf32>
    %361 = vector.broadcast %354 : vector<2x8x1xf32> to vector<2x8x32xf32>
    %362 = arith.mulf %361, %338 : vector<2x8x32xf32>
    %cst_109 = arith.constant dense<0.000000e+00> : vector<2x32xf32>
    %363 = vector.multi_reduction <add>, %362, %cst_109 [1] : vector<2x8x32xf32> to vector<2x32xf32>
    %364 = vector.shape_cast %363 : vector<2x32xf32> to vector<2x1x32xf32>
    %365 = arith.addf %360, %364 : vector<2x1x32xf32>
    %366 = vector.broadcast %358 : vector<2x1x1xf32> to vector<2x1x32xf32>
    %367 = arith.mulf %365, %366 : vector<2x1x32xf32>
    %c336 = arith.constant 336 : index
    %c0_110 = arith.constant 0 : index
    %368 = vector.load %arg4[%c336, %c0_110] : memref<848x128xbf16, #tpu.memory_space<vmem>>, vector<32x128xbf16>
    %c128 = arith.constant 128 : index
    %c0_111 = arith.constant 0 : index
    %369 = vector.load %arg5[%c128, %c0_111] : memref<208x128xf32, #tpu.memory_space<vmem>>, vector<1x128xf32>
    %370 = vector.shape_cast %367 : vector<2x1x32xf32> to vector<2x32xf32>
    %371 = arith.truncf %370 : vector<2x32xf32> to vector<2x32xbf16>
    %cst_112 = arith.constant dense<0.000000e+00> : vector<2x128xf32>
    %372 = tpu.matmul %371, %368, %cst_112 {dimension_numbers = #tpu.dot_dimension_numbers<[1], [0], [0], [1], [0, 0, 1, 1], [], []>} : vector<2x32xbf16>, vector<32x128xbf16>, vector<2x128xf32> -> vector<2x128xf32>
    %373 = vector.broadcast %369 : vector<1x128xf32> to vector<2x128xf32>
    %374 = arith.addf %372, %373 : vector<2x128xf32>
    %375 = vector.shape_cast %374 : vector<2x128xf32> to vector<2x1x128xf32>
    %376 = vector.extract_strided_slice %375 {offsets = [0, 0, 0], sizes = [2, 1, 32], strides = [1, 1, 1]} : vector<2x1x128xf32> to vector<2x1x32xf32>
    %c400 = arith.constant 400 : index
    %c0_113 = arith.constant 0 : index
    %377 = vector.load %arg4[%c400, %c0_113] : memref<848x128xbf16, #tpu.memory_space<vmem>>, vector<32x128xbf16>
    %c144_114 = arith.constant 144 : index
    %c0_115 = arith.constant 0 : index
    %378 = vector.load %arg5[%c144_114, %c0_115] : memref<208x128xf32, #tpu.memory_space<vmem>>, vector<1x128xf32>
    %c368 = arith.constant 368 : index
    %c0_116 = arith.constant 0 : index
    %379 = vector.load %arg4[%c368, %c0_116] : memref<848x128xbf16, #tpu.memory_space<vmem>>, vector<32x128xbf16>
    %c136 = arith.constant 136 : index
    %c0_117 = arith.constant 0 : index
    %380 = vector.load %arg5[%c136, %c0_117] : memref<208x128xf32, #tpu.memory_space<vmem>>, vector<1x128xf32>
    %381 = vector.shape_cast %376 : vector<2x1x32xf32> to vector<2x32xf32>
    %382 = arith.truncf %381 : vector<2x32xf32> to vector<2x32xbf16>
    %cst_118 = arith.constant dense<0.000000e+00> : vector<2x128xf32>
    %383 = tpu.matmul %382, %379, %cst_118 {dimension_numbers = #tpu.dot_dimension_numbers<[1], [0], [0], [1], [0, 0, 1, 1], [], []>} : vector<2x32xbf16>, vector<32x128xbf16>, vector<2x128xf32> -> vector<2x128xf32>
    %384 = vector.broadcast %380 : vector<1x128xf32> to vector<2x128xf32>
    %385 = arith.addf %383, %384 : vector<2x128xf32>
    %386 = vector.shape_cast %385 : vector<2x128xf32> to vector<2x1x128xf32>
    %387 = vector.extract_strided_slice %386 {offsets = [0, 0, 0], sizes = [2, 1, 32], strides = [1, 1, 1]} : vector<2x1x128xf32> to vector<2x1x32xf32>
    %cst_119 = arith.constant dense<0.000000e+00> : vector<2x1xf32>
    %388 = vector.multi_reduction <add>, %376, %cst_119 [2] : vector<2x1x32xf32> to vector<2x1xf32>
    %389 = vector.shape_cast %388 : vector<2x1xf32> to vector<2x1x1xf32>
    %cst_120 = arith.constant 3.200000e+01 : f32
    %390 = vector.broadcast %cst_120 : f32 to vector<2x1x1xf32>
    %391 = arith.divf %389, %390 : vector<2x1x1xf32>
    %392 = vector.broadcast %391 : vector<2x1x1xf32> to vector<2x1x32xf32>
    %393 = arith.subf %376, %392 : vector<2x1x32xf32>
    %394 = arith.mulf %393, %393 : vector<2x1x32xf32>
    %cst_121 = arith.constant dense<0.000000e+00> : vector<2x1xf32>
    %395 = vector.multi_reduction <add>, %394, %cst_121 [2] : vector<2x1x32xf32> to vector<2x1xf32>
    %396 = vector.shape_cast %395 : vector<2x1xf32> to vector<2x1x1xf32>
    %cst_122 = arith.constant 3.200000e+01 : f32
    %397 = vector.broadcast %cst_122 : f32 to vector<2x1x1xf32>
    %398 = arith.divf %396, %397 : vector<2x1x1xf32>
    %399 = vector.broadcast %391 : vector<2x1x1xf32> to vector<2x1x32xf32>
    %400 = arith.subf %376, %399 : vector<2x1x32xf32>
    %cst_123 = arith.constant 9.99999974E-6 : f32
    %401 = vector.broadcast %cst_123 : f32 to vector<2x1x1xf32>
    %402 = arith.addf %398, %401 : vector<2x1x1xf32>
    %403 = math.rsqrt %402 : vector<2x1x1xf32>
    %404 = vector.broadcast %403 : vector<2x1x1xf32> to vector<2x1x32xf32>
    %405 = arith.mulf %400, %404 : vector<2x1x32xf32>
    %406 = vector.shape_cast %405 : vector<2x1x32xf32> to vector<2x32xf32>
    %407 = arith.truncf %406 : vector<2x32xf32> to vector<2x32xbf16>
    %cst_124 = arith.constant dense<0.000000e+00> : vector<2x128xf32>
    %408 = tpu.matmul %407, %377, %cst_124 {dimension_numbers = #tpu.dot_dimension_numbers<[1], [0], [0], [1], [0, 0, 1, 1], [], []>} : vector<2x32xbf16>, vector<32x128xbf16>, vector<2x128xf32> -> vector<2x128xf32>
    %409 = vector.broadcast %378 : vector<1x128xf32> to vector<2x128xf32>
    %410 = arith.addf %408, %409 : vector<2x128xf32>
    %411 = vector.shape_cast %410 : vector<2x128xf32> to vector<2x1x128xf32>
    %412 = vector.shape_cast %283 : vector<2x8x32xf32> to vector<16x32xf32>
    %413 = arith.truncf %412 : vector<16x32xf32> to vector<16x32xbf16>
    %cst_125 = arith.constant dense<0.000000e+00> : vector<16x128xf32>
    %414 = tpu.matmul %413, %377, %cst_125 {dimension_numbers = #tpu.dot_dimension_numbers<[1], [0], [0], [1], [0, 0, 1, 1], [], []>} : vector<16x32xbf16>, vector<32x128xbf16>, vector<16x128xf32> -> vector<16x128xf32>
    %415 = vector.broadcast %378 : vector<1x128xf32> to vector<16x128xf32>
    %416 = arith.addf %414, %415 : vector<16x128xf32>
    %417 = vector.shape_cast %416 : vector<16x128xf32> to vector<2x8x128xf32>
    %418 = vector.extract_strided_slice %411 {offsets = [0, 0, 0], sizes = [2, 1, 32], strides = [1, 1, 1]} : vector<2x1x128xf32> to vector<2x1x32xf32>
    %419 = vector.extract_strided_slice %411 {offsets = [0, 0, 32], sizes = [2, 1, 32], strides = [1, 1, 1]} : vector<2x1x128xf32> to vector<2x1x32xf32>
    %420 = vector.extract_strided_slice %417 {offsets = [0, 0, 0], sizes = [2, 8, 32], strides = [1, 1, 1]} : vector<2x8x128xf32> to vector<2x8x32xf32>
    %421 = vector.extract_strided_slice %417 {offsets = [0, 0, 32], sizes = [2, 8, 32], strides = [1, 1, 1]} : vector<2x8x128xf32> to vector<2x8x32xf32>
    %422 = arith.mulf %387, %418 : vector<2x1x32xf32>
    %cst_126 = arith.constant dense<0.000000e+00> : vector<2x1xf32>
    %423 = vector.multi_reduction <add>, %422, %cst_126 [2] : vector<2x1x32xf32> to vector<2x1xf32>
    %424 = vector.shape_cast %423 : vector<2x1xf32> to vector<2x1x1xf32>
    %425 = vector.broadcast %387 : vector<2x1x32xf32> to vector<2x8x32xf32>
    %426 = arith.mulf %425, %420 : vector<2x8x32xf32>
    %cst_127 = arith.constant dense<0.000000e+00> : vector<2x8xf32>
    %427 = vector.multi_reduction <add>, %426, %cst_127 [2] : vector<2x8x32xf32> to vector<2x8xf32>
    %428 = vector.shape_cast %427 : vector<2x8xf32> to vector<2x8x1xf32>
    %429 = arith.addf %428, %288 : vector<2x8x1xf32>
    %cst_128 = arith.constant dense<0xFF800000> : vector<2x1xf32>
    %430 = vector.multi_reduction <maximumf>, %429, %cst_128 [1] : vector<2x8x1xf32> to vector<2x1xf32>
    %431 = vector.shape_cast %430 : vector<2x1xf32> to vector<2x1x1xf32>
    %432 = arith.maximumf %431, %424 : vector<2x1x1xf32>
    %433 = arith.subf %424, %432 : vector<2x1x1xf32>
    %434 = math.exp %433 : vector<2x1x1xf32>
    %435 = vector.broadcast %432 : vector<2x1x1xf32> to vector<2x8x1xf32>
    %436 = arith.subf %429, %435 : vector<2x8x1xf32>
    %437 = math.exp %436 : vector<2x8x1xf32>
    %cst_129 = arith.constant dense<0.000000e+00> : vector<2x1xf32>
    %438 = vector.multi_reduction <add>, %437, %cst_129 [1] : vector<2x8x1xf32> to vector<2x1xf32>
    %439 = vector.shape_cast %438 : vector<2x1xf32> to vector<2x1x1xf32>
    %440 = arith.addf %434, %439 : vector<2x1x1xf32>
    %441 = tpu.reciprocal %440 {approx = true} : vector<2x1x1xf32> -> vector<2x1x1xf32>
    %442 = vector.broadcast %434 : vector<2x1x1xf32> to vector<2x1x32xf32>
    %443 = arith.mulf %442, %419 : vector<2x1x32xf32>
    %444 = vector.broadcast %437 : vector<2x8x1xf32> to vector<2x8x32xf32>
    %445 = arith.mulf %444, %421 : vector<2x8x32xf32>
    %cst_130 = arith.constant dense<0.000000e+00> : vector<2x32xf32>
    %446 = vector.multi_reduction <add>, %445, %cst_130 [1] : vector<2x8x32xf32> to vector<2x32xf32>
    %447 = vector.shape_cast %446 : vector<2x32xf32> to vector<2x1x32xf32>
    %448 = arith.addf %443, %447 : vector<2x1x32xf32>
    %449 = vector.broadcast %441 : vector<2x1x1xf32> to vector<2x1x32xf32>
    %450 = arith.mulf %448, %449 : vector<2x1x32xf32>
    %c432 = arith.constant 432 : index
    %c0_131 = arith.constant 0 : index
    %451 = vector.load %arg4[%c432, %c0_131] : memref<848x128xbf16, #tpu.memory_space<vmem>>, vector<32x128xbf16>
    %c152 = arith.constant 152 : index
    %c0_132 = arith.constant 0 : index
    %452 = vector.load %arg5[%c152, %c0_132] : memref<208x128xf32, #tpu.memory_space<vmem>>, vector<1x128xf32>
    %453 = vector.shape_cast %450 : vector<2x1x32xf32> to vector<2x32xf32>
    %454 = arith.truncf %453 : vector<2x32xf32> to vector<2x32xbf16>
    %cst_133 = arith.constant dense<0.000000e+00> : vector<2x128xf32>
    %455 = tpu.matmul %454, %451, %cst_133 {dimension_numbers = #tpu.dot_dimension_numbers<[1], [0], [0], [1], [0, 0, 1, 1], [], []>} : vector<2x32xbf16>, vector<32x128xbf16>, vector<2x128xf32> -> vector<2x128xf32>
    %456 = vector.broadcast %452 : vector<1x128xf32> to vector<2x128xf32>
    %457 = arith.addf %455, %456 : vector<2x128xf32>
    %458 = vector.shape_cast %457 : vector<2x128xf32> to vector<2x1x128xf32>
    %459 = vector.extract_strided_slice %458 {offsets = [0, 0, 0], sizes = [2, 1, 32], strides = [1, 1, 1]} : vector<2x1x128xf32> to vector<2x1x32xf32>
    %c496 = arith.constant 496 : index
    %c0_134 = arith.constant 0 : index
    %460 = vector.load %arg4[%c496, %c0_134] : memref<848x128xbf16, #tpu.memory_space<vmem>>, vector<32x128xbf16>
    %c168 = arith.constant 168 : index
    %c0_135 = arith.constant 0 : index
    %461 = vector.load %arg5[%c168, %c0_135] : memref<208x128xf32, #tpu.memory_space<vmem>>, vector<1x128xf32>
    %c464 = arith.constant 464 : index
    %c0_136 = arith.constant 0 : index
    %462 = vector.load %arg4[%c464, %c0_136] : memref<848x128xbf16, #tpu.memory_space<vmem>>, vector<32x128xbf16>
    %c160 = arith.constant 160 : index
    %c0_137 = arith.constant 0 : index
    %463 = vector.load %arg5[%c160, %c0_137] : memref<208x128xf32, #tpu.memory_space<vmem>>, vector<1x128xf32>
    %464 = vector.shape_cast %459 : vector<2x1x32xf32> to vector<2x32xf32>
    %465 = arith.truncf %464 : vector<2x32xf32> to vector<2x32xbf16>
    %cst_138 = arith.constant dense<0.000000e+00> : vector<2x128xf32>
    %466 = tpu.matmul %465, %462, %cst_138 {dimension_numbers = #tpu.dot_dimension_numbers<[1], [0], [0], [1], [0, 0, 1, 1], [], []>} : vector<2x32xbf16>, vector<32x128xbf16>, vector<2x128xf32> -> vector<2x128xf32>
    %467 = vector.broadcast %463 : vector<1x128xf32> to vector<2x128xf32>
    %468 = arith.addf %466, %467 : vector<2x128xf32>
    %469 = vector.shape_cast %468 : vector<2x128xf32> to vector<2x1x128xf32>
    %470 = vector.extract_strided_slice %469 {offsets = [0, 0, 0], sizes = [2, 1, 32], strides = [1, 1, 1]} : vector<2x1x128xf32> to vector<2x1x32xf32>
    %cst_139 = arith.constant dense<0.000000e+00> : vector<2x1xf32>
    %471 = vector.multi_reduction <add>, %459, %cst_139 [2] : vector<2x1x32xf32> to vector<2x1xf32>
    %472 = vector.shape_cast %471 : vector<2x1xf32> to vector<2x1x1xf32>
    %cst_140 = arith.constant 3.200000e+01 : f32
    %473 = vector.broadcast %cst_140 : f32 to vector<2x1x1xf32>
    %474 = arith.divf %472, %473 : vector<2x1x1xf32>
    %475 = vector.broadcast %474 : vector<2x1x1xf32> to vector<2x1x32xf32>
    %476 = arith.subf %459, %475 : vector<2x1x32xf32>
    %477 = arith.mulf %476, %476 : vector<2x1x32xf32>
    %cst_141 = arith.constant dense<0.000000e+00> : vector<2x1xf32>
    %478 = vector.multi_reduction <add>, %477, %cst_141 [2] : vector<2x1x32xf32> to vector<2x1xf32>
    %479 = vector.shape_cast %478 : vector<2x1xf32> to vector<2x1x1xf32>
    %cst_142 = arith.constant 3.200000e+01 : f32
    %480 = vector.broadcast %cst_142 : f32 to vector<2x1x1xf32>
    %481 = arith.divf %479, %480 : vector<2x1x1xf32>
    %482 = vector.broadcast %474 : vector<2x1x1xf32> to vector<2x1x32xf32>
    %483 = arith.subf %459, %482 : vector<2x1x32xf32>
    %cst_143 = arith.constant 9.99999974E-6 : f32
    %484 = vector.broadcast %cst_143 : f32 to vector<2x1x1xf32>
    %485 = arith.addf %481, %484 : vector<2x1x1xf32>
    %486 = math.rsqrt %485 : vector<2x1x1xf32>
    %487 = vector.broadcast %486 : vector<2x1x1xf32> to vector<2x1x32xf32>
    %488 = arith.mulf %483, %487 : vector<2x1x32xf32>
    %489 = vector.shape_cast %488 : vector<2x1x32xf32> to vector<2x32xf32>
    %490 = arith.truncf %489 : vector<2x32xf32> to vector<2x32xbf16>
    %cst_144 = arith.constant dense<0.000000e+00> : vector<2x128xf32>
    %491 = tpu.matmul %490, %460, %cst_144 {dimension_numbers = #tpu.dot_dimension_numbers<[1], [0], [0], [1], [0, 0, 1, 1], [], []>} : vector<2x32xbf16>, vector<32x128xbf16>, vector<2x128xf32> -> vector<2x128xf32>
    %492 = vector.broadcast %461 : vector<1x128xf32> to vector<2x128xf32>
    %493 = arith.addf %491, %492 : vector<2x128xf32>
    %494 = vector.shape_cast %493 : vector<2x128xf32> to vector<2x1x128xf32>
    %495 = vector.shape_cast %283 : vector<2x8x32xf32> to vector<16x32xf32>
    %496 = arith.truncf %495 : vector<16x32xf32> to vector<16x32xbf16>
    %cst_145 = arith.constant dense<0.000000e+00> : vector<16x128xf32>
    %497 = tpu.matmul %496, %460, %cst_145 {dimension_numbers = #tpu.dot_dimension_numbers<[1], [0], [0], [1], [0, 0, 1, 1], [], []>} : vector<16x32xbf16>, vector<32x128xbf16>, vector<16x128xf32> -> vector<16x128xf32>
    %498 = vector.broadcast %461 : vector<1x128xf32> to vector<16x128xf32>
    %499 = arith.addf %497, %498 : vector<16x128xf32>
    %500 = vector.shape_cast %499 : vector<16x128xf32> to vector<2x8x128xf32>
    %501 = vector.extract_strided_slice %494 {offsets = [0, 0, 0], sizes = [2, 1, 32], strides = [1, 1, 1]} : vector<2x1x128xf32> to vector<2x1x32xf32>
    %502 = vector.extract_strided_slice %494 {offsets = [0, 0, 32], sizes = [2, 1, 32], strides = [1, 1, 1]} : vector<2x1x128xf32> to vector<2x1x32xf32>
    %503 = vector.extract_strided_slice %500 {offsets = [0, 0, 0], sizes = [2, 8, 32], strides = [1, 1, 1]} : vector<2x8x128xf32> to vector<2x8x32xf32>
    %504 = vector.extract_strided_slice %500 {offsets = [0, 0, 32], sizes = [2, 8, 32], strides = [1, 1, 1]} : vector<2x8x128xf32> to vector<2x8x32xf32>
    %505 = arith.mulf %470, %501 : vector<2x1x32xf32>
    %cst_146 = arith.constant dense<0.000000e+00> : vector<2x1xf32>
    %506 = vector.multi_reduction <add>, %505, %cst_146 [2] : vector<2x1x32xf32> to vector<2x1xf32>
    %507 = vector.shape_cast %506 : vector<2x1xf32> to vector<2x1x1xf32>
    %508 = vector.broadcast %470 : vector<2x1x32xf32> to vector<2x8x32xf32>
    %509 = arith.mulf %508, %503 : vector<2x8x32xf32>
    %cst_147 = arith.constant dense<0.000000e+00> : vector<2x8xf32>
    %510 = vector.multi_reduction <add>, %509, %cst_147 [2] : vector<2x8x32xf32> to vector<2x8xf32>
    %511 = vector.shape_cast %510 : vector<2x8xf32> to vector<2x8x1xf32>
    %512 = arith.addf %511, %288 : vector<2x8x1xf32>
    %cst_148 = arith.constant dense<0xFF800000> : vector<2x1xf32>
    %513 = vector.multi_reduction <maximumf>, %512, %cst_148 [1] : vector<2x8x1xf32> to vector<2x1xf32>
    %514 = vector.shape_cast %513 : vector<2x1xf32> to vector<2x1x1xf32>
    %515 = arith.maximumf %514, %507 : vector<2x1x1xf32>
    %516 = arith.subf %507, %515 : vector<2x1x1xf32>
    %517 = math.exp %516 : vector<2x1x1xf32>
    %518 = vector.broadcast %515 : vector<2x1x1xf32> to vector<2x8x1xf32>
    %519 = arith.subf %512, %518 : vector<2x8x1xf32>
    %520 = math.exp %519 : vector<2x8x1xf32>
    %cst_149 = arith.constant dense<0.000000e+00> : vector<2x1xf32>
    %521 = vector.multi_reduction <add>, %520, %cst_149 [1] : vector<2x8x1xf32> to vector<2x1xf32>
    %522 = vector.shape_cast %521 : vector<2x1xf32> to vector<2x1x1xf32>
    %523 = arith.addf %517, %522 : vector<2x1x1xf32>
    %524 = tpu.reciprocal %523 {approx = true} : vector<2x1x1xf32> -> vector<2x1x1xf32>
    %525 = vector.broadcast %517 : vector<2x1x1xf32> to vector<2x1x32xf32>
    %526 = arith.mulf %525, %502 : vector<2x1x32xf32>
    %527 = vector.broadcast %520 : vector<2x8x1xf32> to vector<2x8x32xf32>
    %528 = arith.mulf %527, %504 : vector<2x8x32xf32>
    %cst_150 = arith.constant dense<0.000000e+00> : vector<2x32xf32>
    %529 = vector.multi_reduction <add>, %528, %cst_150 [1] : vector<2x8x32xf32> to vector<2x32xf32>
    %530 = vector.shape_cast %529 : vector<2x32xf32> to vector<2x1x32xf32>
    %531 = arith.addf %526, %530 : vector<2x1x32xf32>
    %532 = vector.broadcast %524 : vector<2x1x1xf32> to vector<2x1x32xf32>
    %533 = arith.mulf %531, %532 : vector<2x1x32xf32>
    %c528 = arith.constant 528 : index
    %c0_151 = arith.constant 0 : index
    %534 = vector.load %arg4[%c528, %c0_151] : memref<848x128xbf16, #tpu.memory_space<vmem>>, vector<32x128xbf16>
    %c176_152 = arith.constant 176 : index
    %c0_153 = arith.constant 0 : index
    %535 = vector.load %arg5[%c176_152, %c0_153] : memref<208x128xf32, #tpu.memory_space<vmem>>, vector<1x128xf32>
    %536 = vector.shape_cast %533 : vector<2x1x32xf32> to vector<2x32xf32>
    %537 = arith.truncf %536 : vector<2x32xf32> to vector<2x32xbf16>
    %cst_154 = arith.constant dense<0.000000e+00> : vector<2x128xf32>
    %538 = tpu.matmul %537, %534, %cst_154 {dimension_numbers = #tpu.dot_dimension_numbers<[1], [0], [0], [1], [0, 0, 1, 1], [], []>} : vector<2x32xbf16>, vector<32x128xbf16>, vector<2x128xf32> -> vector<2x128xf32>
    %539 = vector.broadcast %535 : vector<1x128xf32> to vector<2x128xf32>
    %540 = arith.addf %538, %539 : vector<2x128xf32>
    %541 = vector.shape_cast %540 : vector<2x128xf32> to vector<2x1x128xf32>
    %542 = vector.extract_strided_slice %541 {offsets = [0, 0, 0], sizes = [2, 1, 32], strides = [1, 1, 1]} : vector<2x1x128xf32> to vector<2x1x32xf32>
    %543 = vector.shape_cast %542 : vector<2x1x32xf32> to vector<2x32xf32>
    %c560 = arith.constant 560 : index
    %c0_155 = arith.constant 0 : index
    %544 = vector.load %arg4[%c560, %c0_155] : memref<848x128xbf16, #tpu.memory_space<vmem>>, vector<32x128xbf16>
    %c184 = arith.constant 184 : index
    %c0_156 = arith.constant 0 : index
    %545 = vector.load %arg5[%c184, %c0_156] : memref<208x128xf32, #tpu.memory_space<vmem>>, vector<1x128xf32>
    %546 = arith.truncf %543 : vector<2x32xf32> to vector<2x32xbf16>
    %cst_157 = arith.constant dense<0.000000e+00> : vector<2x128xf32>
    %547 = tpu.matmul %546, %544, %cst_157 {dimension_numbers = #tpu.dot_dimension_numbers<[1], [0], [0], [1], [0, 0, 1, 1], [], []>} : vector<2x32xbf16>, vector<32x128xbf16>, vector<2x128xf32> -> vector<2x128xf32>
    %548 = vector.broadcast %545 : vector<1x128xf32> to vector<2x128xf32>
    %549 = arith.addf %547, %548 : vector<2x128xf32>
    %cst_158 = arith.constant 0.000000e+00 : f32
    %550 = vector.broadcast %cst_158 : f32 to vector<2x128xf32>
    %551 = arith.maximumf %549, %550 : vector<2x128xf32>
    %c592 = arith.constant 592 : index
    %c0_159 = arith.constant 0 : index
    %552 = vector.load %arg4[%c592, %c0_159] : memref<848x128xbf16, #tpu.memory_space<vmem>>, vector<128x128xbf16>
    %c192 = arith.constant 192 : index
    %c0_160 = arith.constant 0 : index
    %553 = vector.load %arg5[%c192, %c0_160] : memref<208x128xf32, #tpu.memory_space<vmem>>, vector<1x128xf32>
    %554 = arith.truncf %551 : vector<2x128xf32> to vector<2x128xbf16>
    %cst_161 = arith.constant dense<0.000000e+00> : vector<2x128xf32>
    %555 = tpu.matmul %554, %552, %cst_161 {dimension_numbers = #tpu.dot_dimension_numbers<[1], [0], [0], [1], [0, 0, 1, 1], [], []>} : vector<2x128xbf16>, vector<128x128xbf16>, vector<2x128xf32> -> vector<2x128xf32>
    %556 = vector.broadcast %553 : vector<1x128xf32> to vector<2x128xf32>
    %557 = arith.addf %555, %556 : vector<2x128xf32>
    %cst_162 = arith.constant 0.000000e+00 : f32
    %558 = vector.broadcast %cst_162 : f32 to vector<2x128xf32>
    %559 = arith.maximumf %557, %558 : vector<2x128xf32>
    %c720 = arith.constant 720 : index
    %c0_163 = arith.constant 0 : index
    %560 = vector.load %arg4[%c720, %c0_163] : memref<848x128xbf16, #tpu.memory_space<vmem>>, vector<128x128xbf16>
    %c200 = arith.constant 200 : index
    %c0_164 = arith.constant 0 : index
    %561 = vector.load %arg5[%c200, %c0_164] : memref<208x128xf32, #tpu.memory_space<vmem>>, vector<1x128xf32>
    %562 = arith.truncf %559 : vector<2x128xf32> to vector<2x128xbf16>
    %cst_165 = arith.constant dense<0.000000e+00> : vector<2x128xf32>
    %563 = tpu.matmul %562, %560, %cst_165 {dimension_numbers = #tpu.dot_dimension_numbers<[1], [0], [0], [1], [0, 0, 1, 1], [], []>} : vector<2x128xbf16>, vector<128x128xbf16>, vector<2x128xf32> -> vector<2x128xf32>
    %564 = vector.broadcast %561 : vector<1x128xf32> to vector<2x128xf32>
    %565 = arith.addf %563, %564 : vector<2x128xf32>
    %c0_166 = arith.constant 0 : index
    %c0_167 = arith.constant 0 : index
    %566 = vector.load %arg6[%c0_166, %c0_167] : memref<2x128xf32, #tpu.memory_space<vmem>>, vector<2x128xf32>
    tpu.vector_store %arg6[%c0_166, %c0_167], %565 {strides = array<i32>} : memref<2x128xf32, #tpu.memory_space<vmem>>, vector<2x128xf32>,
    return
  }
  func.func @transform_0(%arg0: i32) -> (i32, i32, i32) {
    %c0_i32 = arith.constant 0 : i32
    %c0_i32_0 = arith.constant 0 : i32
    %c0_i32_1 = arith.constant 0 : i32
    %c0_i32_2 = arith.constant 0 : i32
    return %c0_i32, %c0_i32_0, %c0_i32_1 : i32, i32, i32
  }
  func.func @transform_1(%arg0: i32) -> (i32, i32, i32) {
    %c0_i32 = arith.constant 0 : i32
    %c0_i32_0 = arith.constant 0 : i32
    %c0_i32_1 = arith.constant 0 : i32
    %c0_i32_2 = arith.constant 0 : i32
    return %c0_i32, %c0_i32_0, %c0_i32_1 : i32, i32, i32
  }
  func.func @transform_2(%arg0: i32) -> (i32, i32, i32) {
    %c0_i32 = arith.constant 0 : i32
    %c0_i32_0 = arith.constant 0 : i32
    %c0_i32_1 = arith.constant 0 : i32
    %c0_i32_2 = arith.constant 0 : i32
    return %c0_i32, %c0_i32_0, %c0_i32_1 : i32, i32, i32
  }
  func.func @transform_3(%arg0: i32) -> (i32, i32) {
    %c0_i32 = arith.constant 0 : i32
    %c0_i32_0 = arith.constant 0 : i32
    %c0_i32_1 = arith.constant 0 : i32
    return %c0_i32, %c0_i32_0 : i32, i32
  }
  func.func @transform_4(%arg0: i32) -> (i32, i32) {
    %c0_i32 = arith.constant 0 : i32
    %c0_i32_0 = arith.constant 0 : i32
    %c0_i32_1 = arith.constant 0 : i32
    return %c0_i32, %c0_i32_0 : i32, i32
  }
  func.func @transform_5(%arg0: i32) -> (i32, i32) {
    %c0_i32 = arith.constant 0 : i32
    %c0_i32_0 = arith.constant 0 : i32
    %c0_i32_1 = arith.constant 0 : i32
    return %c0_i32, %c0_i32_0 : i32, i32
  }
}

</mosaic_0001>

<llo_original>
// kernel: apply.1
$region0: #{apply.1}
  #allocation0 [shape = 'u32[]', space=smem, size = 0x4, offset = 0x4, fixed_abs, tag = 'smem constant byte address 0x4 - core index']
  #allocation1 [shape = 'u32[144,128]{1,0:T(1,128)}', space=vmem, size = 0x12000, scoped, tag = 'internal scratch']
  %s0 = inlined_call_operand.vmem [shape: f32[2,8,16], index: 0, kind: input, shape index: {}]
  %s1 = inlined_call_operand.vmem [shape: f32[2,8,1], index: 1, kind: input, shape index: {}]
  %s2 = inlined_call_operand.vmem [shape: f32[2,1,8], index: 2, kind: input, shape index: {}]
  %s3 = inlined_call_operand.hbm [shape: bf16[848,128], index: 3, kind: input, shape index: {}]
  %s4 = inlined_call_operand.hbm [shape: f32[208,128], index: 4, kind: input, shape index: {}]
  %s5 = inlined_call_operand.hbm [shape: f32[2,128], index: 5, kind: output, shape index: {}]
  %s6 = sld [smem:[#allocation0]]
  $region38: #{apply.1} parent=0
    _
  %s8 = ssub.s32 1, %s6
  %s9 = scalar_select 0, %s8, %s6
  $region1: #{apply.1} parent=0
    #allocation2 [shape = 'u8[217088]{0}', space=vmem, size = 0x35000, scoped, tag = 'input window, operand 3, single buffered']
    #allocation3 [shape = 's32[1]{0}', space=sflag, size = 0x4, scoped, tag = 'scoped memory for apply.1']
    #allocation4 [shape = 's32[1]{0}', space=sflag, size = 0x4, scoped, tag = 'scoped memory for apply.1']
    #allocation5 [shape = 'u8[106496]{0}', space=vmem, size = 0x1a000, scoped, tag = 'input window, operand 4, single buffered']
    #allocation6 [shape = 's32[1]{0}', space=sflag, size = 0x4, scoped, tag = 'scoped memory for apply.1']
    #allocation7 [shape = 'u8[1024]{0}', space=vmem, size = 0x400, scoped, tag = 'output window, operand 0, single buffered']
    %10 = vsyncpa [#allocation3], 0
    %11 = vsyncpa [#allocation6], 0
    %12 = vsyncpa [#allocation4], 0
    // Predicated region
    $region2: #{apply.1} parent=1 // pred_check
      _
    $region3: #{apply.1} parent=1 // pred_check_branch
      %14 = sbr.rel (0) target = $region5
    $region4: #{apply.1} parent=1 // pred_region
      _
    $region5: #{apply.1} parent=1 // pred_fallthru
      _
    // Predicated region
    $region6: #{apply.1} parent=1 // pred_check
      _
    $region7: #{apply.1} parent=1 // pred_check_branch
      %16 = sbr.rel (0) target = $region9
    $region8: #{apply.1} parent=1 // pred_region
      _
    $region9: #{apply.1} parent=1 // pred_fallthru
      _
    // Predicated region
    $region10: #{apply.1} parent=1 // pred_check
      _
    $region11: #{apply.1} parent=1 // pred_check_branch
      %18 = sbr.rel (0) target = $region13
    $region12: #{apply.1} parent=1 // pred_region
      _
    $region13: #{apply.1} parent=1 // pred_fallthru
      _
    // Predicated region
    $region14: #{apply.1} parent=1 // pred_check
      _
    $region15: #{apply.1} parent=1 // pred_check_branch
      %20 = sbr.rel (0) target = $region17
    $region16: #{apply.1} parent=1 // pred_region
      %s22 = ssub.s32 6784, 6784
      %23 = vsyncadd [#allocation3], %s22
      %s24 = sshll.u32 [#allocation2], 4
      %s25 = int_to_ptr.vmem [resolvable:$true] %s24
      %30 = dma.hbm_to_vmem [thread:$0]  %s3, 6784, %s25, [#allocation3], 64, 64, 4
    $region17: #{apply.1} parent=1 // pred_fallthru
      _
    // Predicated region
    $region18: #{apply.1} parent=1 // pred_check
      _
    $region19: #{apply.1} parent=1 // pred_check_branch
      %32 = sbr.rel (0) target = $region21
    $region20: #{apply.1} parent=1 // pred_region
      %s34 = ssub.s32 3328, 3328
      %35 = vsyncadd [#allocation6], %s34
      %s36 = sshll.u32 [#allocation5], 4
      %s37 = int_to_ptr.vmem [resolvable:$true] %s36
      %42 = dma.hbm_to_vmem [thread:$0]  %s4, 3328, %s37, [#allocation6], 128, 128, 8
    $region21: #{apply.1} parent=1 // pred_fallthru
      _
    // Predicated region
    $region22: #{apply.1} parent=1 // pred_check
      _
    $region23: #{apply.1} parent=1 // pred_check_branch
      %44 = sbr.rel (0) target = $region25
    $region24: #{apply.1} parent=1 // pred_region
      %45 = dma.done [#allocation3], 6784
    $region25: #{apply.1} parent=1 // pred_fallthru
      _
    // Predicated region
    $region26: #{apply.1} parent=1 // pred_check
      _
    $region27: #{apply.1} parent=1 // pred_check_branch
      %47 = sbr.rel (0) target = $region29
    $region28: #{apply.1} parent=1 // pred_region
      %48 = dma.done [#allocation6], 3328
    $region29: #{apply.1} parent=1 // pred_fallthru
      _
    %v50 = vld [vmem:[%s0] sm:$0xff]
    %v51 = vld [vmem:[%s0 + $0x8] sm:$0xff]
    %v52 = vld [vmem:[%s1] sm:$0xff]
    %v53 = vld [vmem:[%s1 + $0x8] sm:$0xff]
    %v54 = vld [vmem:[%s2] sm:$0x1]
    %v55 = vld [vmem:[%s2 + $0x1] sm:$0x1]
    %v56 = vld [vmem:[#allocation2] sm:$0xf]
    %v57 = vld [vmem:[#allocation2 + $0x4] sm:$0xf]
    %v58 = vld [vmem:[#allocation5] sm:$0x1]
    %v59 = vpack.c.bf16 %v51, %v50
    %v60 = vlaneseq
    %v61 = vshrl.u32 %v60, 7
    %v62 = vsub.s32 0, %v61
    %v63 = vrot.slane %v58, %v62
    %v66 = vunpack.c.l.b16 %v56
    %v67 = vunpack.c.l.b16 %v57
    %v68 = vpack.c.b16 %v67, %v66
    %vm70 = vcmask 130048
    %v72 = vsel %vm70, %v59, 0
    %74 = vmatprep.subr.bf16.mxu0 0
    %75 = vmatpush1.bf16.msra.mxu0 %v68
    %76 = vmatprep.subr.bf16.mxu0 0
    %77 = vmatpush1.bf16.msra.mxu0 0
    %78 = vmatprep.subr.bf16.mxu0 0
    %79 = vmatpush1.bf16.msra.mxu0 0
    %80 = vmatprep.subr.bf16.mxu0 0
    %81 = vmatpush1.bf16.msra.mxu0 0
    %82 = vmatprep.subr.bf16.mxu0 0
    %83 = vmatpush1.bf16.msra.mxu0 0
    %84 = vmatprep.subr.bf16.mxu0 0
    %85 = vmatpush1.bf16.msra.mxu0 0
    %86 = vmatprep.subr.bf16.mxu0 0
    %87 = vmatpush1.bf16.msra.mxu0 0
    %88 = vmatprep.subr.bf16.mxu0 0
    %89 = vmatpush1.bf16.msra.mxu0 0
    %90 = vmatprep.subr.bf16.mxu0 0
    %91 = vmatpush1.bf16.msra.mxu0 0
    %92 = vmatprep.subr.bf16.mxu0 0
    %93 = vmatpush1.bf16.msra.mxu0 0
    %94 = vmatprep.subr.bf16.mxu0 0
    %95 = vmatpush1.bf16.msra.mxu0 0
    %96 = vmatprep.subr.bf16.mxu0 0
    %97 = vmatpush1.bf16.msra.mxu0 0
    %98 = vmatprep.subr.bf16.mxu0 0
    %99 = vmatpush1.bf16.msra.mxu0 0
    %100 = vmatprep.subr.bf16.mxu0 0
    %101 = vmatpush1.bf16.msra.mxu0 0
    %102 = vmatprep.subr.bf16.mxu0 0
    %103 = vmatpush1.bf16.msra.mxu0 0
    %104 = vmatprep.subr.bf16.mxu0 0
    %105 = vmatpush1.bf16.msra.mxu0 0
    %106 = vmatprep.mubr.bf16.mxu0 0
    %107 = vmatmul.mubr.bf16.gmra.mrb[0].mxu0 %v72
    %v108 = vpop.f32.mrb[0].mxu0
    %v109 = vadd.f32 %v63, %v108
    %v110 = vpop.f32.mrb[0].mxu0
    %v111 = vpop.f32.mrb[0].mxu0
    %v112 = vadd.f32 %v63, %v111
    %v113 = vpop.f32.mrb[0].mxu0
    %114 = vdwg.mxu0
    %116 = vset.pattern.permute.xlu0 0
    %117 = vperm.xlu0 %116, %v52
    %v118 = vpop.permute.xlu0 %117
    %121 = vset.pattern.permute.xlu0 0
    %122 = vperm.xlu0 %121, %v53
    %v123 = vpop.permute.xlu0 %122
    %v125 = vmul.f32 %v109, %v118
    %v126 = vmul.f32 %v112, %v123
    %vm127 = vcmask 261120
    %v128 = vsel %vm127, %v125, 0.0
    %129 = vadd.xlane.f32.xlu0 %v128
    %v130 = vpop.xlane.xlu0 %129
    %v131 = vsel %vm127, %v126, 0.0
    %132 = vadd.xlane.f32.xlu0 %v131
    %v133 = vpop.xlane.xlu0 %132
    %v134 = vrcp.pop 32.0
    %v135 = vmul.f32 %v130, %v134
    %v136 = vmul.f32 %v133, %v134
    %v137 = vsub.f32 %v125, %v135
    %v138 = vsub.f32 %v126, %v136
    %v139 = vmul.f32 %v137, %v137
    %v140 = vmul.f32 %v138, %v138
    %v141 = vsel %vm127, %v139, 0.0
    %142 = vadd.xlane.f32.xlu0 %v141
    %v143 = vpop.xlane.xlu0 %142
    %v144 = vsel %vm127, %v140, 0.0
    %145 = vadd.xlane.f32.xlu0 %v144
    %v146 = vpop.xlane.xlu0 %145
    %v147 = vmul.f32 %v143, %v134
    %v148 = vmul.f32 %v146, %v134
    %v149 = vadd.f32 %v147, 1e-05
    %v150 = vadd.f32 %v148, 1e-05
    %v151 = vrsqrt.pop %v149
    %v152 = vrsqrt.pop %v150
    %v153 = vmul.f32 %v137, %v151
    %v154 = vmul.f32 %v138, %v152
    %v155 = vld [vmem:[#allocation2 + $0x8] sm:$0xf]
    %v156 = vld [vmem:[#allocation2 + $0xc] sm:$0xf]
    %v157 = vld [vmem:[#allocation2 + $0x10] sm:$0xf]
    %v158 = vld [vmem:[#allocation2 + $0x14] sm:$0xf]
    %v159 = vld [vmem:[#allocation5 + $0x8] sm:$0x1]
    %v160 = vpack.c.bf16 %v154, %v153
    %v161 = vlaneseq
    %v162 = vshrl.u32 %v161, 7
    %v163 = vsub.s32 0, %v162
    %v164 = vrot.slane %v159, %v163
    %v169 = vunpack.c.l.b16 %v155
    %v170 = vunpack.c.l.b16 %v156
    %v171 = vunpack.c.l.b16 %v157
    %v172 = vunpack.c.l.b16 %v158
    %v173 = vpack.c.b16 %v170, %v169
    %v174 = vpack.c.b16 %v172, %v171
    %v178 = vsel %vm127, %v160, 0
    %180 = vmatprep.subr.bf16.mxu0 0
    %181 = vmatpush1.bf16.msra.mxu0 %v173
    %182 = vmatprep.subr.bf16.mxu0 0
    %183 = vmatpush1.bf16.msra.mxu0 %v174
    %184 = vmatprep.subr.bf16.mxu0 0
    %185 = vmatpush1.bf16.msra.mxu0 0
    %186 = vmatprep.subr.bf16.mxu0 0
    %187 = vmatpush1.bf16.msra.mxu0 0
    %188 = vmatprep.subr.bf16.mxu0 0
    %189 = vmatpush1.bf16.msra.mxu0 0
    %190 = vmatprep.subr.bf16.mxu0 0
    %191 = vmatpush1.bf16.msra.mxu0 0
    %192 = vmatprep.subr.bf16.mxu0 0
    %193 = vmatpush1.bf16.msra.mxu0 0
    %194 = vmatprep.subr.bf16.mxu0 0
    %195 = vmatpush1.bf16.msra.mxu0 0
    %196 = vmatprep.subr.bf16.mxu0 0
    %197 = vmatpush1.bf16.msra.mxu0 0
    %198 = vmatprep.subr.bf16.mxu0 0
    %199 = vmatpush1.bf16.msra.mxu0 0
    %200 = vmatprep.subr.bf16.mxu0 0
    %201 = vmatpush1.bf16.msra.mxu0 0
    %202 = vmatprep.subr.bf16.mxu0 0
    %203 = vmatpush1.bf16.msra.mxu0 0
    %204 = vmatprep.subr.bf16.mxu0 0
    %205 = vmatpush1.bf16.msra.mxu0 0
    %206 = vmatprep.subr.bf16.mxu0 0
    %207 = vmatpush1.bf16.msra.mxu0 0
    %208 = vmatprep.subr.bf16.mxu0 0
    %209 = vmatpush1.bf16.msra.mxu0 0
    %210 = vmatprep.subr.bf16.mxu0 0
    %211 = vmatpush1.bf16.msra.mxu0 0
    %212 = vmatprep.mubr.bf16.mxu0 0
    %213 = vmatmul.mubr.bf16.gmra.mrb[0].mxu0 %v178
    %v214 = vpop.f32.mrb[0].mxu0
    %v215 = vadd.f32 %v164, %v214
    %v216 = vpop.f32.mrb[0].mxu0
    %v217 = vpop.f32.mrb[0].mxu0
    %v218 = vadd.f32 %v164, %v217
    %v219 = vpop.f32.mrb[0].mxu0
    %220 = vdwg.mxu0
    %v223 = vlaneseq
    %v224 = vshrl.u32 %v223, 7
    %v225 = vsub.s32 0, %v224
    %v226 = vrot.slane %v54, %v225
    %v227 = vlaneseq
    %v228 = vshrl.u32 %v227, 7
    %v229 = vsub.s32 0, %v228
    %v230 = vrot.slane %v55, %v229
    %234 = vrot.lane.b32.xlu0 %v215, 96
    %v235 = vpop.permute.xlu0 %234
    %v236 = vsel %vm127, %v215, 0
    %v238 = vsel %vm127, %v235, 0
    %240 = vmatprep.subr.mxu0 0.0
    %241 = vmatpush1.xpose.msra.mxu0 %v238
    %242 = vmatprep.subr.mxu0 0.0
    %243 = vmatpush1.xpose.msra.mxu0 0.0
    %244 = vmatprep.subr.mxu0 0.0
    %245 = vmatpush1.xpose.msra.mxu0 0.0
    %246 = vmatprep.subr.mxu0 0.0
    %247 = vmatpush1.xpose.msra.mxu0 0.0
    %248 = vmatprep.subr.mxu0 0.0
    %249 = vmatpush1.xpose.msra.mxu0 0.0
    %250 = vmatprep.subr.mxu0 0.0
    %251 = vmatpush1.xpose.msra.mxu0 0.0
    %252 = vmatprep.subr.mxu0 0.0
    %253 = vmatpush1.xpose.msra.mxu0 0.0
    %254 = vmatprep.subr.mxu0 0.0
    %255 = vmatpush1.xpose.msra.mxu0 0.0
    %256 = vmatprep.subr.mxu0 0.0
    %257 = vmatpush1.xpose.msra.mxu0 0.0
    %258 = vmatprep.subr.mxu0 0.0
    %259 = vmatpush1.xpose.msra.mxu0 0.0
    %260 = vmatprep.subr.mxu0 0.0
    %261 = vmatpush1.xpose.msra.mxu0 0.0
    %262 = vmatprep.subr.mxu0 0.0
    %263 = vmatpush1.xpose.msra.mxu0 0.0
    %264 = vmatprep.subr.mxu0 0.0
    %265 = vmatpush1.xpose.msra.mxu0 0.0
    %266 = vmatprep.subr.mxu0 0.0
    %267 = vmatpush1.xpose.msra.mxu0 0.0
    %268 = vmatprep.subr.mxu0 0.0
    %269 = vmatpush1.xpose.msra.mxu0 0.0
    %270 = vmatprep.subr.mxu0 0.0
    %271 = vmatpush1.xpose.msra.mxu0 0.0
    %272 = vmatprep.subr.mxu0 0.0
    %273 = vmatpush1.xpose.msra.mxu0 0.0
    %274 = vmatprep.subr.mxu0 0.0
    %275 = vmatpush1.xpose.msra.mxu0 0.0
    %276 = vmatprep.subr.mxu0 0.0
    %277 = vmatpush1.xpose.msra.mxu0 0.0
    %278 = vmatprep.subr.mxu0 0.0
    %279 = vmatpush1.xpose.msra.mxu0 0.0
    %280 = vmatprep.subr.mxu0 0.0
    %281 = vmatpush1.xpose.msra.mxu0 0.0
    %282 = vmatprep.subr.mxu0 0.0
    %283 = vmatpush1.xpose.msra.mxu0 0.0
    %284 = vmatprep.subr.mxu0 0.0
    %285 = vmatpush1.xpose.msra.mxu0 0.0
    %286 = vmatprep.subr.mxu0 0.0
    %287 = vmatpush1.xpose.msra.mxu0 0.0
    %288 = vmatprep.subr.mxu0 0.0
    %289 = vmatpush1.xpose.msra.mxu0 0.0
    %290 = vmatprep.subr.mxu0 0.0
    %291 = vmatpush1.xpose.msra.mxu0 0.0
    %292 = vmatprep.subr.mxu0 0.0
    %293 = vmatpush1.xpose.msra.mxu0 0.0
    %294 = vmatprep.subr.mxu0 0.0
    %295 = vmatpush1.xpose.msra.mxu0 0.0
    %296 = vmatprep.subr.mxu0 0.0
    %297 = vmatpush1.xpose.msra.mxu0 0.0
    %298 = vmatprep.subr.mxu0 0.0
    %299 = vmatpush1.xpose.msra.mxu0 0.0
    %300 = vmatprep.subr.mxu0 0.0
    %301 = vmatpush1.xpose.msra.mxu0 0.0
    %302 = vmatprep.subr.mxu0 0.0
    %303 = vmatpush1.xpose.msra.mxu0 0.0
    %304 = vmatprep.mubr.f32.mxu0 0.0
    %305 = vmatmul.mubr.f32.gmra.mrb[0].mxu0 %v236
    %v306 = vpop.f32.mrb[0].mxu0
    %v307 = vadd.f32 %v226, %v306
    %v308 = vpop.f32.mrb[0].mxu0
    %309 = vdwg.mxu0
    %311 = vrot.lane.b32.xlu0 %v218, 96
    %v312 = vpop.permute.xlu0 %311
    %v313 = vsel %vm127, %v218, 0
    %v315 = vsel %vm127, %v312, 0
    %317 = vmatprep.subr.mxu0 0.0
    %318 = vmatpush1.xpose.msra.mxu0 %v315
    %319 = vmatprep.subr.mxu0 0.0
    %320 = vmatpush1.xpose.msra.mxu0 0.0
    %321 = vmatprep.subr.mxu0 0.0
    %322 = vmatpush1.xpose.msra.mxu0 0.0
    %323 = vmatprep.subr.mxu0 0.0
    %324 = vmatpush1.xpose.msra.mxu0 0.0
    %325 = vmatprep.subr.mxu0 0.0
    %326 = vmatpush1.xpose.msra.mxu0 0.0
    %327 = vmatprep.subr.mxu0 0.0
    %328 = vmatpush1.xpose.msra.mxu0 0.0
    %329 = vmatprep.subr.mxu0 0.0
    %330 = vmatpush1.xpose.msra.mxu0 0.0
    %331 = vmatprep.subr.mxu0 0.0
    %332 = vmatpush1.xpose.msra.mxu0 0.0
    %333 = vmatprep.subr.mxu0 0.0
    %334 = vmatpush1.xpose.msra.mxu0 0.0
    %335 = vmatprep.subr.mxu0 0.0
    %336 = vmatpush1.xpose.msra.mxu0 0.0
    %337 = vmatprep.subr.mxu0 0.0
    %338 = vmatpush1.xpose.msra.mxu0 0.0
    %339 = vmatprep.subr.mxu0 0.0
    %340 = vmatpush1.xpose.msra.mxu0 0.0
    %341 = vmatprep.subr.mxu0 0.0
    %342 = vmatpush1.xpose.msra.mxu0 0.0
    %343 = vmatprep.subr.mxu0 0.0
    %344 = vmatpush1.xpose.msra.mxu0 0.0
    %345 = vmatprep.subr.mxu0 0.0
    %346 = vmatpush1.xpose.msra.mxu0 0.0
    %347 = vmatprep.subr.mxu0 0.0
    %348 = vmatpush1.xpose.msra.mxu0 0.0
    %349 = vmatprep.subr.mxu0 0.0
    %350 = vmatpush1.xpose.msra.mxu0 0.0
    %351 = vmatprep.subr.mxu0 0.0
    %352 = vmatpush1.xpose.msra.mxu0 0.0
    %353 = vmatprep.subr.mxu0 0.0
    %354 = vmatpush1.xpose.msra.mxu0 0.0
    %355 = vmatprep.subr.mxu0 0.0
    %356 = vmatpush1.xpose.msra.mxu0 0.0
    %357 = vmatprep.subr.mxu0 0.0
    %358 = vmatpush1.xpose.msra.mxu0 0.0
    %359 = vmatprep.subr.mxu0 0.0
    %360 = vmatpush1.xpose.msra.mxu0 0.0
    %361 = vmatprep.subr.mxu0 0.0
    %362 = vmatpush1.xpose.msra.mxu0 0.0
    %363 = vmatprep.subr.mxu0 0.0
    %364 = vmatpush1.xpose.msra.mxu0 0.0
    %365 = vmatprep.subr.mxu0 0.0
    %366 = vmatpush1.xpose.msra.mxu0 0.0
    %367 = vmatprep.subr.mxu0 0.0
    %368 = vmatpush1.xpose.msra.mxu0 0.0
    %369 = vmatprep.subr.mxu0 0.0
    %370 = vmatpush1.xpose.msra.mxu0 0.0
    %371 = vmatprep.subr.mxu0 0.0
    %372 = vmatpush1.xpose.msra.mxu0 0.0
    %373 = vmatprep.subr.mxu0 0.0
    %374 = vmatpush1.xpose.msra.mxu0 0.0
    %375 = vmatprep.subr.mxu0 0.0
    %376 = vmatpush1.xpose.msra.mxu0 0.0
    %377 = vmatprep.subr.mxu0 0.0
    %378 = vmatpush1.xpose.msra.mxu0 0.0
    %379 = vmatprep.subr.mxu0 0.0
    %380 = vmatpush1.xpose.msra.mxu0 0.0
    %381 = vmatprep.mubr.f32.mxu0 0.0
    %382 = vmatmul.mubr.f32.gmra.mrb[0].mxu0 %v313
    %v383 = vpop.f32.mrb[0].mxu0
    %v384 = vadd.f32 %v230, %v383
    %v385 = vpop.f32.mrb[0].mxu0
    %386 = vdwg.mxu0
    %vm387 = vcmask 64512
    %v388 = vsel %vm387, %v307, -inf
    %389 = vmax.xlane.f32.xlu0 %v388
    %v390 = vpop.xlane.xlu0 %389
    %v391 = vsel %vm387, %v384, -inf
    %392 = vmax.xlane.f32.xlu0 %v391
    %v393 = vpop.xlane.xlu0 %392
    %v394 = vsub.f32 %v307, %v390
    %v395 = vsub.f32 %v384, %v393
    %v396 = vmul.f32 %v394, 1.442695
    %v397 = vpow.pop %v396
    %v398 = vmul.f32 %v395, 1.442695
    %v399 = vpow.pop %v398
    %v400 = vsel %vm387, %v397, 0.0
    %401 = vadd.xlane.f32.xlu0 %v400
    %v402 = vpop.xlane.xlu0 %401
    %v403 = vsel %vm387, %v399, 0.0
    %404 = vadd.xlane.f32.xlu0 %v403
    %v405 = vpop.xlane.xlu0 %404
    %v406 = vrcp.pop %v402
    %v407 = vrcp.pop %v405
    %v408 = vmul.f32 %v397, %v406
    %v409 = vmul.f32 %v399, %v407
    %410 = vrot.lane.b32.xlu0 %v215, 64
    %v411 = vpop.permute.xlu0 %410
    %v414 = vsel %vm387, %v408, 0
    %416 = vmatprep.subr.mxu0 0.0
    %417 = vmatpush1.msra.mxu0 %v411
    %418 = vmatprep.subr.mxu0 0.0
    %419 = vmatpush1.msra.mxu0 0.0
    %420 = vmatprep.subr.mxu0 0.0
    %421 = vmatpush1.msra.mxu0 0.0
    %422 = vmatprep.subr.mxu0 0.0
    %423 = vmatpush1.msra.mxu0 0.0
    %424 = vmatprep.subr.mxu0 0.0
    %425 = vmatpush1.msra.mxu0 0.0
    %426 = vmatprep.subr.mxu0 0.0
    %427 = vmatpush1.msra.mxu0 0.0
    %428 = vmatprep.subr.mxu0 0.0
    %429 = vmatpush1.msra.mxu0 0.0
    %430 = vmatprep.subr.mxu0 0.0
    %431 = vmatpush1.msra.mxu0 0.0
    %432 = vmatprep.subr.mxu0 0.0
    %433 = vmatpush1.msra.mxu0 0.0
    %434 = vmatprep.subr.mxu0 0.0
    %435 = vmatpush1.msra.mxu0 0.0
    %436 = vmatprep.subr.mxu0 0.0
    %437 = vmatpush1.msra.mxu0 0.0
    %438 = vmatprep.subr.mxu0 0.0
    %439 = vmatpush1.msra.mxu0 0.0
    %440 = vmatprep.subr.mxu0 0.0
    %441 = vmatpush1.msra.mxu0 0.0
    %442 = vmatprep.subr.mxu0 0.0
    %443 = vmatpush1.msra.mxu0 0.0
    %444 = vmatprep.subr.mxu0 0.0
    %445 = vmatpush1.msra.mxu0 0.0
    %446 = vmatprep.subr.mxu0 0.0
    %447 = vmatpush1.msra.mxu0 0.0
    %448 = vmatprep.subr.mxu0 0.0
    %449 = vmatpush1.msra.mxu0 0.0
    %450 = vmatprep.subr.mxu0 0.0
    %451 = vmatpush1.msra.mxu0 0.0
    %452 = vmatprep.subr.mxu0 0.0
    %453 = vmatpush1.msra.mxu0 0.0
    %454 = vmatprep.subr.mxu0 0.0
    %455 = vmatpush1.msra.mxu0 0.0
    %456 = vmatprep.subr.mxu0 0.0
    %457 = vmatpush1.msra.mxu0 0.0
    %458 = vmatprep.subr.mxu0 0.0
    %459 = vmatpush1.msra.mxu0 0.0
    %460 = vmatprep.subr.mxu0 0.0
    %461 = vmatpush1.msra.mxu0 0.0
    %462 = vmatprep.subr.mxu0 0.0
    %463 = vmatpush1.msra.mxu0 0.0
    %464 = vmatprep.subr.mxu0 0.0
    %465 = vmatpush1.msra.mxu0 0.0
    %466 = vmatprep.subr.mxu0 0.0
    %467 = vmatpush1.msra.mxu0 0.0
    %468 = vmatprep.subr.mxu0 0.0
    %469 = vmatpush1.msra.mxu0 0.0
    %470 = vmatprep.subr.mxu0 0.0
    %471 = vmatpush1.msra.mxu0 0.0
    %472 = vmatprep.subr.mxu0 0.0
    %473 = vmatpush1.msra.mxu0 0.0
    %474 = vmatprep.subr.mxu0 0.0
    %475 = vmatpush1.msra.mxu0 0.0
    %476 = vmatprep.subr.mxu0 0.0
    %477 = vmatpush1.msra.mxu0 0.0
    %478 = vmatprep.subr.mxu0 0.0
    %479 = vmatpush1.msra.mxu0 0.0
    %480 = vmatprep.mubr.f32.mxu0 0.0
    %481 = vmatmul.mubr.f32.gmra.mrb[0].mxu0 %v414
    %v482 = vpop.f32.mrb[0].mxu0
    %v483 = vadd.f32 0.0, %v482
    %v484 = vpop.f32.mrb[0].mxu0
    %485 = vdwg.mxu0
    %486 = vrot.lane.b32.xlu0 %v218, 64
    %v487 = vpop.permute.xlu0 %486
    %v490 = vsel %vm387, %v409, 0
    %492 = vmatprep.subr.mxu0 0.0
    %493 = vmatpush1.msra.mxu0 %v487
    %494 = vmatprep.subr.mxu0 0.0
    %495 = vmatpush1.msra.mxu0 0.0
    %496 = vmatprep.subr.mxu0 0.0
    %497 = vmatpush1.msra.mxu0 0.0
    %498 = vmatprep.subr.mxu0 0.0
    %499 = vmatpush1.msra.mxu0 0.0
    %500 = vmatprep.subr.mxu0 0.0
    %501 = vmatpush1.msra.mxu0 0.0
    %502 = vmatprep.subr.mxu0 0.0
    %503 = vmatpush1.msra.mxu0 0.0
    %504 = vmatprep.subr.mxu0 0.0
    %505 = vmatpush1.msra.mxu0 0.0
    %506 = vmatprep.subr.mxu0 0.0
    %507 = vmatpush1.msra.mxu0 0.0
    %508 = vmatprep.subr.mxu0 0.0
    %509 = vmatpush1.msra.mxu0 0.0
    %510 = vmatprep.subr.mxu0 0.0
    %511 = vmatpush1.msra.mxu0 0.0
    %512 = vmatprep.subr.mxu0 0.0
    %513 = vmatpush1.msra.mxu0 0.0
    %514 = vmatprep.subr.mxu0 0.0
    %515 = vmatpush1.msra.mxu0 0.0
    %516 = vmatprep.subr.mxu0 0.0
    %517 = vmatpush1.msra.mxu0 0.0
    %518 = vmatprep.subr.mxu0 0.0
    %519 = vmatpush1.msra.mxu0 0.0
    %520 = vmatprep.subr.mxu0 0.0
    %521 = vmatpush1.msra.mxu0 0.0
    %522 = vmatprep.subr.mxu0 0.0
    %523 = vmatpush1.msra.mxu0 0.0
    %524 = vmatprep.subr.mxu0 0.0
    %525 = vmatpush1.msra.mxu0 0.0
    %526 = vmatprep.subr.mxu0 0.0
    %527 = vmatpush1.msra.mxu0 0.0
    %528 = vmatprep.subr.mxu0 0.0
    %529 = vmatpush1.msra.mxu0 0.0
    %530 = vmatprep.subr.mxu0 0.0
    %531 = vmatpush1.msra.mxu0 0.0
    %532 = vmatprep.subr.mxu0 0.0
    %533 = vmatpush1.msra.mxu0 0.0
    %534 = vmatprep.subr.mxu0 0.0
    %535 = vmatpush1.msra.mxu0 0.0
    %536 = vmatprep.subr.mxu0 0.0
    %537 = vmatpush1.msra.mxu0 0.0
    %538 = vmatprep.subr.mxu0 0.0
    %539 = vmatpush1.msra.mxu0 0.0
    %540 = vmatprep.subr.mxu0 0.0
    %541 = vmatpush1.msra.mxu0 0.0
    %542 = vmatprep.subr.mxu0 0.0
    %543 = vmatpush1.msra.mxu0 0.0
    %544 = vmatprep.subr.mxu0 0.0
    %545 = vmatpush1.msra.mxu0 0.0
    %546 = vmatprep.subr.mxu0 0.0
    %547 = vmatpush1.msra.mxu0 0.0
    %548 = vmatprep.subr.mxu0 0.0
    %549 = vmatpush1.msra.mxu0 0.0
    %550 = vmatprep.subr.mxu0 0.0
    %551 = vmatpush1.msra.mxu0 0.0
    %552 = vmatprep.subr.mxu0 0.0
    %553 = vmatpush1.msra.mxu0 0.0
    %554 = vmatprep.subr.mxu0 0.0
    %555 = vmatpush1.msra.mxu0 0.0
    %556 = vmatprep.mubr.f32.mxu0 0.0
    %557 = vmatmul.mubr.f32.gmra.mrb[0].mxu0 %v490
    %v558 = vpop.f32.mrb[0].mxu0
    %v559 = vadd.f32 0.0, %v558
    %v560 = vpop.f32.mrb[0].mxu0
    %561 = vdwg.mxu0
    %v562 = vld [vmem:[#allocation2 + $0x18] sm:$0xf]
    %v563 = vld [vmem:[#allocation2 + $0x1c] sm:$0xf]
    %v564 = vld [vmem:[#allocation2 + $0x20] sm:$0xf]
    %v565 = vld [vmem:[#allocation2 + $0x24] sm:$0xf]
    %v566 = vld [vmem:[#allocation5 + $0x10] sm:$0x1]
    %v567 = vpack.c.bf16 %v559, %v483
    %v568 = vlaneseq
    %v569 = vshrl.u32 %v568, 7
    %v570 = vsub.s32 0, %v569
    %v571 = vrot.slane %v566, %v570
    %v576 = vunpack.c.l.b16 %v562
    %v577 = vunpack.c.l.b16 %v563
    %v578 = vunpack.c.l.b16 %v564
    %v579 = vunpack.c.l.b16 %v565
    %v580 = vpack.c.b16 %v577, %v576
    %v581 = vpack.c.b16 %v579, %v578
    %v585 = vsel %vm127, %v567, 0
    %587 = vmatprep.subr.bf16.mxu0 0
    %588 = vmatpush1.bf16.msra.mxu0 %v580
    %589 = vmatprep.subr.bf16.mxu0 0
    %590 = vmatpush1.bf16.msra.mxu0 %v581
    %591 = vmatprep.subr.bf16.mxu0 0
    %592 = vmatpush1.bf16.msra.mxu0 0
    %593 = vmatprep.subr.bf16.mxu0 0
    %594 = vmatpush1.bf16.msra.mxu0 0
    %595 = vmatprep.subr.bf16.mxu0 0
    %596 = vmatpush1.bf16.msra.mxu0 0
    %597 = vmatprep.subr.bf16.mxu0 0
    %598 = vmatpush1.bf16.msra.mxu0 0
    %599 = vmatprep.subr.bf16.mxu0 0
    %600 = vmatpush1.bf16.msra.mxu0 0
    %601 = vmatprep.subr.bf16.mxu0 0
    %602 = vmatpush1.bf16.msra.mxu0 0
    %603 = vmatprep.subr.bf16.mxu0 0
    %604 = vmatpush1.bf16.msra.mxu0 0
    %605 = vmatprep.subr.bf16.mxu0 0
    %606 = vmatpush1.bf16.msra.mxu0 0
    %607 = vmatprep.subr.bf16.mxu0 0
    %608 = vmatpush1.bf16.msra.mxu0 0
    %609 = vmatprep.subr.bf16.mxu0 0
    %610 = vmatpush1.bf16.msra.mxu0 0
    %611 = vmatprep.subr.bf16.mxu0 0
    %612 = vmatpush1.bf16.msra.mxu0 0
    %613 = vmatprep.subr.bf16.mxu0 0
    %614 = vmatpush1.bf16.msra.mxu0 0
    %615 = vmatprep.subr.bf16.mxu0 0
    %616 = vmatpush1.bf16.msra.mxu0 0
    %617 = vmatprep.subr.bf16.mxu0 0
    %618 = vmatpush1.bf16.msra.mxu0 0
    %619 = vmatprep.mubr.bf16.mxu0 0
    %620 = vmatmul.mubr.bf16.gmra.mrb[0].mxu0 %v585
    %v621 = vpop.f32.mrb[0].mxu0
    %v622 = vadd.f32 %v571, %v621
    %v623 = vpop.f32.mrb[0].mxu0
    %v624 = vpop.f32.mrb[0].mxu0
    %v625 = vadd.f32 %v571, %v624
    %v626 = vpop.f32.mrb[0].mxu0
    %627 = vdwg.mxu0
    %v628 = vld [vmem:[#allocation5 + $0x18] sm:$0x1]
    %v629 = vld [vmem:[#allocation5 + $0x20] sm:$0x1]
    %v630 = vsel %vm127, %v622, 0.0
    %631 = vadd.xlane.f32.xlu0 %v630
    %v632 = vpop.xlane.xlu0 %631
    %v633 = vsel %vm127, %v625, 0.0
    %634 = vadd.xlane.f32.xlu0 %v633
    %v635 = vpop.xlane.xlu0 %634
    %v636 = vmul.f32 %v632, %v134
    %v637 = vmul.f32 %v635, %v134
    %v638 = vsub.f32 %v622, %v636
    %v639 = vsub.f32 %v625, %v637
    %v640 = vmul.f32 %v638, %v638
    %v641 = vmul.f32 %v639, %v639
    %v642 = vsel %vm127, %v640, 0.0
    %643 = vadd.xlane.f32.xlu0 %v642
    %v644 = vpop.xlane.xlu0 %643
    %v645 = vsel %vm127, %v641, 0.0
    %646 = vadd.xlane.f32.xlu0 %v645
    %v647 = vpop.xlane.xlu0 %646
    %v648 = vmul.f32 %v644, %v134
    %v649 = vmul.f32 %v647, %v134
    %v650 = vadd.f32 %v648, 1e-05
    %v651 = vadd.f32 %v649, 1e-05
    %v652 = vrsqrt.pop %v650
    %v653 = vrsqrt.pop %v651
    %v654 = vmul.f32 %v638, %v652
    %v655 = vmul.f32 %v639, %v653
    %v656 = vlaneseq
    %v657 = vshrl.u32 %v656, 7
    %v658 = vsub.s32 0, %v657
    %v659 = vrot.slane %v628, %v658
    %v660 = vmul.f32 %v654, %v659
    %v661 = vmul.f32 %v655, %v659
    %v662 = vlaneseq
    %v663 = vshrl.u32 %v662, 7
    %v664 = vsub.s32 0, %v663
    %v665 = vrot.slane %v629, %v664
    %v666 = vadd.f32 %v660, %v665
    %v667 = vadd.f32 %v661, %v665
    %v668 = vadd.f32 %v125, %v666
    %v669 = vadd.f32 %v126, %v667
    %v670 = vsel %vm127, %v668, 0.0
    %671 = vadd.xlane.f32.xlu0 %v670
    %v672 = vpop.xlane.xlu0 %671
    %v673 = vsel %vm127, %v669, 0.0
    %674 = vadd.xlane.f32.xlu0 %v673
    %v675 = vpop.xlane.xlu0 %674
    %v676 = vmul.f32 %v672, %v134
    %v677 = vmul.f32 %v675, %v134
    %v678 = vsub.f32 %v668, %v676
    %v679 = vsub.f32 %v669, %v677
    %v680 = vmul.f32 %v678, %v678
    %v681 = vmul.f32 %v679, %v679
    %v682 = vsel %vm127, %v680, 0.0
    %683 = vadd.xlane.f32.xlu0 %v682
    %v684 = vpop.xlane.xlu0 %683
    %v685 = vsel %vm127, %v681, 0.0
    %686 = vadd.xlane.f32.xlu0 %v685
    %v687 = vpop.xlane.xlu0 %686
    %v688 = vmul.f32 %v684, %v134
    %v689 = vmul.f32 %v687, %v134
    %v690 = vadd.f32 %v688, 1e-05
    %v691 = vadd.f32 %v689, 1e-05
    %v692 = vrsqrt.pop %v690
    %v693 = vrsqrt.pop %v691
    %v694 = vmul.f32 %v678, %v692
    %v695 = vmul.f32 %v679, %v693
    %v696 = vld [vmem:[#allocation2 + $0x28] sm:$0xf]
    %v697 = vld [vmem:[#allocation2 + $0x2c] sm:$0xf]
    %v698 = vld [vmem:[#allocation2 + $0x30] sm:$0xf]
    %v699 = vld [vmem:[#allocation2 + $0x34] sm:$0xf]
    %v700 = vld [vmem:[#allocation5 + $0x28] sm:$0x1]
    %v701 = vpack.c.bf16 %v695, %v694
    %v702 = vlaneseq
    %v703 = vshrl.u32 %v702, 7
    %v704 = vsub.s32 0, %v703
    %v705 = vrot.slane %v700, %v704
    %v710 = vunpack.c.l.b16 %v696
    %v711 = vunpack.c.l.b16 %v697
    %v712 = vunpack.c.l.b16 %v698
    %v713 = vunpack.c.l.b16 %v699
    %v714 = vpack.c.b16 %v711, %v710
    %v715 = vpack.c.b16 %v713, %v712
    %v719 = vsel %vm127, %v701, 0
    %721 = vmatprep.subr.bf16.mxu0 0
    %722 = vmatpush1.bf16.msra.mxu0 %v714
    %723 = vmatprep.subr.bf16.mxu0 0
    %724 = vmatpush1.bf16.msra.mxu0 %v715
    %725 = vmatprep.subr.bf16.mxu0 0
    %726 = vmatpush1.bf16.msra.mxu0 0
    %727 = vmatprep.subr.bf16.mxu0 0
    %728 = vmatpush1.bf16.msra.mxu0 0
    %729 = vmatprep.subr.bf16.mxu0 0
    %730 = vmatpush1.bf16.msra.mxu0 0
    %731 = vmatprep.subr.bf16.mxu0 0
    %732 = vmatpush1.bf16.msra.mxu0 0
    %733 = vmatprep.subr.bf16.mxu0 0
    %734 = vmatpush1.bf16.msra.mxu0 0
    %735 = vmatprep.subr.bf16.mxu0 0
    %736 = vmatpush1.bf16.msra.mxu0 0
    %737 = vmatprep.subr.bf16.mxu0 0
    %738 = vmatpush1.bf16.msra.mxu0 0
    %739 = vmatprep.subr.bf16.mxu0 0
    %740 = vmatpush1.bf16.msra.mxu0 0
    %741 = vmatprep.subr.bf16.mxu0 0
    %742 = vmatpush1.bf16.msra.mxu0 0
    %743 = vmatprep.subr.bf16.mxu0 0
    %744 = vmatpush1.bf16.msra.mxu0 0
    %745 = vmatprep.subr.bf16.mxu0 0
    %746 = vmatpush1.bf16.msra.mxu0 0
    %747 = vmatprep.subr.bf16.mxu0 0
    %748 = vmatpush1.bf16.msra.mxu0 0
    %749 = vmatprep.subr.bf16.mxu0 0
    %750 = vmatpush1.bf16.msra.mxu0 0
    %751 = vmatprep.subr.bf16.mxu0 0
    %752 = vmatpush1.bf16.msra.mxu0 0
    %753 = vmatprep.mubr.bf16.mxu0 0
    %754 = vmatmul.mubr.bf16.gmra.mrb[0].mxu0 %v719
    %v755 = vpop.f32.mrb[0].mxu0
    %v756 = vadd.f32 %v705, %v755
    %v757 = vpop.f32.mrb[0].mxu0
    %v758 = vpop.f32.mrb[0].mxu0
    %v759 = vadd.f32 %v705, %v758
    %v760 = vpop.f32.mrb[0].mxu0
    %761 = vdwg.mxu0
    %v762 = vxor.u32 %v756, 2147483648
    %v763 = vxor.u32 %v759, 2147483648
    %v764 = vmul.f32 %v762, 1.442695
    %v765 = vpow.pop %v764
    %v766 = vmul.f32 %v763, 1.442695
    %v767 = vpow.pop %v766
    %v768 = vadd.f32 %v765, 1.0
    %v769 = vadd.f32 %v767, 1.0
    %v770 = vrcp.pop %v768
    %v771 = vmul.f32 1.0, %v770
    %v772 = vrcp.pop %v769
    %v773 = vmul.f32 1.0, %v772
    %v774 = vmul.f32 %v756, %v771
    %v775 = vmul.f32 %v759, %v773
    %v776 = vld [vmem:[#allocation2 + $0x38] sm:$0xf]
    %v777 = vld [vmem:[#allocation2 + $0x3c] sm:$0xf]
    %v778 = vld [vmem:[#allocation2 + $0x40] sm:$0xf]
    %v779 = vld [vmem:[#allocation2 + $0x44] sm:$0xf]
    %v780 = vld [vmem:[#allocation5 + $0x30] sm:$0x1]
    %v781 = vpack.c.bf16 %v775, %v774
    %v782 = vlaneseq
    %v783 = vshrl.u32 %v782, 7
    %v784 = vsub.s32 0, %v783
    %v785 = vrot.slane %v780, %v784
    %v790 = vunpack.c.l.b16 %v776
    %v791 = vunpack.c.l.b16 %v777
    %v792 = vunpack.c.l.b16 %v778
    %v793 = vunpack.c.l.b16 %v779
    %v794 = vpack.c.b16 %v791, %v790
    %v795 = vpack.c.b16 %v793, %v792
    %v799 = vsel %vm127, %v781, 0
    %801 = vmatprep.subr.bf16.mxu0 0
    %802 = vmatpush1.bf16.msra.mxu0 %v794
    %803 = vmatprep.subr.bf16.mxu0 0
    %804 = vmatpush1.bf16.msra.mxu0 %v795
    %805 = vmatprep.subr.bf16.mxu0 0
    %806 = vmatpush1.bf16.msra.mxu0 0
    %807 = vmatprep.subr.bf16.mxu0 0
    %808 = vmatpush1.bf16.msra.mxu0 0
    %809 = vmatprep.subr.bf16.mxu0 0
    %810 = vmatpush1.bf16.msra.mxu0 0
    %811 = vmatprep.subr.bf16.mxu0 0
    %812 = vmatpush1.bf16.msra.mxu0 0
    %813 = vmatprep.subr.bf16.mxu0 0
    %814 = vmatpush1.bf16.msra.mxu0 0
    %815 = vmatprep.subr.bf16.mxu0 0
    %816 = vmatpush1.bf16.msra.mxu0 0
    %817 = vmatprep.subr.bf16.mxu0 0
    %818 = vmatpush1.bf16.msra.mxu0 0
    %819 = vmatprep.subr.bf16.mxu0 0
    %820 = vmatpush1.bf16.msra.mxu0 0
    %821 = vmatprep.subr.bf16.mxu0 0
    %822 = vmatpush1.bf16.msra.mxu0 0
    %823 = vmatprep.subr.bf16.mxu0 0
    %824 = vmatpush1.bf16.msra.mxu0 0
    %825 = vmatprep.subr.bf16.mxu0 0
    %826 = vmatpush1.bf16.msra.mxu0 0
    %827 = vmatprep.subr.bf16.mxu0 0
    %828 = vmatpush1.bf16.msra.mxu0 0
    %829 = vmatprep.subr.bf16.mxu0 0
    %830 = vmatpush1.bf16.msra.mxu0 0
    %831 = vmatprep.subr.bf16.mxu0 0
    %832 = vmatpush1.bf16.msra.mxu0 0
    %833 = vmatprep.mubr.bf16.mxu0 0
    %834 = vmatmul.mubr.bf16.gmra.mrb[0].mxu0 %v799
    %v835 = vpop.f32.mrb[0].mxu0
    %v836 = vadd.f32 %v785, %v835
    %v837 = vpop.f32.mrb[0].mxu0
    %v838 = vpop.f32.mrb[0].mxu0
    %v839 = vadd.f32 %v785, %v838
    %v840 = vpop.f32.mrb[0].mxu0
    %841 = vdwg.mxu0
    %v842 = vadd.f32 %v668, %v836
    %v843 = vadd.f32 %v669, %v839
    %v844 = vmul.f32 %v842, %v118
    %v845 = vmul.f32 %v843, %v123
    %v846 = vsel %vm127, %v844, 0.0
    %847 = vadd.xlane.f32.xlu0 %v846
    %v848 = vpop.xlane.xlu0 %847
    %v849 = vsel %vm127, %v845, 0.0
    %850 = vadd.xlane.f32.xlu0 %v849
    %v851 = vpop.xlane.xlu0 %850
    %v852 = vmul.f32 %v848, %v134
    %v853 = vmul.f32 %v851, %v134
    %v854 = vsub.f32 %v844, %v852
    %v855 = vsub.f32 %v845, %v853
    %v856 = vmul.f32 %v854, %v854
    %v857 = vmul.f32 %v855, %v855
    %v858 = vsel %vm127, %v856, 0.0
    %859 = vadd.xlane.f32.xlu0 %v858
    %v860 = vpop.xlane.xlu0 %859
    %v861 = vsel %vm127, %v857, 0.0
    %862 = vadd.xlane.f32.xlu0 %v861
    %v863 = vpop.xlane.xlu0 %862
    %v864 = vmul.f32 %v860, %v134
    %v865 = vmul.f32 %v863, %v134
    %v866 = vadd.f32 %v864, 1e-05
    %v867 = vadd.f32 %v865, 1e-05
    %v868 = vrsqrt.pop %v866
    %v869 = vrsqrt.pop %v867
    %v870 = vmul.f32 %v854, %v868
    %v871 = vmul.f32 %v855, %v869
    %v872 = vld [vmem:[#allocation2 + $0x48] sm:$0xf]
    %v873 = vld [vmem:[#allocation2 + $0x4c] sm:$0xf]
    %v874 = vld [vmem:[#allocation2 + $0x50] sm:$0xf]
    %v875 = vld [vmem:[#allocation2 + $0x54] sm:$0xf]
    %v876 = vld [vmem:[#allocation5 + $0x38] sm:$0x1]
    %v877 = vpack.c.bf16 %v871, %v870
    %v878 = vlaneseq
    %v879 = vshrl.u32 %v878, 7
    %v880 = vsub.s32 0, %v879
    %v881 = vrot.slane %v876, %v880
    %v886 = vunpack.c.l.b16 %v872
    %v887 = vunpack.c.l.b16 %v873
    %v888 = vunpack.c.l.b16 %v874
    %v889 = vunpack.c.l.b16 %v875
    %v890 = vpack.c.b16 %v887, %v886
    %v891 = vpack.c.b16 %v889, %v888
    %v895 = vsel %vm127, %v877, 0
    %897 = vmatprep.subr.bf16.mxu0 0
    %898 = vmatpush1.bf16.msra.mxu0 %v890
    %899 = vmatprep.subr.bf16.mxu0 0
    %900 = vmatpush1.bf16.msra.mxu0 %v891
    %901 = vmatprep.subr.bf16.mxu0 0
    %902 = vmatpush1.bf16.msra.mxu0 0
    %903 = vmatprep.subr.bf16.mxu0 0
    %904 = vmatpush1.bf16.msra.mxu0 0
    %905 = vmatprep.subr.bf16.mxu0 0
    %906 = vmatpush1.bf16.msra.mxu0 0
    %907 = vmatprep.subr.bf16.mxu0 0
    %908 = vmatpush1.bf16.msra.mxu0 0
    %909 = vmatprep.subr.bf16.mxu0 0
    %910 = vmatpush1.bf16.msra.mxu0 0
    %911 = vmatprep.subr.bf16.mxu0 0
    %912 = vmatpush1.bf16.msra.mxu0 0
    %913 = vmatprep.subr.bf16.mxu0 0
    %914 = vmatpush1.bf16.msra.mxu0 0
    %915 = vmatprep.subr.bf16.mxu0 0
    %916 = vmatpush1.bf16.msra.mxu0 0
    %917 = vmatprep.subr.bf16.mxu0 0
    %918 = vmatpush1.bf16.msra.mxu0 0
    %919 = vmatprep.subr.bf16.mxu0 0
    %920 = vmatpush1.bf16.msra.mxu0 0
    %921 = vmatprep.subr.bf16.mxu0 0
    %922 = vmatpush1.bf16.msra.mxu0 0
    %923 = vmatprep.subr.bf16.mxu0 0
    %924 = vmatpush1.bf16.msra.mxu0 0
    %925 = vmatprep.subr.bf16.mxu0 0
    %926 = vmatpush1.bf16.msra.mxu0 0
    %927 = vmatprep.subr.bf16.mxu0 0
    %928 = vmatpush1.bf16.msra.mxu0 0
    %929 = vmatprep.mubr.bf16.mxu0 0
    %930 = vmatmul.mubr.bf16.gmra.mrb[0].mxu0 %v895
    %v931 = vpop.f32.mrb[0].mxu0
    %v932 = vadd.f32 %v881, %v931
    %v933 = vpop.f32.mrb[0].mxu0
    %v934 = vpop.f32.mrb[0].mxu0
    %v935 = vadd.f32 %v881, %v934
    %v936 = vpop.f32.mrb[0].mxu0
    %937 = vdwg.mxu0
    %939 = vrot.lane.b32.xlu0 %v932, 96
    %v940 = vpop.permute.xlu0 %939
    %v941 = vsel %vm127, %v932, 0
    %v943 = vsel %vm127, %v940, 0
    %945 = vmatprep.subr.mxu0 0.0
    %946 = vmatpush1.xpose.msra.mxu0 %v943
    %947 = vmatprep.subr.mxu0 0.0
    %948 = vmatpush1.xpose.msra.mxu0 0.0
    %949 = vmatprep.subr.mxu0 0.0
    %950 = vmatpush1.xpose.msra.mxu0 0.0
    %951 = vmatprep.subr.mxu0 0.0
    %952 = vmatpush1.xpose.msra.mxu0 0.0
    %953 = vmatprep.subr.mxu0 0.0
    %954 = vmatpush1.xpose.msra.mxu0 0.0
    %955 = vmatprep.subr.mxu0 0.0
    %956 = vmatpush1.xpose.msra.mxu0 0.0
    %957 = vmatprep.subr.mxu0 0.0
    %958 = vmatpush1.xpose.msra.mxu0 0.0
    %959 = vmatprep.subr.mxu0 0.0
    %960 = vmatpush1.xpose.msra.mxu0 0.0
    %961 = vmatprep.subr.mxu0 0.0
    %962 = vmatpush1.xpose.msra.mxu0 0.0
    %963 = vmatprep.subr.mxu0 0.0
    %964 = vmatpush1.xpose.msra.mxu0 0.0
    %965 = vmatprep.subr.mxu0 0.0
    %966 = vmatpush1.xpose.msra.mxu0 0.0
    %967 = vmatprep.subr.mxu0 0.0
    %968 = vmatpush1.xpose.msra.mxu0 0.0
    %969 = vmatprep.subr.mxu0 0.0
    %970 = vmatpush1.xpose.msra.mxu0 0.0
    %971 = vmatprep.subr.mxu0 0.0
    %972 = vmatpush1.xpose.msra.mxu0 0.0
    %973 = vmatprep.subr.mxu0 0.0
    %974 = vmatpush1.xpose.msra.mxu0 0.0
    %975 = vmatprep.subr.mxu0 0.0
    %976 = vmatpush1.xpose.msra.mxu0 0.0
    %977 = vmatprep.subr.mxu0 0.0
    %978 = vmatpush1.xpose.msra.mxu0 0.0
    %979 = vmatprep.subr.mxu0 0.0
    %980 = vmatpush1.xpose.msra.mxu0 0.0
    %981 = vmatprep.subr.mxu0 0.0
    %982 = vmatpush1.xpose.msra.mxu0 0.0
    %983 = vmatprep.subr.mxu0 0.0
    %984 = vmatpush1.xpose.msra.mxu0 0.0
    %985 = vmatprep.subr.mxu0 0.0
    %986 = vmatpush1.xpose.msra.mxu0 0.0
    %987 = vmatprep.subr.mxu0 0.0
    %988 = vmatpush1.xpose.msra.mxu0 0.0
    %989 = vmatprep.subr.mxu0 0.0
    %990 = vmatpush1.xpose.msra.mxu0 0.0
    %991 = vmatprep.subr.mxu0 0.0
    %992 = vmatpush1.xpose.msra.mxu0 0.0
    %993 = vmatprep.subr.mxu0 0.0
    %994 = vmatpush1.xpose.msra.mxu0 0.0
    %995 = vmatprep.subr.mxu0 0.0
    %996 = vmatpush1.xpose.msra.mxu0 0.0
    %997 = vmatprep.subr.mxu0 0.0
    %998 = vmatpush1.xpose.msra.mxu0 0.0
    %999 = vmatprep.subr.mxu0 0.0
    %1000 = vmatpush1.xpose.msra.mxu0 0.0
    %1001 = vmatprep.subr.mxu0 0.0
    %1002 = vmatpush1.xpose.msra.mxu0 0.0
    %1003 = vmatprep.subr.mxu0 0.0
    %1004 = vmatpush1.xpose.msra.mxu0 0.0
    %1005 = vmatprep.subr.mxu0 0.0
    %1006 = vmatpush1.xpose.msra.mxu0 0.0
    %1007 = vmatprep.subr.mxu0 0.0
    %1008 = vmatpush1.xpose.msra.mxu0 0.0
    %1009 = vmatprep.mubr.f32.mxu0 0.0
    %1010 = vmatmul.mubr.f32.gmra.mrb[0].mxu0 %v941
    %v1011 = vpop.f32.mrb[0].mxu0
    %v1012 = vadd.f32 %v226, %v1011
    %v1013 = vpop.f32.mrb[0].mxu0
    %1014 = vdwg.mxu0
    %1016 = vrot.lane.b32.xlu0 %v935, 96
    %v1017 = vpop.permute.xlu0 %1016
    %v1018 = vsel %vm127, %v935, 0
    %v1020 = vsel %vm127, %v1017, 0
    %1022 = vmatprep.subr.mxu0 0.0
    %1023 = vmatpush1.xpose.msra.mxu0 %v1020
    %1024 = vmatprep.subr.mxu0 0.0
    %1025 = vmatpush1.xpose.msra.mxu0 0.0
    %1026 = vmatprep.subr.mxu0 0.0
    %1027 = vmatpush1.xpose.msra.mxu0 0.0
    %1028 = vmatprep.subr.mxu0 0.0
    %1029 = vmatpush1.xpose.msra.mxu0 0.0
    %1030 = vmatprep.subr.mxu0 0.0
    %1031 = vmatpush1.xpose.msra.mxu0 0.0
    %1032 = vmatprep.subr.mxu0 0.0
    %1033 = vmatpush1.xpose.msra.mxu0 0.0
    %1034 = vmatprep.subr.mxu0 0.0
    %1035 = vmatpush1.xpose.msra.mxu0 0.0
    %1036 = vmatprep.subr.mxu0 0.0
    %1037 = vmatpush1.xpose.msra.mxu0 0.0
    %1038 = vmatprep.subr.mxu0 0.0
    %1039 = vmatpush1.xpose.msra.mxu0 0.0
    %1040 = vmatprep.subr.mxu0 0.0
    %1041 = vmatpush1.xpose.msra.mxu0 0.0
    %1042 = vmatprep.subr.mxu0 0.0
    %1043 = vmatpush1.xpose.msra.mxu0 0.0
    %1044 = vmatprep.subr.mxu0 0.0
    %1045 = vmatpush1.xpose.msra.mxu0 0.0
    %1046 = vmatprep.subr.mxu0 0.0
    %1047 = vmatpush1.xpose.msra.mxu0 0.0
    %1048 = vmatprep.subr.mxu0 0.0
    %1049 = vmatpush1.xpose.msra.mxu0 0.0
    %1050 = vmatprep.subr.mxu0 0.0
    %1051 = vmatpush1.xpose.msra.mxu0 0.0
    %1052 = vmatprep.subr.mxu0 0.0
    %1053 = vmatpush1.xpose.msra.mxu0 0.0
    %1054 = vmatprep.subr.mxu0 0.0
    %1055 = vmatpush1.xpose.msra.mxu0 0.0
    %1056 = vmatprep.subr.mxu0 0.0
    %1057 = vmatpush1.xpose.msra.mxu0 0.0
    %1058 = vmatprep.subr.mxu0 0.0
    %1059 = vmatpush1.xpose.msra.mxu0 0.0
    %1060 = vmatprep.subr.mxu0 0.0
    %1061 = vmatpush1.xpose.msra.mxu0 0.0
    %1062 = vmatprep.subr.mxu0 0.0
    %1063 = vmatpush1.xpose.msra.mxu0 0.0
    %1064 = vmatprep.subr.mxu0 0.0
    %1065 = vmatpush1.xpose.msra.mxu0 0.0
    %1066 = vmatprep.subr.mxu0 0.0
    %1067 = vmatpush1.xpose.msra.mxu0 0.0
    %1068 = vmatprep.subr.mxu0 0.0
    %1069 = vmatpush1.xpose.msra.mxu0 0.0
    %1070 = vmatprep.subr.mxu0 0.0
    %1071 = vmatpush1.xpose.msra.mxu0 0.0
    %1072 = vmatprep.subr.mxu0 0.0
    %1073 = vmatpush1.xpose.msra.mxu0 0.0
    %1074 = vmatprep.subr.mxu0 0.0
    %1075 = vmatpush1.xpose.msra.mxu0 0.0
    %1076 = vmatprep.subr.mxu0 0.0
    %1077 = vmatpush1.xpose.msra.mxu0 0.0
    %1078 = vmatprep.subr.mxu0 0.0
    %1079 = vmatpush1.xpose.msra.mxu0 0.0
    %1080 = vmatprep.subr.mxu0 0.0
    %1081 = vmatpush1.xpose.msra.mxu0 0.0
    %1082 = vmatprep.subr.mxu0 0.0
    %1083 = vmatpush1.xpose.msra.mxu0 0.0
    %1084 = vmatprep.subr.mxu0 0.0
    %1085 = vmatpush1.xpose.msra.mxu0 0.0
    %1086 = vmatprep.mubr.f32.mxu0 0.0
    %1087 = vmatmul.mubr.f32.gmra.mrb[0].mxu0 %v1018
    %v1088 = vpop.f32.mrb[0].mxu0
    %v1089 = vadd.f32 %v230, %v1088
    %v1090 = vpop.f32.mrb[0].mxu0
    %1091 = vdwg.mxu0
    %v1092 = vsel %vm387, %v1012, -inf
    %1093 = vmax.xlane.f32.xlu0 %v1092
    %v1094 = vpop.xlane.xlu0 %1093
    %v1095 = vsel %vm387, %v1089, -inf
    %1096 = vmax.xlane.f32.xlu0 %v1095
    %v1097 = vpop.xlane.xlu0 %1096
    %v1098 = vsub.f32 %v1012, %v1094
    %v1099 = vsub.f32 %v1089, %v1097
    %v1100 = vmul.f32 %v1098, 1.442695
    %v1101 = vpow.pop %v1100
    %v1102 = vmul.f32 %v1099, 1.442695
    %v1103 = vpow.pop %v1102
    %v1104 = vsel %vm387, %v1101, 0.0
    %1105 = vadd.xlane.f32.xlu0 %v1104
    %v1106 = vpop.xlane.xlu0 %1105
    %v1107 = vsel %vm387, %v1103, 0.0
    %1108 = vadd.xlane.f32.xlu0 %v1107
    %v1109 = vpop.xlane.xlu0 %1108
    %v1110 = vrcp.pop %v1106
    %v1111 = vrcp.pop %v1109
    %v1112 = vmul.f32 %v1101, %v1110
    %v1113 = vmul.f32 %v1103, %v1111
    %1114 = vrot.lane.b32.xlu0 %v932, 64
    %v1115 = vpop.permute.xlu0 %1114
    %v1118 = vsel %vm387, %v1112, 0
    %1120 = vmatprep.subr.mxu0 0.0
    %1121 = vmatpush1.msra.mxu0 %v1115
    %1122 = vmatprep.subr.mxu0 0.0
    %1123 = vmatpush1.msra.mxu0 0.0
    %1124 = vmatprep.subr.mxu0 0.0
    %1125 = vmatpush1.msra.mxu0 0.0
    %1126 = vmatprep.subr.mxu0 0.0
    %1127 = vmatpush1.msra.mxu0 0.0
    %1128 = vmatprep.subr.mxu0 0.0
    %1129 = vmatpush1.msra.mxu0 0.0
    %1130 = vmatprep.subr.mxu0 0.0
    %1131 = vmatpush1.msra.mxu0 0.0
    %1132 = vmatprep.subr.mxu0 0.0
    %1133 = vmatpush1.msra.mxu0 0.0
    %1134 = vmatprep.subr.mxu0 0.0
    %1135 = vmatpush1.msra.mxu0 0.0
    %1136 = vmatprep.subr.mxu0 0.0
    %1137 = vmatpush1.msra.mxu0 0.0
    %1138 = vmatprep.subr.mxu0 0.0
    %1139 = vmatpush1.msra.mxu0 0.0
    %1140 = vmatprep.subr.mxu0 0.0
    %1141 = vmatpush1.msra.mxu0 0.0
    %1142 = vmatprep.subr.mxu0 0.0
    %1143 = vmatpush1.msra.mxu0 0.0
    %1144 = vmatprep.subr.mxu0 0.0
    %1145 = vmatpush1.msra.mxu0 0.0
    %1146 = vmatprep.subr.mxu0 0.0
    %1147 = vmatpush1.msra.mxu0 0.0
    %1148 = vmatprep.subr.mxu0 0.0
    %1149 = vmatpush1.msra.mxu0 0.0
    %1150 = vmatprep.subr.mxu0 0.0
    %1151 = vmatpush1.msra.mxu0 0.0
    %1152 = vmatprep.subr.mxu0 0.0
    %1153 = vmatpush1.msra.mxu0 0.0
    %1154 = vmatprep.subr.mxu0 0.0
    %1155 = vmatpush1.msra.mxu0 0.0
    %1156 = vmatprep.subr.mxu0 0.0
    %1157 = vmatpush1.msra.mxu0 0.0
    %1158 = vmatprep.subr.mxu0 0.0
    %1159 = vmatpush1.msra.mxu0 0.0
    %1160 = vmatprep.subr.mxu0 0.0
    %1161 = vmatpush1.msra.mxu0 0.0
    %1162 = vmatprep.subr.mxu0 0.0
    %1163 = vmatpush1.msra.mxu0 0.0
    %1164 = vmatprep.subr.mxu0 0.0
    %1165 = vmatpush1.msra.mxu0 0.0
    %1166 = vmatprep.subr.mxu0 0.0
    %1167 = vmatpush1.msra.mxu0 0.0
    %1168 = vmatprep.subr.mxu0 0.0
    %1169 = vmatpush1.msra.mxu0 0.0
    %1170 = vmatprep.subr.mxu0 0.0
    %1171 = vmatpush1.msra.mxu0 0.0
    %1172 = vmatprep.subr.mxu0 0.0
    %1173 = vmatpush1.msra.mxu0 0.0
    %1174 = vmatprep.subr.mxu0 0.0
    %1175 = vmatpush1.msra.mxu0 0.0
    %1176 = vmatprep.subr.mxu0 0.0
    %1177 = vmatpush1.msra.mxu0 0.0
    %1178 = vmatprep.subr.mxu0 0.0
    %1179 = vmatpush1.msra.mxu0 0.0
    %1180 = vmatprep.subr.mxu0 0.0
    %1181 = vmatpush1.msra.mxu0 0.0
    %1182 = vmatprep.subr.mxu0 0.0
    %1183 = vmatpush1.msra.mxu0 0.0
    %1184 = vmatprep.mubr.f32.mxu0 0.0
    %1185 = vmatmul.mubr.f32.gmra.mrb[0].mxu0 %v1118
    %v1186 = vpop.f32.mrb[0].mxu0
    %v1187 = vadd.f32 0.0, %v1186
    %v1188 = vpop.f32.mrb[0].mxu0
    %1189 = vdwg.mxu0
    %1190 = vrot.lane.b32.xlu0 %v935, 64
    %v1191 = vpop.permute.xlu0 %1190
    %v1194 = vsel %vm387, %v1113, 0
    %1196 = vmatprep.subr.mxu0 0.0
    %1197 = vmatpush1.msra.mxu0 %v1191
    %1198 = vmatprep.subr.mxu0 0.0
    %1199 = vmatpush1.msra.mxu0 0.0
    %1200 = vmatprep.subr.mxu0 0.0
    %1201 = vmatpush1.msra.mxu0 0.0
    %1202 = vmatprep.subr.mxu0 0.0
    %1203 = vmatpush1.msra.mxu0 0.0
    %1204 = vmatprep.subr.mxu0 0.0
    %1205 = vmatpush1.msra.mxu0 0.0
    %1206 = vmatprep.subr.mxu0 0.0
    %1207 = vmatpush1.msra.mxu0 0.0
    %1208 = vmatprep.subr.mxu0 0.0
    %1209 = vmatpush1.msra.mxu0 0.0
    %1210 = vmatprep.subr.mxu0 0.0
    %1211 = vmatpush1.msra.mxu0 0.0
    %1212 = vmatprep.subr.mxu0 0.0
    %1213 = vmatpush1.msra.mxu0 0.0
    %1214 = vmatprep.subr.mxu0 0.0
    %1215 = vmatpush1.msra.mxu0 0.0
    %1216 = vmatprep.subr.mxu0 0.0
    %1217 = vmatpush1.msra.mxu0 0.0
    %1218 = vmatprep.subr.mxu0 0.0
    %1219 = vmatpush1.msra.mxu0 0.0
    %1220 = vmatprep.subr.mxu0 0.0
    %1221 = vmatpush1.msra.mxu0 0.0
    %1222 = vmatprep.subr.mxu0 0.0
    %1223 = vmatpush1.msra.mxu0 0.0
    %1224 = vmatprep.subr.mxu0 0.0
    %1225 = vmatpush1.msra.mxu0 0.0
    %1226 = vmatprep.subr.mxu0 0.0
    %1227 = vmatpush1.msra.mxu0 0.0
    %1228 = vmatprep.subr.mxu0 0.0
    %1229 = vmatpush1.msra.mxu0 0.0
    %1230 = vmatprep.subr.mxu0 0.0
    %1231 = vmatpush1.msra.mxu0 0.0
    %1232 = vmatprep.subr.mxu0 0.0
    %1233 = vmatpush1.msra.mxu0 0.0
    %1234 = vmatprep.subr.mxu0 0.0
    %1235 = vmatpush1.msra.mxu0 0.0
    %1236 = vmatprep.subr.mxu0 0.0
    %1237 = vmatpush1.msra.mxu0 0.0
    %1238 = vmatprep.subr.mxu0 0.0
    %1239 = vmatpush1.msra.mxu0 0.0
    %1240 = vmatprep.subr.mxu0 0.0
    %1241 = vmatpush1.msra.mxu0 0.0
    %1242 = vmatprep.subr.mxu0 0.0
    %1243 = vmatpush1.msra.mxu0 0.0
    %1244 = vmatprep.subr.mxu0 0.0
    %1245 = vmatpush1.msra.mxu0 0.0
    %1246 = vmatprep.subr.mxu0 0.0
    %1247 = vmatpush1.msra.mxu0 0.0
    %1248 = vmatprep.subr.mxu0 0.0
    %1249 = vmatpush1.msra.mxu0 0.0
    %1250 = vmatprep.subr.mxu0 0.0
    %1251 = vmatpush1.msra.mxu0 0.0
    %1252 = vmatprep.subr.mxu0 0.0
    %1253 = vmatpush1.msra.mxu0 0.0
    %1254 = vmatprep.subr.mxu0 0.0
    %1255 = vmatpush1.msra.mxu0 0.0
    %1256 = vmatprep.subr.mxu0 0.0
    %1257 = vmatpush1.msra.mxu0 0.0
    %1258 = vmatprep.subr.mxu0 0.0
    %1259 = vmatpush1.msra.mxu0 0.0
    %1260 = vmatprep.mubr.f32.mxu0 0.0
    %1261 = vmatmul.mubr.f32.gmra.mrb[0].mxu0 %v1194
    %v1262 = vpop.f32.mrb[0].mxu0
    %v1263 = vadd.f32 0.0, %v1262
    %v1264 = vpop.f32.mrb[0].mxu0
    %1265 = vdwg.mxu0
    %v1266 = vld [vmem:[#allocation2 + $0x58] sm:$0xf]
    %v1267 = vld [vmem:[#allocation2 + $0x5c] sm:$0xf]
    %v1268 = vld [vmem:[#allocation2 + $0x60] sm:$0xf]
    %v1269 = vld [vmem:[#allocation2 + $0x64] sm:$0xf]
    %v1270 = vld [vmem:[#allocation5 + $0x40] sm:$0x1]
    %v1271 = vpack.c.bf16 %v1263, %v1187
    %v1272 = vlaneseq
    %v1273 = vshrl.u32 %v1272, 7
    %v1274 = vsub.s32 0, %v1273
    %v1275 = vrot.slane %v1270, %v1274
    %v1280 = vunpack.c.l.b16 %v1266
    %v1281 = vunpack.c.l.b16 %v1267
    %v1282 = vunpack.c.l.b16 %v1268
    %v1283 = vunpack.c.l.b16 %v1269
    %v1284 = vpack.c.b16 %v1281, %v1280
    %v1285 = vpack.c.b16 %v1283, %v1282
    %v1289 = vsel %vm127, %v1271, 0
    %1291 = vmatprep.subr.bf16.mxu0 0
    %1292 = vmatpush1.bf16.msra.mxu0 %v1284
    %1293 = vmatprep.subr.bf16.mxu0 0
    %1294 = vmatpush1.bf16.msra.mxu0 %v1285
    %1295 = vmatprep.subr.bf16.mxu0 0
    %1296 = vmatpush1.bf16.msra.mxu0 0
    %1297 = vmatprep.subr.bf16.mxu0 0
    %1298 = vmatpush1.bf16.msra.mxu0 0
    %1299 = vmatprep.subr.bf16.mxu0 0
    %1300 = vmatpush1.bf16.msra.mxu0 0
    %1301 = vmatprep.subr.bf16.mxu0 0
    %1302 = vmatpush1.bf16.msra.mxu0 0
    %1303 = vmatprep.subr.bf16.mxu0 0
    %1304 = vmatpush1.bf16.msra.mxu0 0
    %1305 = vmatprep.subr.bf16.mxu0 0
    %1306 = vmatpush1.bf16.msra.mxu0 0
    %1307 = vmatprep.subr.bf16.mxu0 0
    %1308 = vmatpush1.bf16.msra.mxu0 0
    %1309 = vmatprep.subr.bf16.mxu0 0
    %1310 = vmatpush1.bf16.msra.mxu0 0
    %1311 = vmatprep.subr.bf16.mxu0 0
    %1312 = vmatpush1.bf16.msra.mxu0 0
    %1313 = vmatprep.subr.bf16.mxu0 0
    %1314 = vmatpush1.bf16.msra.mxu0 0
    %1315 = vmatprep.subr.bf16.mxu0 0
    %1316 = vmatpush1.bf16.msra.mxu0 0
    %1317 = vmatprep.subr.bf16.mxu0 0
    %1318 = vmatpush1.bf16.msra.mxu0 0
    %1319 = vmatprep.subr.bf16.mxu0 0
    %1320 = vmatpush1.bf16.msra.mxu0 0
    %1321 = vmatprep.subr.bf16.mxu0 0
    %1322 = vmatpush1.bf16.msra.mxu0 0
    %1323 = vmatprep.mubr.bf16.mxu0 0
    %1324 = vmatmul.mubr.bf16.gmra.mrb[0].mxu0 %v1289
    %v1325 = vpop.f32.mrb[0].mxu0
    %v1326 = vadd.f32 %v1275, %v1325
    %v1327 = vpop.f32.mrb[0].mxu0
    %v1328 = vpop.f32.mrb[0].mxu0
    %v1329 = vadd.f32 %v1275, %v1328
    %v1330 = vpop.f32.mrb[0].mxu0
    %1331 = vdwg.mxu0
    %v1332 = vld [vmem:[#allocation5 + $0x48] sm:$0x1]
    %v1333 = vld [vmem:[#allocation5 + $0x50] sm:$0x1]
    %v1334 = vsel %vm127, %v1326, 0.0
    %1335 = vadd.xlane.f32.xlu0 %v1334
    %v1336 = vpop.xlane.xlu0 %1335
    %v1337 = vsel %vm127, %v1329, 0.0
    %1338 = vadd.xlane.f32.xlu0 %v1337
    %v1339 = vpop.xlane.xlu0 %1338
    %v1340 = vmul.f32 %v1336, %v134
    %v1341 = vmul.f32 %v1339, %v134
    %v1342 = vsub.f32 %v1326, %v1340
    %v1343 = vsub.f32 %v1329, %v1341
    %v1344 = vmul.f32 %v1342, %v1342
    %v1345 = vmul.f32 %v1343, %v1343
    %v1346 = vsel %vm127, %v1344, 0.0
    %1347 = vadd.xlane.f32.xlu0 %v1346
    %v1348 = vpop.xlane.xlu0 %1347
    %v1349 = vsel %vm127, %v1345, 0.0
    %1350 = vadd.xlane.f32.xlu0 %v1349
    %v1351 = vpop.xlane.xlu0 %1350
    %v1352 = vmul.f32 %v1348, %v134
    %v1353 = vmul.f32 %v1351, %v134
    %v1354 = vadd.f32 %v1352, 1e-05
    %v1355 = vadd.f32 %v1353, 1e-05
    %v1356 = vrsqrt.pop %v1354
    %v1357 = vrsqrt.pop %v1355
    %v1358 = vmul.f32 %v1342, %v1356
    %v1359 = vmul.f32 %v1343, %v1357
    %v1360 = vlaneseq
    %v1361 = vshrl.u32 %v1360, 7
    %v1362 = vsub.s32 0, %v1361
    %v1363 = vrot.slane %v1332, %v1362
    %v1364 = vmul.f32 %v1358, %v1363
    %v1365 = vmul.f32 %v1359, %v1363
    %v1366 = vlaneseq
    %v1367 = vshrl.u32 %v1366, 7
    %v1368 = vsub.s32 0, %v1367
    %v1369 = vrot.slane %v1333, %v1368
    %v1370 = vadd.f32 %v1364, %v1369
    %v1371 = vadd.f32 %v1365, %v1369
    %v1372 = vadd.f32 %v844, %v1370
    %v1373 = vadd.f32 %v845, %v1371
    %v1374 = vsel %vm127, %v1372, 0.0
    %1375 = vadd.xlane.f32.xlu0 %v1374
    %v1376 = vpop.xlane.xlu0 %1375
    %v1377 = vsel %vm127, %v1373, 0.0
    %1378 = vadd.xlane.f32.xlu0 %v1377
    %v1379 = vpop.xlane.xlu0 %1378
    %v1380 = vmul.f32 %v1376, %v134
    %v1381 = vmul.f32 %v1379, %v134
    %v1382 = vsub.f32 %v1372, %v1380
    %v1383 = vsub.f32 %v1373, %v1381
    %v1384 = vmul.f32 %v1382, %v1382
    %v1385 = vmul.f32 %v1383, %v1383
    %v1386 = vsel %vm127, %v1384, 0.0
    %1387 = vadd.xlane.f32.xlu0 %v1386
    %v1388 = vpop.xlane.xlu0 %1387
    %v1389 = vsel %vm127, %v1385, 0.0
    %1390 = vadd.xlane.f32.xlu0 %v1389
    %v1391 = vpop.xlane.xlu0 %1390
    %v1392 = vmul.f32 %v1388, %v134
    %v1393 = vmul.f32 %v1391, %v134
    %v1394 = vadd.f32 %v1392, 1e-05
    %v1395 = vadd.f32 %v1393, 1e-05
    %v1396 = vrsqrt.pop %v1394
    %v1397 = vrsqrt.pop %v1395
    %v1398 = vmul.f32 %v1382, %v1396
    %v1399 = vmul.f32 %v1383, %v1397
    %v1400 = vld [vmem:[#allocation2 + $0x68] sm:$0xf]
    %v1401 = vld [vmem:[#allocation2 + $0x6c] sm:$0xf]
    %v1402 = vld [vmem:[#allocation2 + $0x70] sm:$0xf]
    %v1403 = vld [vmem:[#allocation2 + $0x74] sm:$0xf]
    %v1404 = vld [vmem:[#allocation5 + $0x58] sm:$0x1]
    %v1405 = vpack.c.bf16 %v1399, %v1398
    %v1406 = vlaneseq
    %v1407 = vshrl.u32 %v1406, 7
    %v1408 = vsub.s32 0, %v1407
    %v1409 = vrot.slane %v1404, %v1408
    %v1414 = vunpack.c.l.b16 %v1400
    %v1415 = vunpack.c.l.b16 %v1401
    %v1416 = vunpack.c.l.b16 %v1402
    %v1417 = vunpack.c.l.b16 %v1403
    %v1418 = vpack.c.b16 %v1415, %v1414
    %v1419 = vpack.c.b16 %v1417, %v1416
    %v1423 = vsel %vm127, %v1405, 0
    %1425 = vmatprep.subr.bf16.mxu0 0
    %1426 = vmatpush1.bf16.msra.mxu0 %v1418
    %1427 = vmatprep.subr.bf16.mxu0 0
    %1428 = vmatpush1.bf16.msra.mxu0 %v1419
    %1429 = vmatprep.subr.bf16.mxu0 0
    %1430 = vmatpush1.bf16.msra.mxu0 0
    %1431 = vmatprep.subr.bf16.mxu0 0
    %1432 = vmatpush1.bf16.msra.mxu0 0
    %1433 = vmatprep.subr.bf16.mxu0 0
    %1434 = vmatpush1.bf16.msra.mxu0 0
    %1435 = vmatprep.subr.bf16.mxu0 0
    %1436 = vmatpush1.bf16.msra.mxu0 0
    %1437 = vmatprep.subr.bf16.mxu0 0
    %1438 = vmatpush1.bf16.msra.mxu0 0
    %1439 = vmatprep.subr.bf16.mxu0 0
    %1440 = vmatpush1.bf16.msra.mxu0 0
    %1441 = vmatprep.subr.bf16.mxu0 0
    %1442 = vmatpush1.bf16.msra.mxu0 0
    %1443 = vmatprep.subr.bf16.mxu0 0
    %1444 = vmatpush1.bf16.msra.mxu0 0
    %1445 = vmatprep.subr.bf16.mxu0 0
    %1446 = vmatpush1.bf16.msra.mxu0 0
    %1447 = vmatprep.subr.bf16.mxu0 0
    %1448 = vmatpush1.bf16.msra.mxu0 0
    %1449 = vmatprep.subr.bf16.mxu0 0
    %1450 = vmatpush1.bf16.msra.mxu0 0
    %1451 = vmatprep.subr.bf16.mxu0 0
    %1452 = vmatpush1.bf16.msra.mxu0 0
    %1453 = vmatprep.subr.bf16.mxu0 0
    %1454 = vmatpush1.bf16.msra.mxu0 0
    %1455 = vmatprep.subr.bf16.mxu0 0
    %1456 = vmatpush1.bf16.msra.mxu0 0
    %1457 = vmatprep.mubr.bf16.mxu0 0
    %1458 = vmatmul.mubr.bf16.gmra.mrb[0].mxu0 %v1423
    %v1459 = vpop.f32.mrb[0].mxu0
    %v1460 = vadd.f32 %v1409, %v1459
    %v1461 = vpop.f32.mrb[0].mxu0
    %v1462 = vpop.f32.mrb[0].mxu0
    %v1463 = vadd.f32 %v1409, %v1462
    %v1464 = vpop.f32.mrb[0].mxu0
    %1465 = vdwg.mxu0
    %v1466 = vxor.u32 %v1460, 2147483648
    %v1467 = vxor.u32 %v1463, 2147483648
    %v1468 = vmul.f32 %v1466, 1.442695
    %v1469 = vpow.pop %v1468
    %v1470 = vmul.f32 %v1467, 1.442695
    %v1471 = vpow.pop %v1470
    %v1472 = vadd.f32 %v1469, 1.0
    %v1473 = vadd.f32 %v1471, 1.0
    %v1474 = vrcp.pop %v1472
    %v1475 = vmul.f32 1.0, %v1474
    %v1476 = vrcp.pop %v1473
    %v1477 = vmul.f32 1.0, %v1476
    %v1478 = vmul.f32 %v1460, %v1475
    %v1479 = vmul.f32 %v1463, %v1477
    %v1480 = vld [vmem:[#allocation2 + $0x78] sm:$0xf]
    %v1481 = vld [vmem:[#allocation2 + $0x7c] sm:$0xf]
    %v1482 = vld [vmem:[#allocation2 + $0x80] sm:$0xf]
    %v1483 = vld [vmem:[#allocation2 + $0x84] sm:$0xf]
    %v1484 = vld [vmem:[#allocation5 + $0x60] sm:$0x1]
    %v1485 = vpack.c.bf16 %v1479, %v1478
    %v1486 = vlaneseq
    %v1487 = vshrl.u32 %v1486, 7
    %v1488 = vsub.s32 0, %v1487
    %v1489 = vrot.slane %v1484, %v1488
    %v1494 = vunpack.c.l.b16 %v1480
    %v1495 = vunpack.c.l.b16 %v1481
    %v1496 = vunpack.c.l.b16 %v1482
    %v1497 = vunpack.c.l.b16 %v1483
    %v1498 = vpack.c.b16 %v1495, %v1494
    %v1499 = vpack.c.b16 %v1497, %v1496
    %v1503 = vsel %vm127, %v1485, 0
    %1505 = vmatprep.subr.bf16.mxu0 0
    %1506 = vmatpush1.bf16.msra.mxu0 %v1498
    %1507 = vmatprep.subr.bf16.mxu0 0
    %1508 = vmatpush1.bf16.msra.mxu0 %v1499
    %1509 = vmatprep.subr.bf16.mxu0 0
    %1510 = vmatpush1.bf16.msra.mxu0 0
    %1511 = vmatprep.subr.bf16.mxu0 0
    %1512 = vmatpush1.bf16.msra.mxu0 0
    %1513 = vmatprep.subr.bf16.mxu0 0
    %1514 = vmatpush1.bf16.msra.mxu0 0
    %1515 = vmatprep.subr.bf16.mxu0 0
    %1516 = vmatpush1.bf16.msra.mxu0 0
    %1517 = vmatprep.subr.bf16.mxu0 0
    %1518 = vmatpush1.bf16.msra.mxu0 0
    %1519 = vmatprep.subr.bf16.mxu0 0
    %1520 = vmatpush1.bf16.msra.mxu0 0
    %1521 = vmatprep.subr.bf16.mxu0 0
    %1522 = vmatpush1.bf16.msra.mxu0 0
    %1523 = vmatprep.subr.bf16.mxu0 0
    %1524 = vmatpush1.bf16.msra.mxu0 0
    %1525 = vmatprep.subr.bf16.mxu0 0
    %1526 = vmatpush1.bf16.msra.mxu0 0
    %1527 = vmatprep.subr.bf16.mxu0 0
    %1528 = vmatpush1.bf16.msra.mxu0 0
    %1529 = vmatprep.subr.bf16.mxu0 0
    %1530 = vmatpush1.bf16.msra.mxu0 0
    %1531 = vmatprep.subr.bf16.mxu0 0
    %1532 = vmatpush1.bf16.msra.mxu0 0
    %1533 = vmatprep.subr.bf16.mxu0 0
    %1534 = vmatpush1.bf16.msra.mxu0 0
    %1535 = vmatprep.subr.bf16.mxu0 0
    %1536 = vmatpush1.bf16.msra.mxu0 0
    %1537 = vmatprep.mubr.bf16.mxu0 0
    %1538 = vmatmul.mubr.bf16.gmra.mrb[0].mxu0 %v1503
    %v1539 = vpop.f32.mrb[0].mxu0
    %v1540 = vadd.f32 %v1489, %v1539
    %v1541 = vpop.f32.mrb[0].mxu0
    %v1542 = vpop.f32.mrb[0].mxu0
    %v1543 = vadd.f32 %v1489, %v1542
    %v1544 = vpop.f32.mrb[0].mxu0
    %1545 = vdwg.mxu0
    %v1546 = vadd.f32 %v1372, %v1540
    %v1547 = vadd.f32 %v1373, %v1543
    %v1548 = vmul.f32 %v1546, %v118
    %v1549 = vmul.f32 %v1547, %v123
    %v1550 = vsel %vm127, %v1548, 0.0
    %1551 = vadd.xlane.f32.xlu0 %v1550
    %v1552 = vpop.xlane.xlu0 %1551
    %v1553 = vsel %vm127, %v1549, 0.0
    %1554 = vadd.xlane.f32.xlu0 %v1553
    %v1555 = vpop.xlane.xlu0 %1554
    %v1556 = vmul.f32 %v1552, %v134
    %v1557 = vmul.f32 %v1555, %v134
    %v1558 = vsub.f32 %v1548, %v1556
    %v1559 = vsub.f32 %v1549, %v1557
    %v1560 = vmul.f32 %v1558, %v1558
    %v1561 = vmul.f32 %v1559, %v1559
    %v1562 = vsel %vm127, %v1560, 0.0
    %1563 = vadd.xlane.f32.xlu0 %v1562
    %v1564 = vpop.xlane.xlu0 %1563
    %v1565 = vsel %vm127, %v1561, 0.0
    %1566 = vadd.xlane.f32.xlu0 %v1565
    %v1567 = vpop.xlane.xlu0 %1566
    %v1568 = vmul.f32 %v1564, %v134
    %v1569 = vmul.f32 %v1567, %v134
    %v1570 = vadd.f32 %v1568, 1e-05
    %v1571 = vadd.f32 %v1569, 1e-05
    %v1572 = vrsqrt.pop %v1570
    %v1573 = vrsqrt.pop %v1571
    %v1574 = vmul.f32 %v1558, %v1572
    %v1575 = vmul.f32 %v1559, %v1573
    %vm1576 = vcmp.gt.f32.partialorder %v52, 0.5
    %vm1577 = vcmp.gt.f32.partialorder %v53, 0.5
    %v1578 = vsel %vm1576, 0.0, -1e+30
    %v1579 = vsel %vm1577, 0.0, -1e+30
    %v1580 = vld [vmem:[#allocation5 + $0x68] sm:$0x1]
    %v1581 = vld [vmem:[#allocation2 + $0x98] sm:$0xf]
    %v1582 = vld [vmem:[#allocation2 + $0x9c] sm:$0xf]
    %v1583 = vld [vmem:[#allocation2 + $0xa0] sm:$0xf]
    %v1584 = vld [vmem:[#allocation2 + $0xa4] sm:$0xf]
    %v1585 = vld [vmem:[#allocation5 + $0x78] sm:$0x1]
    %v1586 = vld [vmem:[#allocation2 + $0x88] sm:$0xf]
    %v1587 = vld [vmem:[#allocation2 + $0x8c] sm:$0xf]
    %v1588 = vld [vmem:[#allocation2 + $0x90] sm:$0xf]
    %v1589 = vld [vmem:[#allocation2 + $0x94] sm:$0xf]
    %v1590 = vld [vmem:[#allocation5 + $0x70] sm:$0x1]
    %v1591 = vpack.c.bf16 %v1580, %v1580
    %v1592 = vlaneseq
    %v1593 = vshrl.u32 %v1592, 7
    %v1594 = vsub.s32 0, %v1593
    %v1595 = vrot.slane %v1590, %v1594
    %v1597 = vunpack.c.l.b16 %v1591
    %v1598 = vrot.slane %v1597, 7
    %vm1599 = vcmask 1041409
    %v1600 = vsel %vm1599, %v1598, %v1597
    %v1601 = vpack.c.b16 %v1600, %v1600
    %v1606 = vunpack.c.l.b16 %v1586
    %v1607 = vunpack.c.l.b16 %v1587
    %v1608 = vunpack.c.l.b16 %v1588
    %v1609 = vunpack.c.l.b16 %v1589
    %v1610 = vpack.c.b16 %v1607, %v1606
    %v1611 = vpack.c.b16 %v1609, %v1608
    %v1615 = vsel %vm127, %v1601, 0
    %1617 = vmatprep.subr.bf16.mxu0 0
    %1618 = vmatpush1.bf16.msra.mxu0 %v1610
    %1619 = vmatprep.subr.bf16.mxu0 0
    %1620 = vmatpush1.bf16.msra.mxu0 %v1611
    %1621 = vmatprep.subr.bf16.mxu0 0
    %1622 = vmatpush1.bf16.msra.mxu0 0
    %1623 = vmatprep.subr.bf16.mxu0 0
    %1624 = vmatpush1.bf16.msra.mxu0 0
    %1625 = vmatprep.subr.bf16.mxu0 0
    %1626 = vmatpush1.bf16.msra.mxu0 0
    %1627 = vmatprep.subr.bf16.mxu0 0
    %1628 = vmatpush1.bf16.msra.mxu0 0
    %1629 = vmatprep.subr.bf16.mxu0 0
    %1630 = vmatpush1.bf16.msra.mxu0 0
    %1631 = vmatprep.subr.bf16.mxu0 0
    %1632 = vmatpush1.bf16.msra.mxu0 0
    %1633 = vmatprep.subr.bf16.mxu0 0
    %1634 = vmatpush1.bf16.msra.mxu0 0
    %1635 = vmatprep.subr.bf16.mxu0 0
    %1636 = vmatpush1.bf16.msra.mxu0 0
    %1637 = vmatprep.subr.bf16.mxu0 0
    %1638 = vmatpush1.bf16.msra.mxu0 0
    %1639 = vmatprep.subr.bf16.mxu0 0
    %1640 = vmatpush1.bf16.msra.mxu0 0
    %1641 = vmatprep.subr.bf16.mxu0 0
    %1642 = vmatpush1.bf16.msra.mxu0 0
    %1643 = vmatprep.subr.bf16.mxu0 0
    %1644 = vmatpush1.bf16.msra.mxu0 0
    %1645 = vmatprep.subr.bf16.mxu0 0
    %1646 = vmatpush1.bf16.msra.mxu0 0
    %1647 = vmatprep.subr.bf16.mxu0 0
    %1648 = vmatpush1.bf16.msra.mxu0 0
    %1649 = vmatprep.mubr.bf16.mxu0 0
    %1650 = vmatmul.mubr.bf16.gmra.mrb[0].mxu0 %v1615
    %v1651 = vpop.f32.mrb[0].mxu0
    %v1652 = vadd.f32 %v1595, %v1651
    %v1653 = vpop.f32.mrb[0].mxu0
    %v1654 = vpop.f32.mrb[0].mxu0
    %v1655 = vpop.f32.mrb[0].mxu0
    %1656 = vdwg.mxu0
    %v1659 = vunpack.c.l.s4 1966171168
    %v1660 = vunpack.c.0.s8 %v1659
    %v1661 = vlaneseq
    %v1662 = vshrl.u32 %v1661, 7
    %v1663 = vsub.s32 %v1660, %v1662
    %v1664 = vrot.slane %v1652, %v1663
    %v1665 = vcombine.high %v1664, %v1664
    %v1667 = vunpack.c.l.s4 1966171168
    %v1668 = vunpack.c.0.s8 %v1667
    %v1669 = vlaneseq
    %v1670 = vshrl.u32 %v1669, 7
    %v1671 = vsub.s32 %v1668, %v1670
    %v1672 = vrot.slane %v1664, %v1671
    %v1674 = vunpack.c.l.s4 1966171168
    %v1675 = vunpack.c.0.s8 %v1674
    %v1676 = vlaneseq
    %v1677 = vshrl.u32 %v1676, 7
    %v1678 = vsub.s32 %v1675, %v1677
    %v1679 = vrot.slane %v1665, %v1678
    %vm1682 = vcmask 253952
    %v1683 = vsel %vm1682, %v1580, 0.0
    %1684 = vadd.xlane.f32.xlu0 %v1683
    %v1685 = vpop.xlane.xlu0 %1684
    %v1686 = vmul.f32 %v1685, %v134
    %v1687 = vsub.f32 %v1580, %v1686
    %v1688 = vmul.f32 %v1687, %v1687
    %v1689 = vsel %vm1682, %v1688, 0.0
    %1690 = vadd.xlane.f32.xlu0 %v1689
    %v1691 = vpop.xlane.xlu0 %1690
    %v1692 = vmul.f32 %v1691, %v134
    %v1693 = vadd.f32 %v1692, 1e-05
    %v1694 = vrsqrt.pop %v1693
    %v1695 = vmul.f32 %v1687, %v1694
    %v1696 = vpack.c.bf16 %v1695, %v1695
    %v1697 = vlaneseq
    %v1698 = vshrl.u32 %v1697, 7
    %v1699 = vsub.s32 0, %v1698
    %v1700 = vrot.slane %v1585, %v1699
    %v1702 = vunpack.c.l.b16 %v1696
    %v1703 = vrot.slane %v1702, 7
    %v1704 = vsel %vm1599, %v1703, %v1702
    %v1705 = vpack.c.b16 %v1704, %v1704
    %v1710 = vunpack.c.l.b16 %v1581
    %v1711 = vunpack.c.l.b16 %v1582
    %v1712 = vunpack.c.l.b16 %v1583
    %v1713 = vunpack.c.l.b16 %v1584
    %v1714 = vpack.c.b16 %v1711, %v1710
    %v1715 = vpack.c.b16 %v1713, %v1712
    %v1719 = vsel %vm127, %v1705, 0
    %1721 = vmatprep.subr.bf16.mxu0 0
    %1722 = vmatpush1.bf16.msra.mxu0 %v1714
    %1723 = vmatprep.subr.bf16.mxu0 0
    %1724 = vmatpush1.bf16.msra.mxu0 %v1715
    %1725 = vmatprep.subr.bf16.mxu0 0
    %1726 = vmatpush1.bf16.msra.mxu0 0
    %1727 = vmatprep.subr.bf16.mxu0 0
    %1728 = vmatpush1.bf16.msra.mxu0 0
    %1729 = vmatprep.subr.bf16.mxu0 0
    %1730 = vmatpush1.bf16.msra.mxu0 0
    %1731 = vmatprep.subr.bf16.mxu0 0
    %1732 = vmatpush1.bf16.msra.mxu0 0
    %1733 = vmatprep.subr.bf16.mxu0 0
    %1734 = vmatpush1.bf16.msra.mxu0 0
    %1735 = vmatprep.subr.bf16.mxu0 0
    %1736 = vmatpush1.bf16.msra.mxu0 0
    %1737 = vmatprep.subr.bf16.mxu0 0
    %1738 = vmatpush1.bf16.msra.mxu0 0
    %1739 = vmatprep.subr.bf16.mxu0 0
    %1740 = vmatpush1.bf16.msra.mxu0 0
    %1741 = vmatprep.subr.bf16.mxu0 0
    %1742 = vmatpush1.bf16.msra.mxu0 0
    %1743 = vmatprep.subr.bf16.mxu0 0
    %1744 = vmatpush1.bf16.msra.mxu0 0
    %1745 = vmatprep.subr.bf16.mxu0 0
    %1746 = vmatpush1.bf16.msra.mxu0 0
    %1747 = vmatprep.subr.bf16.mxu0 0
    %1748 = vmatpush1.bf16.msra.mxu0 0
    %1749 = vmatprep.subr.bf16.mxu0 0
    %1750 = vmatpush1.bf16.msra.mxu0 0
    %1751 = vmatprep.subr.bf16.mxu0 0
    %1752 = vmatpush1.bf16.msra.mxu0 0
    %1753 = vmatprep.mubr.bf16.mxu0 0
    %1754 = vmatmul.mubr.bf16.gmra.mrb[0].mxu0 %v1719
    %v1755 = vpop.f32.mrb[0].mxu0
    %v1756 = vadd.f32 %v1700, %v1755
    %v1757 = vpop.f32.mrb[0].mxu0
    %v1758 = vpop.f32.mrb[0].mxu0
    %v1759 = vpop.f32.mrb[0].mxu0
    %1760 = vdwg.mxu0
    %v1763 = vunpack.c.l.s4 1966171168
    %v1764 = vunpack.c.0.s8 %v1763
    %v1765 = vlaneseq
    %v1766 = vshrl.u32 %v1765, 7
    %v1767 = vsub.s32 %v1764, %v1766
    %v1768 = vrot.slane %v1756, %v1767
    %v1769 = vcombine.high %v1768, %v1768
    %v1771 = vunpack.c.l.s4 1966171168
    %v1772 = vunpack.c.0.s8 %v1771
    %v1773 = vlaneseq
    %v1774 = vshrl.u32 %v1773, 7
    %v1775 = vsub.s32 %v1772, %v1774
    %v1776 = vrot.slane %v1768, %v1775
    %v1778 = vunpack.c.l.s4 1966171168
    %v1779 = vunpack.c.0.s8 %v1778
    %v1780 = vlaneseq
    %v1781 = vshrl.u32 %v1780, 7
    %v1782 = vsub.s32 %v1779, %v1781
    %v1783 = vrot.slane %v1769, %v1782
    %v1786 = vpack.c.bf16 %v1575, %v1574
    %v1788 = vsel %vm127, %v1786, 0
    %1790 = vmatprep.subr.bf16.mxu0 0
    %1791 = vmatpush1.bf16.msra.mxu0 %v1714
    %1792 = vmatprep.subr.bf16.mxu0 0
    %1793 = vmatpush1.bf16.msra.mxu0 %v1715
    %1794 = vmatprep.subr.bf16.mxu0 0
    %1795 = vmatpush1.bf16.msra.mxu0 0
    %1796 = vmatprep.subr.bf16.mxu0 0
    %1797 = vmatpush1.bf16.msra.mxu0 0
    %1798 = vmatprep.subr.bf16.mxu0 0
    %1799 = vmatpush1.bf16.msra.mxu0 0
    %1800 = vmatprep.subr.bf16.mxu0 0
    %1801 = vmatpush1.bf16.msra.mxu0 0
    %1802 = vmatprep.subr.bf16.mxu0 0
    %1803 = vmatpush1.bf16.msra.mxu0 0
    %1804 = vmatprep.subr.bf16.mxu0 0
    %1805 = vmatpush1.bf16.msra.mxu0 0
    %1806 = vmatprep.subr.bf16.mxu0 0
    %1807 = vmatpush1.bf16.msra.mxu0 0
    %1808 = vmatprep.subr.bf16.mxu0 0
    %1809 = vmatpush1.bf16.msra.mxu0 0
    %1810 = vmatprep.subr.bf16.mxu0 0
    %1811 = vmatpush1.bf16.msra.mxu0 0
    %1812 = vmatprep.subr.bf16.mxu0 0
    %1813 = vmatpush1.bf16.msra.mxu0 0
    %1814 = vmatprep.subr.bf16.mxu0 0
    %1815 = vmatpush1.bf16.msra.mxu0 0
    %1816 = vmatprep.subr.bf16.mxu0 0
    %1817 = vmatpush1.bf16.msra.mxu0 0
    %1818 = vmatprep.subr.bf16.mxu0 0
    %1819 = vmatpush1.bf16.msra.mxu0 0
    %1820 = vmatprep.subr.bf16.mxu0 0
    %1821 = vmatpush1.bf16.msra.mxu0 0
    %1822 = vmatprep.mubr.bf16.mxu0 0
    %1823 = vmatmul.mubr.bf16.gmra.mrb[0].mxu0 %v1788
    %v1824 = vpop.f32.mrb[0].mxu0
    %v1825 = vadd.f32 %v1700, %v1824
    %v1826 = vpop.f32.mrb[0].mxu0
    %v1827 = vpop.f32.mrb[0].mxu0
    %v1828 = vadd.f32 %v1700, %v1827
    %v1829 = vpop.f32.mrb[0].mxu0
    %1830 = vdwg.mxu0
    %v1831 = vmul.f32 %v1672, %v1776
    %v1832 = vmul.f32 %v1679, %v1783
    %v1833 = vsel %vm1682, %v1831, 0.0
    %1834 = vadd.xlane.f32.xlu0 %v1833
    %v1835 = vpop.xlane.xlu0 %1834
    %v1836 = vsel %vm1682, %v1832, 0.0
    %1837 = vadd.xlane.f32.xlu0 %v1836
    %v1838 = vpop.xlane.xlu0 %1837
    %v1839 = vlaneseq
    %v1840 = vshrl.u32 %v1839, 7
    %v1841 = vsub.s32 0, %v1840
    %v1842 = vrot.slane %v1672, %v1841
    %v1843 = vlaneseq
    %v1844 = vshrl.u32 %v1843, 7
    %v1845 = vsub.s32 0, %v1844
    %v1846 = vrot.slane %v1679, %v1845
    %v1849 = vmul.f32 %v1842, %v1825
    %v1850 = vmul.f32 %v1846, %v1828
    %v1851 = vsel %vm127, %v1849, 0.0
    %1852 = vadd.xlane.f32.xlu0 %v1851
    %v1853 = vpop.xlane.xlu0 %1852
    %v1854 = vsel %vm127, %v1850, 0.0
    %1855 = vadd.xlane.f32.xlu0 %v1854
    %v1856 = vpop.xlane.xlu0 %1855
    %v1857 = vadd.f32 %v1853, %v1578
    %v1858 = vadd.f32 %v1856, %v1579
    %vm1859 = vcmask 7168
    %v1860 = vsel %vm1859, %v1857, -inf
    %v1861 = vrot.slane %v1860, 4
    %v1862 = vmax.f32 %v1860, %v1861
    %v1863 = vrot.slane %v1862, 2
    %v1864 = vmax.f32 %v1862, %v1863
    %v1865 = vrot.slane %v1864, 1
    %v1866 = vmax.f32 %v1864, %v1865
    %v1867 = vsel %vm1859, %v1858, -inf
    %v1868 = vrot.slane %v1867, 4
    %v1869 = vmax.f32 %v1867, %v1868
    %v1870 = vrot.slane %v1869, 2
    %v1871 = vmax.f32 %v1869, %v1870
    %v1872 = vrot.slane %v1871, 1
    %v1873 = vmax.f32 %v1871, %v1872
    %v1874 = vmax.f32 %v1866, %v1835
    %v1875 = vmax.f32 %v1873, %v1838
    %v1876 = vsub.f32 %v1835, %v1874
    %v1877 = vsub.f32 %v1838, %v1875
    %v1878 = vmul.f32 %v1876, 1.442695
    %v1879 = vpow.pop %v1878
    %v1880 = vmul.f32 %v1877, 1.442695
    %v1881 = vpow.pop %v1880
    %v1882 = vlaneseq
    %v1883 = vshrl.u32 %v1882, 7
    %v1884 = vsub.s32 0, %v1883
    %v1885 = vrot.slane %v1874, %v1884
    %v1886 = vlaneseq
    %v1887 = vshrl.u32 %v1886, 7
    %v1888 = vsub.s32 0, %v1887
    %v1889 = vrot.slane %v1875, %v1888
    %v1890 = vsub.f32 %v1857, %v1885
    %v1891 = vsub.f32 %v1858, %v1889
    %v1892 = vmul.f32 %v1890, 1.442695
    %v1893 = vpow.pop %v1892
    %v1894 = vmul.f32 %v1891, 1.442695
    %v1895 = vpow.pop %v1894
    %v1896 = vsel %vm1859, %v1893, 0.0
    %v1897 = vrot.slane %v1896, 4
    %v1898 = vadd.f32 %v1896, %v1897
    %v1899 = vrot.slane %v1898, 2
    %v1900 = vadd.f32 %v1898, %v1899
    %v1901 = vrot.slane %v1900, 1
    %v1902 = vadd.f32 %v1900, %v1901
    %v1903 = vsel %vm1859, %v1895, 0.0
    %v1904 = vrot.slane %v1903, 4
    %v1905 = vadd.f32 %v1903, %v1904
    %v1906 = vrot.slane %v1905, 2
    %v1907 = vadd.f32 %v1905, %v1906
    %v1908 = vrot.slane %v1907, 1
    %v1909 = vadd.f32 %v1907, %v1908
    %v1910 = vadd.f32 %v1879, %v1902
    %v1911 = vadd.f32 %v1881, %v1909
    %v1912 = vrcp.pop %v1910
    %v1913 = vrcp.pop %v1911
    %1915 = vset.pattern.permute.xlu0 0
    %1916 = vperm.xlu0 %1915, %v1879
    %v1917 = vpop.permute.xlu0 %1916
    %1920 = vset.pattern.permute.xlu0 0
    %1921 = vperm.xlu0 %1920, %v1881
    %v1922 = vpop.permute.xlu0 %1921
    %v1924 = vlaneseq
    %v1925 = vshrl.u32 %v1924, 7
    %v1926 = vsub.s32 0, %v1925
    %v1927 = vrot.slane %v1776, %v1926
    %v1928 = vlaneseq
    %v1929 = vshrl.u32 %v1928, 7
    %v1930 = vsub.s32 0, %v1929
    %v1931 = vrot.slane %v1783, %v1930
    %1932 = vrot.lane.b32.xlu0 %v1927, 96
    %v1933 = vpop.permute.xlu0 %1932
    %1934 = vrot.lane.b32.xlu0 %v1931, 96
    %v1935 = vpop.permute.xlu0 %1934
    %v1938 = vmul.f32 %v1917, %v1933
    %v1939 = vmul.f32 %v1922, %v1935
    %1941 = vset.pattern.permute.xlu0 0
    %1942 = vperm.xlu0 %1941, %v1893
    %v1943 = vpop.permute.xlu0 %1942
    %1946 = vset.pattern.permute.xlu0 0
    %1947 = vperm.xlu0 %1946, %v1895
    %v1948 = vpop.permute.xlu0 %1947
    %v1950 = vmul.f32 %v1943, %v1825
    %v1951 = vmul.f32 %v1948, %v1828
    %vm1952 = vcmask 523520
    %v1953 = vsel %vm1952, %v1950, 0.0
    %v1954 = vrot.slane %v1953, 4
    %v1955 = vadd.f32 %v1953, %v1954
    %v1956 = vrot.slane %v1955, 2
    %v1957 = vadd.f32 %v1955, %v1956
    %v1958 = vrot.slane %v1957, 1
    %v1959 = vadd.f32 %v1957, %v1958
    %v1960 = vsel %vm1952, %v1951, 0.0
    %v1961 = vrot.slane %v1960, 4
    %v1962 = vadd.f32 %v1960, %v1961
    %v1963 = vrot.slane %v1962, 2
    %v1964 = vadd.f32 %v1962, %v1963
    %v1965 = vrot.slane %v1964, 1
    %v1966 = vadd.f32 %v1964, %v1965
    %1969 = vrot.lane.b32.xlu0 %v1959, 96
    %v1970 = vpop.permute.xlu0 %1969
    %1971 = vrot.lane.b32.xlu0 %v1966, 96
    %v1972 = vpop.permute.xlu0 %1971
    %v1975 = vadd.f32 %v1938, %v1970
    %v1976 = vadd.f32 %v1939, %v1972
    %1978 = vset.pattern.permute.xlu0 0
    %1979 = vperm.xlu0 %1978, %v1912
    %v1980 = vpop.permute.xlu0 %1979
    %1983 = vset.pattern.permute.xlu0 0
    %1984 = vperm.xlu0 %1983, %v1913
    %v1985 = vpop.permute.xlu0 %1984
    %v1987 = vmul.f32 %v1975, %v1980
    %v1988 = vmul.f32 %v1976, %v1985
    %v1989 = vld [vmem:[#allocation2 + $0xa8] sm:$0xf]
    %v1990 = vld [vmem:[#allocation2 + $0xac] sm:$0xf]
    %v1991 = vld [vmem:[#allocation2 + $0xb0] sm:$0xf]
    %v1992 = vld [vmem:[#allocation2 + $0xb4] sm:$0xf]
    %v1993 = vld [vmem:[#allocation5 + $0x80] sm:$0x1]
    %v1994 = vpack.c.bf16 %v1987, %v1987
    %v1995 = vpack.c.bf16 %v1988, %v1988
    %v1996 = vlaneseq
    %v1997 = vshrl.u32 %v1996, 7
    %v1998 = vsub.s32 0, %v1997
    %v1999 = vrot.slane %v1993, %v1998
    %v2002 = vunpack.c.l.b16 %v1994
    %v2003 = vunpack.c.l.b16 %v1995
    %v2004 = vrot.slane %v2003, 7
    %v2005 = vsel %vm1599, %v2004, %v2002
    %v2006 = vpack.c.b16 %v2005, %v2005
    %v2011 = vunpack.c.l.b16 %v1989
    %v2012 = vunpack.c.l.b16 %v1990
    %v2013 = vunpack.c.l.b16 %v1991
    %v2014 = vunpack.c.l.b16 %v1992
    %v2015 = vpack.c.b16 %v2012, %v2011
    %v2016 = vpack.c.b16 %v2014, %v2013
    %v2020 = vsel %vm127, %v2006, 0
    %2022 = vmatprep.subr.bf16.mxu0 0
    %2023 = vmatpush1.bf16.msra.mxu0 %v2015
    %2024 = vmatprep.subr.bf16.mxu0 0
    %2025 = vmatpush1.bf16.msra.mxu0 %v2016
    %2026 = vmatprep.subr.bf16.mxu0 0
    %2027 = vmatpush1.bf16.msra.mxu0 0
    %2028 = vmatprep.subr.bf16.mxu0 0
    %2029 = vmatpush1.bf16.msra.mxu0 0
    %2030 = vmatprep.subr.bf16.mxu0 0
    %2031 = vmatpush1.bf16.msra.mxu0 0
    %2032 = vmatprep.subr.bf16.mxu0 0
    %2033 = vmatpush1.bf16.msra.mxu0 0
    %2034 = vmatprep.subr.bf16.mxu0 0
    %2035 = vmatpush1.bf16.msra.mxu0 0
    %2036 = vmatprep.subr.bf16.mxu0 0
    %2037 = vmatpush1.bf16.msra.mxu0 0
    %2038 = vmatprep.subr.bf16.mxu0 0
    %2039 = vmatpush1.bf16.msra.mxu0 0
    %2040 = vmatprep.subr.bf16.mxu0 0
    %2041 = vmatpush1.bf16.msra.mxu0 0
    %2042 = vmatprep.subr.bf16.mxu0 0
    %2043 = vmatpush1.bf16.msra.mxu0 0
    %2044 = vmatprep.subr.bf16.mxu0 0
    %2045 = vmatpush1.bf16.msra.mxu0 0
    %2046 = vmatprep.subr.bf16.mxu0 0
    %2047 = vmatpush1.bf16.msra.mxu0 0
    %2048 = vmatprep.subr.bf16.mxu0 0
    %2049 = vmatpush1.bf16.msra.mxu0 0
    %2050 = vmatprep.subr.bf16.mxu0 0
    %2051 = vmatpush1.bf16.msra.mxu0 0
    %2052 = vmatprep.subr.bf16.mxu0 0
    %2053 = vmatpush1.bf16.msra.mxu0 0
    %2054 = vmatprep.mubr.bf16.mxu0 0
    %2055 = vmatmul.mubr.bf16.gmra.mrb[0].mxu0 %v2020
    %v2056 = vpop.f32.mrb[0].mxu0
    %v2057 = vadd.f32 %v1999, %v2056
    %v2058 = vpop.f32.mrb[0].mxu0
    %v2059 = vpop.f32.mrb[0].mxu0
    %v2060 = vpop.f32.mrb[0].mxu0
    %2061 = vdwg.mxu0
    %v2064 = vunpack.c.l.s4 1966171168
    %v2065 = vunpack.c.0.s8 %v2064
    %v2066 = vlaneseq
    %v2067 = vshrl.u32 %v2066, 7
    %v2068 = vsub.s32 %v2065, %v2067
    %v2069 = vrot.slane %v2057, %v2068
    %v2070 = vcombine.high %v2069, %v2069
    %v2072 = vunpack.c.l.s4 1966171168
    %v2073 = vunpack.c.0.s8 %v2072
    %v2074 = vlaneseq
    %v2075 = vshrl.u32 %v2074, 7
    %v2076 = vsub.s32 %v2073, %v2075
    %v2077 = vrot.slane %v2069, %v2076
    %v2079 = vunpack.c.l.s4 1966171168
    %v2080 = vunpack.c.0.s8 %v2079
    %v2081 = vlaneseq
    %v2082 = vshrl.u32 %v2081, 7
    %v2083 = vsub.s32 %v2080, %v2082
    %v2084 = vrot.slane %v2070, %v2083
    %v2087 = vld [vmem:[#allocation2 + $0xc8] sm:$0xf]
    %v2088 = vld [vmem:[#allocation2 + $0xcc] sm:$0xf]
    %v2089 = vld [vmem:[#allocation2 + $0xd0] sm:$0xf]
    %v2090 = vld [vmem:[#allocation2 + $0xd4] sm:$0xf]
    %v2091 = vld [vmem:[#allocation5 + $0x90] sm:$0x1]
    %v2092 = vld [vmem:[#allocation2 + $0xb8] sm:$0xf]
    %v2093 = vld [vmem:[#allocation2 + $0xbc] sm:$0xf]
    %v2094 = vld [vmem:[#allocation2 + $0xc0] sm:$0xf]
    %v2095 = vld [vmem:[#allocation2 + $0xc4] sm:$0xf]
    %v2096 = vld [vmem:[#allocation5 + $0x88] sm:$0x1]
    %v2097 = vpack.c.bf16 %v2077, %v2077
    %v2098 = vpack.c.bf16 %v2084, %v2084
    %v2099 = vlaneseq
    %v2100 = vshrl.u32 %v2099, 7
    %v2101 = vsub.s32 0, %v2100
    %v2102 = vrot.slane %v2096, %v2101
    %v2105 = vunpack.c.l.b16 %v2097
    %v2106 = vunpack.c.l.b16 %v2098
    %v2107 = vrot.slane %v2106, 7
    %v2108 = vsel %vm1599, %v2107, %v2105
    %v2109 = vpack.c.b16 %v2108, %v2108
    %v2114 = vunpack.c.l.b16 %v2092
    %v2115 = vunpack.c.l.b16 %v2093
    %v2116 = vunpack.c.l.b16 %v2094
    %v2117 = vunpack.c.l.b16 %v2095
    %v2118 = vpack.c.b16 %v2115, %v2114
    %v2119 = vpack.c.b16 %v2117, %v2116
    %v2123 = vsel %vm127, %v2109, 0
    %2125 = vmatprep.subr.bf16.mxu0 0
    %2126 = vmatpush1.bf16.msra.mxu0 %v2118
    %2127 = vmatprep.subr.bf16.mxu0 0
    %2128 = vmatpush1.bf16.msra.mxu0 %v2119
    %2129 = vmatprep.subr.bf16.mxu0 0
    %2130 = vmatpush1.bf16.msra.mxu0 0
    %2131 = vmatprep.subr.bf16.mxu0 0
    %2132 = vmatpush1.bf16.msra.mxu0 0
    %2133 = vmatprep.subr.bf16.mxu0 0
    %2134 = vmatpush1.bf16.msra.mxu0 0
    %2135 = vmatprep.subr.bf16.mxu0 0
    %2136 = vmatpush1.bf16.msra.mxu0 0
    %2137 = vmatprep.subr.bf16.mxu0 0
    %2138 = vmatpush1.bf16.msra.mxu0 0
    %2139 = vmatprep.subr.bf16.mxu0 0
    %2140 = vmatpush1.bf16.msra.mxu0 0
    %2141 = vmatprep.subr.bf16.mxu0 0
    %2142 = vmatpush1.bf16.msra.mxu0 0
    %2143 = vmatprep.subr.bf16.mxu0 0
    %2144 = vmatpush1.bf16.msra.mxu0 0
    %2145 = vmatprep.subr.bf16.mxu0 0
    %2146 = vmatpush1.bf16.msra.mxu0 0
    %2147 = vmatprep.subr.bf16.mxu0 0
    %2148 = vmatpush1.bf16.msra.mxu0 0
    %2149 = vmatprep.subr.bf16.mxu0 0
    %2150 = vmatpush1.bf16.msra.mxu0 0
    %2151 = vmatprep.subr.bf16.mxu0 0
    %2152 = vmatpush1.bf16.msra.mxu0 0
    %2153 = vmatprep.subr.bf16.mxu0 0
    %2154 = vmatpush1.bf16.msra.mxu0 0
    %2155 = vmatprep.subr.bf16.mxu0 0
    %2156 = vmatpush1.bf16.msra.mxu0 0
    %2157 = vmatprep.mubr.bf16.mxu0 0
    %2158 = vmatmul.mubr.bf16.gmra.mrb[0].mxu0 %v2123
    %v2159 = vpop.f32.mrb[0].mxu0
    %v2160 = vadd.f32 %v2102, %v2159
    %v2161 = vpop.f32.mrb[0].mxu0
    %v2162 = vpop.f32.mrb[0].mxu0
    %v2163 = vpop.f32.mrb[0].mxu0
    %2164 = vdwg.mxu0
    %v2167 = vunpack.c.l.s4 1966171168
    %v2168 = vunpack.c.0.s8 %v2167
    %v2169 = vlaneseq
    %v2170 = vshrl.u32 %v2169, 7
    %v2171 = vsub.s32 %v2168, %v2170
    %v2172 = vrot.slane %v2160, %v2171
    %v2173 = vcombine.high %v2172, %v2172
    %v2175 = vunpack.c.l.s4 1966171168
    %v2176 = vunpack.c.0.s8 %v2175
    %v2177 = vlaneseq
    %v2178 = vshrl.u32 %v2177, 7
    %v2179 = vsub.s32 %v2176, %v2178
    %v2180 = vrot.slane %v2172, %v2179
    %v2182 = vunpack.c.l.s4 1966171168
    %v2183 = vunpack.c.0.s8 %v2182
    %v2184 = vlaneseq
    %v2185 = vshrl.u32 %v2184, 7
    %v2186 = vsub.s32 %v2183, %v2185
    %v2187 = vrot.slane %v2173, %v2186
    %v2190 = vsel %vm1682, %v2077, 0.0
    %2191 = vadd.xlane.f32.xlu0 %v2190
    %v2192 = vpop.xlane.xlu0 %2191
    %v2193 = vsel %vm1682, %v2084, 0.0
    %2194 = vadd.xlane.f32.xlu0 %v2193
    %v2195 = vpop.xlane.xlu0 %2194
    %v2196 = vmul.f32 %v2192, %v134
    %v2197 = vmul.f32 %v2195, %v134
    %v2198 = vsub.f32 %v2077, %v2196
    %v2199 = vsub.f32 %v2084, %v2197
    %v2200 = vmul.f32 %v2198, %v2198
    %v2201 = vmul.f32 %v2199, %v2199
    %v2202 = vsel %vm1682, %v2200, 0.0
    %2203 = vadd.xlane.f32.xlu0 %v2202
    %v2204 = vpop.xlane.xlu0 %2203
    %v2205 = vsel %vm1682, %v2201, 0.0
    %2206 = vadd.xlane.f32.xlu0 %v2205
    %v2207 = vpop.xlane.xlu0 %2206
    %v2208 = vmul.f32 %v2204, %v134
    %v2209 = vmul.f32 %v2207, %v134
    %v2210 = vadd.f32 %v2208, 1e-05
    %v2211 = vadd.f32 %v2209, 1e-05
    %v2212 = vrsqrt.pop %v2210
    %v2213 = vrsqrt.pop %v2211
    %v2214 = vmul.f32 %v2198, %v2212
    %v2215 = vmul.f32 %v2199, %v2213
    %v2216 = vpack.c.bf16 %v2214, %v2214
    %v2217 = vpack.c.bf16 %v2215, %v2215
    %v2218 = vlaneseq
    %v2219 = vshrl.u32 %v2218, 7
    %v2220 = vsub.s32 0, %v2219
    %v2221 = vrot.slane %v2091, %v2220
    %v2224 = vunpack.c.l.b16 %v2216
    %v2225 = vunpack.c.l.b16 %v2217
    %v2226 = vrot.slane %v2225, 7
    %v2227 = vsel %vm1599, %v2226, %v2224
    %v2228 = vpack.c.b16 %v2227, %v2227
    %v2233 = vunpack.c.l.b16 %v2087
    %v2234 = vunpack.c.l.b16 %v2088
    %v2235 = vunpack.c.l.b16 %v2089
    %v2236 = vunpack.c.l.b16 %v2090
    %v2237 = vpack.c.b16 %v2234, %v2233
    %v2238 = vpack.c.b16 %v2236, %v2235
    %v2242 = vsel %vm127, %v2228, 0
    %2244 = vmatprep.subr.bf16.mxu0 0
    %2245 = vmatpush1.bf16.msra.mxu0 %v2237
    %2246 = vmatprep.subr.bf16.mxu0 0
    %2247 = vmatpush1.bf16.msra.mxu0 %v2238
    %2248 = vmatprep.subr.bf16.mxu0 0
    %2249 = vmatpush1.bf16.msra.mxu0 0
    %2250 = vmatprep.subr.bf16.mxu0 0
    %2251 = vmatpush1.bf16.msra.mxu0 0
    %2252 = vmatprep.subr.bf16.mxu0 0
    %2253 = vmatpush1.bf16.msra.mxu0 0
    %2254 = vmatprep.subr.bf16.mxu0 0
    %2255 = vmatpush1.bf16.msra.mxu0 0
    %2256 = vmatprep.subr.bf16.mxu0 0
    %2257 = vmatpush1.bf16.msra.mxu0 0
    %2258 = vmatprep.subr.bf16.mxu0 0
    %2259 = vmatpush1.bf16.msra.mxu0 0
    %2260 = vmatprep.subr.bf16.mxu0 0
    %2261 = vmatpush1.bf16.msra.mxu0 0
    %2262 = vmatprep.subr.bf16.mxu0 0
    %2263 = vmatpush1.bf16.msra.mxu0 0
    %2264 = vmatprep.subr.bf16.mxu0 0
    %2265 = vmatpush1.bf16.msra.mxu0 0
    %2266 = vmatprep.subr.bf16.mxu0 0
    %2267 = vmatpush1.bf16.msra.mxu0 0
    %2268 = vmatprep.subr.bf16.mxu0 0
    %2269 = vmatpush1.bf16.msra.mxu0 0
    %2270 = vmatprep.subr.bf16.mxu0 0
    %2271 = vmatpush1.bf16.msra.mxu0 0
    %2272 = vmatprep.subr.bf16.mxu0 0
    %2273 = vmatpush1.bf16.msra.mxu0 0
    %2274 = vmatprep.subr.bf16.mxu0 0
    %2275 = vmatpush1.bf16.msra.mxu0 0
    %2276 = vmatprep.mubr.bf16.mxu0 0
    %2277 = vmatmul.mubr.bf16.gmra.mrb[0].mxu0 %v2242
    %v2278 = vpop.f32.mrb[0].mxu0
    %v2279 = vadd.f32 %v2221, %v2278
    %v2280 = vpop.f32.mrb[0].mxu0
    %v2281 = vpop.f32.mrb[0].mxu0
    %v2282 = vpop.f32.mrb[0].mxu0
    %2283 = vdwg.mxu0
    %v2286 = vunpack.c.l.s4 1966171168
    %v2287 = vunpack.c.0.s8 %v2286
    %v2288 = vlaneseq
    %v2289 = vshrl.u32 %v2288, 7
    %v2290 = vsub.s32 %v2287, %v2289
    %v2291 = vrot.slane %v2279, %v2290
    %v2292 = vcombine.high %v2291, %v2291
    %v2294 = vunpack.c.l.s4 1966171168
    %v2295 = vunpack.c.0.s8 %v2294
    %v2296 = vlaneseq
    %v2297 = vshrl.u32 %v2296, 7
    %v2298 = vsub.s32 %v2295, %v2297
    %v2299 = vrot.slane %v2291, %v2298
    %v2301 = vunpack.c.l.s4 1966171168
    %v2302 = vunpack.c.0.s8 %v2301
    %v2303 = vlaneseq
    %v2304 = vshrl.u32 %v2303, 7
    %v2305 = vsub.s32 %v2302, %v2304
    %v2306 = vrot.slane %v2292, %v2305
    %2309 = vmatprep.subr.bf16.mxu0 0
    %2310 = vmatpush1.bf16.msra.mxu0 %v2237
    %2311 = vmatprep.subr.bf16.mxu0 0
    %2312 = vmatpush1.bf16.msra.mxu0 %v2238
    %2313 = vmatprep.subr.bf16.mxu0 0
    %2314 = vmatpush1.bf16.msra.mxu0 0
    %2315 = vmatprep.subr.bf16.mxu0 0
    %2316 = vmatpush1.bf16.msra.mxu0 0
    %2317 = vmatprep.subr.bf16.mxu0 0
    %2318 = vmatpush1.bf16.msra.mxu0 0
    %2319 = vmatprep.subr.bf16.mxu0 0
    %2320 = vmatpush1.bf16.msra.mxu0 0
    %2321 = vmatprep.subr.bf16.mxu0 0
    %2322 = vmatpush1.bf16.msra.mxu0 0
    %2323 = vmatprep.subr.bf16.mxu0 0
    %2324 = vmatpush1.bf16.msra.mxu0 0
    %2325 = vmatprep.subr.bf16.mxu0 0
    %2326 = vmatpush1.bf16.msra.mxu0 0
    %2327 = vmatprep.subr.bf16.mxu0 0
    %2328 = vmatpush1.bf16.msra.mxu0 0
    %2329 = vmatprep.subr.bf16.mxu0 0
    %2330 = vmatpush1.bf16.msra.mxu0 0
    %2331 = vmatprep.subr.bf16.mxu0 0
    %2332 = vmatpush1.bf16.msra.mxu0 0
    %2333 = vmatprep.subr.bf16.mxu0 0
    %2334 = vmatpush1.bf16.msra.mxu0 0
    %2335 = vmatprep.subr.bf16.mxu0 0
    %2336 = vmatpush1.bf16.msra.mxu0 0
    %2337 = vmatprep.subr.bf16.mxu0 0
    %2338 = vmatpush1.bf16.msra.mxu0 0
    %2339 = vmatprep.subr.bf16.mxu0 0
    %2340 = vmatpush1.bf16.msra.mxu0 0
    %2341 = vmatprep.mubr.bf16.mxu0 0
    %2342 = vmatmul.mubr.bf16.gmra.mrb[0].mxu0 %v1788
    %v2343 = vpop.f32.mrb[0].mxu0
    %v2344 = vadd.f32 %v2221, %v2343
    %v2345 = vpop.f32.mrb[0].mxu0
    %v2346 = vpop.f32.mrb[0].mxu0
    %v2347 = vadd.f32 %v2221, %v2346
    %v2348 = vpop.f32.mrb[0].mxu0
    %2349 = vdwg.mxu0
    %v2350 = vmul.f32 %v2180, %v2299
    %v2351 = vmul.f32 %v2187, %v2306
    %v2352 = vsel %vm1682, %v2350, 0.0
    %2353 = vadd.xlane.f32.xlu0 %v2352
    %v2354 = vpop.xlane.xlu0 %2353
    %v2355 = vsel %vm1682, %v2351, 0.0
    %2356 = vadd.xlane.f32.xlu0 %v2355
    %v2357 = vpop.xlane.xlu0 %2356
    %v2358 = vlaneseq
    %v2359 = vshrl.u32 %v2358, 7
    %v2360 = vsub.s32 0, %v2359
    %v2361 = vrot.slane %v2180, %v2360
    %v2362 = vlaneseq
    %v2363 = vshrl.u32 %v2362, 7
    %v2364 = vsub.s32 0, %v2363
    %v2365 = vrot.slane %v2187, %v2364
    %v2368 = vmul.f32 %v2361, %v2344
    %v2369 = vmul.f32 %v2365, %v2347
    %v2370 = vsel %vm127, %v2368, 0.0
    %2371 = vadd.xlane.f32.xlu0 %v2370
    %v2372 = vpop.xlane.xlu0 %2371
    %v2373 = vsel %vm127, %v2369, 0.0
    %2374 = vadd.xlane.f32.xlu0 %v2373
    %v2375 = vpop.xlane.xlu0 %2374
    %v2376 = vadd.f32 %v2372, %v1578
    %v2377 = vadd.f32 %v2375, %v1579
    %v2378 = vsel %vm1859, %v2376, -inf
    %v2379 = vrot.slane %v2378, 4
    %v2380 = vmax.f32 %v2378, %v2379
    %v2381 = vrot.slane %v2380, 2
    %v2382 = vmax.f32 %v2380, %v2381
    %v2383 = vrot.slane %v2382, 1
    %v2384 = vmax.f32 %v2382, %v2383
    %v2385 = vsel %vm1859, %v2377, -inf
    %v2386 = vrot.slane %v2385, 4
    %v2387 = vmax.f32 %v2385, %v2386
    %v2388 = vrot.slane %v2387, 2
    %v2389 = vmax.f32 %v2387, %v2388
    %v2390 = vrot.slane %v2389, 1
    %v2391 = vmax.f32 %v2389, %v2390
    %v2392 = vmax.f32 %v2384, %v2354
    %v2393 = vmax.f32 %v2391, %v2357
    %v2394 = vsub.f32 %v2354, %v2392
    %v2395 = vsub.f32 %v2357, %v2393
    %v2396 = vmul.f32 %v2394, 1.442695
    %v2397 = vpow.pop %v2396
    %v2398 = vmul.f32 %v2395, 1.442695
    %v2399 = vpow.pop %v2398
    %v2400 = vlaneseq
    %v2401 = vshrl.u32 %v2400, 7
    %v2402 = vsub.s32 0, %v2401
    %v2403 = vrot.slane %v2392, %v2402
    %v2404 = vlaneseq
    %v2405 = vshrl.u32 %v2404, 7
    %v2406 = vsub.s32 0, %v2405
    %v2407 = vrot.slane %v2393, %v2406
    %v2408 = vsub.f32 %v2376, %v2403
    %v2409 = vsub.f32 %v2377, %v2407
    %v2410 = vmul.f32 %v2408, 1.442695
    %v2411 = vpow.pop %v2410
    %v2412 = vmul.f32 %v2409, 1.442695
    %v2413 = vpow.pop %v2412
    %v2414 = vsel %vm1859, %v2411, 0.0
    %v2415 = vrot.slane %v2414, 4
    %v2416 = vadd.f32 %v2414, %v2415
    %v2417 = vrot.slane %v2416, 2
    %v2418 = vadd.f32 %v2416, %v2417
    %v2419 = vrot.slane %v2418, 1
    %v2420 = vadd.f32 %v2418, %v2419
    %v2421 = vsel %vm1859, %v2413, 0.0
    %v2422 = vrot.slane %v2421, 4
    %v2423 = vadd.f32 %v2421, %v2422
    %v2424 = vrot.slane %v2423, 2
    %v2425 = vadd.f32 %v2423, %v2424
    %v2426 = vrot.slane %v2425, 1
    %v2427 = vadd.f32 %v2425, %v2426
    %v2428 = vadd.f32 %v2397, %v2420
    %v2429 = vadd.f32 %v2399, %v2427
    %v2430 = vrcp.pop %v2428
    %v2431 = vrcp.pop %v2429
    %2433 = vset.pattern.permute.xlu0 0
    %2434 = vperm.xlu0 %2433, %v2397
    %v2435 = vpop.permute.xlu0 %2434
    %2438 = vset.pattern.permute.xlu0 0
    %2439 = vperm.xlu0 %2438, %v2399
    %v2440 = vpop.permute.xlu0 %2439
    %v2442 = vlaneseq
    %v2443 = vshrl.u32 %v2442, 7
    %v2444 = vsub.s32 0, %v2443
    %v2445 = vrot.slane %v2299, %v2444
    %v2446 = vlaneseq
    %v2447 = vshrl.u32 %v2446, 7
    %v2448 = vsub.s32 0, %v2447
    %v2449 = vrot.slane %v2306, %v2448
    %2450 = vrot.lane.b32.xlu0 %v2445, 96
    %v2451 = vpop.permute.xlu0 %2450
    %2452 = vrot.lane.b32.xlu0 %v2449, 96
    %v2453 = vpop.permute.xlu0 %2452
    %v2456 = vmul.f32 %v2435, %v2451
    %v2457 = vmul.f32 %v2440, %v2453
    %2459 = vset.pattern.permute.xlu0 0
    %2460 = vperm.xlu0 %2459, %v2411
    %v2461 = vpop.permute.xlu0 %2460
    %2464 = vset.pattern.permute.xlu0 0
    %2465 = vperm.xlu0 %2464, %v2413
    %v2466 = vpop.permute.xlu0 %2465
    %v2468 = vmul.f32 %v2461, %v2344
    %v2469 = vmul.f32 %v2466, %v2347
    %v2470 = vsel %vm1952, %v2468, 0.0
    %v2471 = vrot.slane %v2470, 4
    %v2472 = vadd.f32 %v2470, %v2471
    %v2473 = vrot.slane %v2472, 2
    %v2474 = vadd.f32 %v2472, %v2473
    %v2475 = vrot.slane %v2474, 1
    %v2476 = vadd.f32 %v2474, %v2475
    %v2477 = vsel %vm1952, %v2469, 0.0
    %v2478 = vrot.slane %v2477, 4
    %v2479 = vadd.f32 %v2477, %v2478
    %v2480 = vrot.slane %v2479, 2
    %v2481 = vadd.f32 %v2479, %v2480
    %v2482 = vrot.slane %v2481, 1
    %v2483 = vadd.f32 %v2481, %v2482
    %2486 = vrot.lane.b32.xlu0 %v2476, 96
    %v2487 = vpop.permute.xlu0 %2486
    %2488 = vrot.lane.b32.xlu0 %v2483, 96
    %v2489 = vpop.permute.xlu0 %2488
    %v2492 = vadd.f32 %v2456, %v2487
    %v2493 = vadd.f32 %v2457, %v2489
    %2495 = vset.pattern.permute.xlu0 0
    %2496 = vperm.xlu0 %2495, %v2430
    %v2497 = vpop.permute.xlu0 %2496
    %2500 = vset.pattern.permute.xlu0 0
    %2501 = vperm.xlu0 %2500, %v2431
    %v2502 = vpop.permute.xlu0 %2501
    %v2504 = vmul.f32 %v2492, %v2497
    %v2505 = vmul.f32 %v2493, %v2502
    %v2506 = vld [vmem:[#allocation2 + $0xd8] sm:$0xf]
    %v2507 = vld [vmem:[#allocation2 + $0xdc] sm:$0xf]
    %v2508 = vld [vmem:[#allocation2 + $0xe0] sm:$0xf]
    %v2509 = vld [vmem:[#allocation2 + $0xe4] sm:$0xf]
    %v2510 = vld [vmem:[#allocation5 + $0x98] sm:$0x1]
    %v2511 = vpack.c.bf16 %v2504, %v2504
    %v2512 = vpack.c.bf16 %v2505, %v2505
    %v2513 = vlaneseq
    %v2514 = vshrl.u32 %v2513, 7
    %v2515 = vsub.s32 0, %v2514
    %v2516 = vrot.slane %v2510, %v2515
    %v2519 = vunpack.c.l.b16 %v2511
    %v2520 = vunpack.c.l.b16 %v2512
    %v2521 = vrot.slane %v2520, 7
    %v2522 = vsel %vm1599, %v2521, %v2519
    %v2523 = vpack.c.b16 %v2522, %v2522
    %v2528 = vunpack.c.l.b16 %v2506
    %v2529 = vunpack.c.l.b16 %v2507
    %v2530 = vunpack.c.l.b16 %v2508
    %v2531 = vunpack.c.l.b16 %v2509
    %v2532 = vpack.c.b16 %v2529, %v2528
    %v2533 = vpack.c.b16 %v2531, %v2530
    %v2537 = vsel %vm127, %v2523, 0
    %2539 = vmatprep.subr.bf16.mxu0 0
    %2540 = vmatpush1.bf16.msra.mxu0 %v2532
    %2541 = vmatprep.subr.bf16.mxu0 0
    %2542 = vmatpush1.bf16.msra.mxu0 %v2533
    %2543 = vmatprep.subr.bf16.mxu0 0
    %2544 = vmatpush1.bf16.msra.mxu0 0
    %2545 = vmatprep.subr.bf16.mxu0 0
    %2546 = vmatpush1.bf16.msra.mxu0 0
    %2547 = vmatprep.subr.bf16.mxu0 0
    %2548 = vmatpush1.bf16.msra.mxu0 0
    %2549 = vmatprep.subr.bf16.mxu0 0
    %2550 = vmatpush1.bf16.msra.mxu0 0
    %2551 = vmatprep.subr.bf16.mxu0 0
    %2552 = vmatpush1.bf16.msra.mxu0 0
    %2553 = vmatprep.subr.bf16.mxu0 0
    %2554 = vmatpush1.bf16.msra.mxu0 0
    %2555 = vmatprep.subr.bf16.mxu0 0
    %2556 = vmatpush1.bf16.msra.mxu0 0
    %2557 = vmatprep.subr.bf16.mxu0 0
    %2558 = vmatpush1.bf16.msra.mxu0 0
    %2559 = vmatprep.subr.bf16.mxu0 0
    %2560 = vmatpush1.bf16.msra.mxu0 0
    %2561 = vmatprep.subr.bf16.mxu0 0
    %2562 = vmatpush1.bf16.msra.mxu0 0
    %2563 = vmatprep.subr.bf16.mxu0 0
    %2564 = vmatpush1.bf16.msra.mxu0 0
    %2565 = vmatprep.subr.bf16.mxu0 0
    %2566 = vmatpush1.bf16.msra.mxu0 0
    %2567 = vmatprep.subr.bf16.mxu0 0
    %2568 = vmatpush1.bf16.msra.mxu0 0
    %2569 = vmatprep.subr.bf16.mxu0 0
    %2570 = vmatpush1.bf16.msra.mxu0 0
    %2571 = vmatprep.mubr.bf16.mxu0 0
    %2572 = vmatmul.mubr.bf16.gmra.mrb[0].mxu0 %v2537
    %v2573 = vpop.f32.mrb[0].mxu0
    %v2574 = vadd.f32 %v2516, %v2573
    %v2575 = vpop.f32.mrb[0].mxu0
    %v2576 = vpop.f32.mrb[0].mxu0
    %v2577 = vpop.f32.mrb[0].mxu0
    %2578 = vdwg.mxu0
    %v2581 = vunpack.c.l.s4 1966171168
    %v2582 = vunpack.c.0.s8 %v2581
    %v2583 = vlaneseq
    %v2584 = vshrl.u32 %v2583, 7
    %v2585 = vsub.s32 %v2582, %v2584
    %v2586 = vrot.slane %v2574, %v2585
    %v2587 = vcombine.high %v2586, %v2586
    %v2589 = vunpack.c.l.s4 1966171168
    %v2590 = vunpack.c.0.s8 %v2589
    %v2591 = vlaneseq
    %v2592 = vshrl.u32 %v2591, 7
    %v2593 = vsub.s32 %v2590, %v2592
    %v2594 = vrot.slane %v2586, %v2593
    %v2596 = vunpack.c.l.s4 1966171168
    %v2597 = vunpack.c.0.s8 %v2596
    %v2598 = vlaneseq
    %v2599 = vshrl.u32 %v2598, 7
    %v2600 = vsub.s32 %v2597, %v2599
    %v2601 = vrot.slane %v2587, %v2600
    %v2604 = vld [vmem:[#allocation2 + $0xf8] sm:$0xf]
    %v2605 = vld [vmem:[#allocation2 + $0xfc] sm:$0xf]
    %v2606 = vld [vmem:[#allocation2 + $0x100] sm:$0xf]
    %v2607 = vld [vmem:[#allocation2 + $0x104] sm:$0xf]
    %v2608 = vld [vmem:[#allocation5 + $0xa8] sm:$0x1]
    %v2609 = vld [vmem:[#allocation2 + $0xe8] sm:$0xf]
    %v2610 = vld [vmem:[#allocation2 + $0xec] sm:$0xf]
    %v2611 = vld [vmem:[#allocation2 + $0xf0] sm:$0xf]
    %v2612 = vld [vmem:[#allocation2 + $0xf4] sm:$0xf]
    %v2613 = vld [vmem:[#allocation5 + $0xa0] sm:$0x1]
    %v2614 = vpack.c.bf16 %v2594, %v2594
    %v2615 = vpack.c.bf16 %v2601, %v2601
    %v2616 = vlaneseq
    %v2617 = vshrl.u32 %v2616, 7
    %v2618 = vsub.s32 0, %v2617
    %v2619 = vrot.slane %v2613, %v2618
    %v2622 = vunpack.c.l.b16 %v2614
    %v2623 = vunpack.c.l.b16 %v2615
    %v2624 = vrot.slane %v2623, 7
    %v2625 = vsel %vm1599, %v2624, %v2622
    %v2626 = vpack.c.b16 %v2625, %v2625
    %v2631 = vunpack.c.l.b16 %v2609
    %v2632 = vunpack.c.l.b16 %v2610
    %v2633 = vunpack.c.l.b16 %v2611
    %v2634 = vunpack.c.l.b16 %v2612
    %v2635 = vpack.c.b16 %v2632, %v2631
    %v2636 = vpack.c.b16 %v2634, %v2633
    %v2640 = vsel %vm127, %v2626, 0
    %2642 = vmatprep.subr.bf16.mxu0 0
    %2643 = vmatpush1.bf16.msra.mxu0 %v2635
    %2644 = vmatprep.subr.bf16.mxu0 0
    %2645 = vmatpush1.bf16.msra.mxu0 %v2636
    %2646 = vmatprep.subr.bf16.mxu0 0
    %2647 = vmatpush1.bf16.msra.mxu0 0
    %2648 = vmatprep.subr.bf16.mxu0 0
    %2649 = vmatpush1.bf16.msra.mxu0 0
    %2650 = vmatprep.subr.bf16.mxu0 0
    %2651 = vmatpush1.bf16.msra.mxu0 0
    %2652 = vmatprep.subr.bf16.mxu0 0
    %2653 = vmatpush1.bf16.msra.mxu0 0
    %2654 = vmatprep.subr.bf16.mxu0 0
    %2655 = vmatpush1.bf16.msra.mxu0 0
    %2656 = vmatprep.subr.bf16.mxu0 0
    %2657 = vmatpush1.bf16.msra.mxu0 0
    %2658 = vmatprep.subr.bf16.mxu0 0
    %2659 = vmatpush1.bf16.msra.mxu0 0
    %2660 = vmatprep.subr.bf16.mxu0 0
    %2661 = vmatpush1.bf16.msra.mxu0 0
    %2662 = vmatprep.subr.bf16.mxu0 0
    %2663 = vmatpush1.bf16.msra.mxu0 0
    %2664 = vmatprep.subr.bf16.mxu0 0
    %2665 = vmatpush1.bf16.msra.mxu0 0
    %2666 = vmatprep.subr.bf16.mxu0 0
    %2667 = vmatpush1.bf16.msra.mxu0 0
    %2668 = vmatprep.subr.bf16.mxu0 0
    %2669 = vmatpush1.bf16.msra.mxu0 0
    %2670 = vmatprep.subr.bf16.mxu0 0
    %2671 = vmatpush1.bf16.msra.mxu0 0
    %2672 = vmatprep.subr.bf16.mxu0 0
    %2673 = vmatpush1.bf16.msra.mxu0 0
    %2674 = vmatprep.mubr.bf16.mxu0 0
    %2675 = vmatmul.mubr.bf16.gmra.mrb[0].mxu0 %v2640
    %v2676 = vpop.f32.mrb[0].mxu0
    %v2677 = vadd.f32 %v2619, %v2676
    %v2678 = vpop.f32.mrb[0].mxu0
    %v2679 = vpop.f32.mrb[0].mxu0
    %v2680 = vpop.f32.mrb[0].mxu0
    %2681 = vdwg.mxu0
    %v2684 = vunpack.c.l.s4 1966171168
    %v2685 = vunpack.c.0.s8 %v2684
    %v2686 = vlaneseq
    %v2687 = vshrl.u32 %v2686, 7
    %v2688 = vsub.s32 %v2685, %v2687
    %v2689 = vrot.slane %v2677, %v2688
    %v2690 = vcombine.high %v2689, %v2689
    %v2692 = vunpack.c.l.s4 1966171168
    %v2693 = vunpack.c.0.s8 %v2692
    %v2694 = vlaneseq
    %v2695 = vshrl.u32 %v2694, 7
    %v2696 = vsub.s32 %v2693, %v2695
    %v2697 = vrot.slane %v2689, %v2696
    %v2699 = vunpack.c.l.s4 1966171168
    %v2700 = vunpack.c.0.s8 %v2699
    %v2701 = vlaneseq
    %v2702 = vshrl.u32 %v2701, 7
    %v2703 = vsub.s32 %v2700, %v2702
    %v2704 = vrot.slane %v2690, %v2703
    %v2707 = vsel %vm1682, %v2594, 0.0
    %2708 = vadd.xlane.f32.xlu0 %v2707
    %v2709 = vpop.xlane.xlu0 %2708
    %v2710 = vsel %vm1682, %v2601, 0.0
    %2711 = vadd.xlane.f32.xlu0 %v2710
    %v2712 = vpop.xlane.xlu0 %2711
    %v2713 = vmul.f32 %v2709, %v134
    %v2714 = vmul.f32 %v2712, %v134
    %v2715 = vsub.f32 %v2594, %v2713
    %v2716 = vsub.f32 %v2601, %v2714
    %v2717 = vmul.f32 %v2715, %v2715
    %v2718 = vmul.f32 %v2716, %v2716
    %v2719 = vsel %vm1682, %v2717, 0.0
    %2720 = vadd.xlane.f32.xlu0 %v2719
    %v2721 = vpop.xlane.xlu0 %2720
    %v2722 = vsel %vm1682, %v2718, 0.0
    %2723 = vadd.xlane.f32.xlu0 %v2722
    %v2724 = vpop.xlane.xlu0 %2723
    %v2725 = vmul.f32 %v2721, %v134
    %v2726 = vmul.f32 %v2724, %v134
    %v2727 = vadd.f32 %v2725, 1e-05
    %v2728 = vadd.f32 %v2726, 1e-05
    %v2729 = vrsqrt.pop %v2727
    %v2730 = vrsqrt.pop %v2728
    %v2731 = vmul.f32 %v2715, %v2729
    %v2732 = vmul.f32 %v2716, %v2730
    %v2733 = vpack.c.bf16 %v2731, %v2731
    %v2734 = vpack.c.bf16 %v2732, %v2732
    %v2735 = vlaneseq
    %v2736 = vshrl.u32 %v2735, 7
    %v2737 = vsub.s32 0, %v2736
    %v2738 = vrot.slane %v2608, %v2737
    %v2741 = vunpack.c.l.b16 %v2733
    %v2742 = vunpack.c.l.b16 %v2734
    %v2743 = vrot.slane %v2742, 7
    %v2744 = vsel %vm1599, %v2743, %v2741
    %v2745 = vpack.c.b16 %v2744, %v2744
    %v2750 = vunpack.c.l.b16 %v2604
    %v2751 = vunpack.c.l.b16 %v2605
    %v2752 = vunpack.c.l.b16 %v2606
    %v2753 = vunpack.c.l.b16 %v2607
    %v2754 = vpack.c.b16 %v2751, %v2750
    %v2755 = vpack.c.b16 %v2753, %v2752
    %v2759 = vsel %vm127, %v2745, 0
    %2761 = vmatprep.subr.bf16.mxu0 0
    %2762 = vmatpush1.bf16.msra.mxu0 %v2754
    %2763 = vmatprep.subr.bf16.mxu0 0
    %2764 = vmatpush1.bf16.msra.mxu0 %v2755
    %2765 = vmatprep.subr.bf16.mxu0 0
    %2766 = vmatpush1.bf16.msra.mxu0 0
    %2767 = vmatprep.subr.bf16.mxu0 0
    %2768 = vmatpush1.bf16.msra.mxu0 0
    %2769 = vmatprep.subr.bf16.mxu0 0
    %2770 = vmatpush1.bf16.msra.mxu0 0
    %2771 = vmatprep.subr.bf16.mxu0 0
    %2772 = vmatpush1.bf16.msra.mxu0 0
    %2773 = vmatprep.subr.bf16.mxu0 0
    %2774 = vmatpush1.bf16.msra.mxu0 0
    %2775 = vmatprep.subr.bf16.mxu0 0
    %2776 = vmatpush1.bf16.msra.mxu0 0
    %2777 = vmatprep.subr.bf16.mxu0 0
    %2778 = vmatpush1.bf16.msra.mxu0 0
    %2779 = vmatprep.subr.bf16.mxu0 0
    %2780 = vmatpush1.bf16.msra.mxu0 0
    %2781 = vmatprep.subr.bf16.mxu0 0
    %2782 = vmatpush1.bf16.msra.mxu0 0
    %2783 = vmatprep.subr.bf16.mxu0 0
    %2784 = vmatpush1.bf16.msra.mxu0 0
    %2785 = vmatprep.subr.bf16.mxu0 0
    %2786 = vmatpush1.bf16.msra.mxu0 0
    %2787 = vmatprep.subr.bf16.mxu0 0
    %2788 = vmatpush1.bf16.msra.mxu0 0
    %2789 = vmatprep.subr.bf16.mxu0 0
    %2790 = vmatpush1.bf16.msra.mxu0 0
    %2791 = vmatprep.subr.bf16.mxu0 0
    %2792 = vmatpush1.bf16.msra.mxu0 0
    %2793 = vmatprep.mubr.bf16.mxu0 0
    %2794 = vmatmul.mubr.bf16.gmra.mrb[0].mxu0 %v2759
    %v2795 = vpop.f32.mrb[0].mxu0
    %v2796 = vadd.f32 %v2738, %v2795
    %v2797 = vpop.f32.mrb[0].mxu0
    %v2798 = vpop.f32.mrb[0].mxu0
    %v2799 = vpop.f32.mrb[0].mxu0
    %2800 = vdwg.mxu0
    %v2803 = vunpack.c.l.s4 1966171168
    %v2804 = vunpack.c.0.s8 %v2803
    %v2805 = vlaneseq
    %v2806 = vshrl.u32 %v2805, 7
    %v2807 = vsub.s32 %v2804, %v2806
    %v2808 = vrot.slane %v2796, %v2807
    %v2809 = vcombine.high %v2808, %v2808
    %v2811 = vunpack.c.l.s4 1966171168
    %v2812 = vunpack.c.0.s8 %v2811
    %v2813 = vlaneseq
    %v2814 = vshrl.u32 %v2813, 7
    %v2815 = vsub.s32 %v2812, %v2814
    %v2816 = vrot.slane %v2808, %v2815
    %v2818 = vunpack.c.l.s4 1966171168
    %v2819 = vunpack.c.0.s8 %v2818
    %v2820 = vlaneseq
    %v2821 = vshrl.u32 %v2820, 7
    %v2822 = vsub.s32 %v2819, %v2821
    %v2823 = vrot.slane %v2809, %v2822
    %2826 = vmatprep.subr.bf16.mxu0 0
    %2827 = vmatpush1.bf16.msra.mxu0 %v2754
    %2828 = vmatprep.subr.bf16.mxu0 0
    %2829 = vmatpush1.bf16.msra.mxu0 %v2755
    %2830 = vmatprep.subr.bf16.mxu0 0
    %2831 = vmatpush1.bf16.msra.mxu0 0
    %2832 = vmatprep.subr.bf16.mxu0 0
    %2833 = vmatpush1.bf16.msra.mxu0 0
    %2834 = vmatprep.subr.bf16.mxu0 0
    %2835 = vmatpush1.bf16.msra.mxu0 0
    %2836 = vmatprep.subr.bf16.mxu0 0
    %2837 = vmatpush1.bf16.msra.mxu0 0
    %2838 = vmatprep.subr.bf16.mxu0 0
    %2839 = vmatpush1.bf16.msra.mxu0 0
    %2840 = vmatprep.subr.bf16.mxu0 0
    %2841 = vmatpush1.bf16.msra.mxu0 0
    %2842 = vmatprep.subr.bf16.mxu0 0
    %2843 = vmatpush1.bf16.msra.mxu0 0
    %2844 = vmatprep.subr.bf16.mxu0 0
    %2845 = vmatpush1.bf16.msra.mxu0 0
    %2846 = vmatprep.subr.bf16.mxu0 0
    %2847 = vmatpush1.bf16.msra.mxu0 0
    %2848 = vmatprep.subr.bf16.mxu0 0
    %2849 = vmatpush1.bf16.msra.mxu0 0
    %2850 = vmatprep.subr.bf16.mxu0 0
    %2851 = vmatpush1.bf16.msra.mxu0 0
    %2852 = vmatprep.subr.bf16.mxu0 0
    %2853 = vmatpush1.bf16.msra.mxu0 0
    %2854 = vmatprep.subr.bf16.mxu0 0
    %2855 = vmatpush1.bf16.msra.mxu0 0
    %2856 = vmatprep.subr.bf16.mxu0 0
    %2857 = vmatpush1.bf16.msra.mxu0 0
    %2858 = vmatprep.mubr.bf16.mxu0 0
    %2859 = vmatmul.mubr.bf16.gmra.mrb[0].mxu0 %v1788
    %v2860 = vpop.f32.mrb[0].mxu0
    %v2861 = vadd.f32 %v2738, %v2860
    %v2862 = vpop.f32.mrb[0].mxu0
    %v2863 = vpop.f32.mrb[0].mxu0
    %v2864 = vadd.f32 %v2738, %v2863
    %v2865 = vpop.f32.mrb[0].mxu0
    %2866 = vdwg.mxu0
    %v2867 = vmul.f32 %v2697, %v2816
    %v2868 = vmul.f32 %v2704, %v2823
    %v2869 = vsel %vm1682, %v2867, 0.0
    %2870 = vadd.xlane.f32.xlu0 %v2869
    %v2871 = vpop.xlane.xlu0 %2870
    %v2872 = vsel %vm1682, %v2868, 0.0
    %2873 = vadd.xlane.f32.xlu0 %v2872
    %v2874 = vpop.xlane.xlu0 %2873
    %v2875 = vlaneseq
    %v2876 = vshrl.u32 %v2875, 7
    %v2877 = vsub.s32 0, %v2876
    %v2878 = vrot.slane %v2697, %v2877
    %v2879 = vlaneseq
    %v2880 = vshrl.u32 %v2879, 7
    %v2881 = vsub.s32 0, %v2880
    %v2882 = vrot.slane %v2704, %v2881
    %v2885 = vmul.f32 %v2878, %v2861
    %v2886 = vmul.f32 %v2882, %v2864
    %v2887 = vsel %vm127, %v2885, 0.0
    %2888 = vadd.xlane.f32.xlu0 %v2887
    %v2889 = vpop.xlane.xlu0 %2888
    %v2890 = vsel %vm127, %v2886, 0.0
    %2891 = vadd.xlane.f32.xlu0 %v2890
    %v2892 = vpop.xlane.xlu0 %2891
    %v2893 = vadd.f32 %v2889, %v1578
    %v2894 = vadd.f32 %v2892, %v1579
    %v2895 = vsel %vm1859, %v2893, -inf
    %v2896 = vrot.slane %v2895, 4
    %v2897 = vmax.f32 %v2895, %v2896
    %v2898 = vrot.slane %v2897, 2
    %v2899 = vmax.f32 %v2897, %v2898
    %v2900 = vrot.slane %v2899, 1
    %v2901 = vmax.f32 %v2899, %v2900
    %v2902 = vsel %vm1859, %v2894, -inf
    %v2903 = vrot.slane %v2902, 4
    %v2904 = vmax.f32 %v2902, %v2903
    %v2905 = vrot.slane %v2904, 2
    %v2906 = vmax.f32 %v2904, %v2905
    %v2907 = vrot.slane %v2906, 1
    %v2908 = vmax.f32 %v2906, %v2907
    %v2909 = vmax.f32 %v2901, %v2871
    %v2910 = vmax.f32 %v2908, %v2874
    %v2911 = vsub.f32 %v2871, %v2909
    %v2912 = vsub.f32 %v2874, %v2910
    %v2913 = vmul.f32 %v2911, 1.442695
    %v2914 = vpow.pop %v2913
    %v2915 = vmul.f32 %v2912, 1.442695
    %v2916 = vpow.pop %v2915
    %v2917 = vlaneseq
    %v2918 = vshrl.u32 %v2917, 7
    %v2919 = vsub.s32 0, %v2918
    %v2920 = vrot.slane %v2909, %v2919
    %v2921 = vlaneseq
    %v2922 = vshrl.u32 %v2921, 7
    %v2923 = vsub.s32 0, %v2922
    %v2924 = vrot.slane %v2910, %v2923
    %v2925 = vsub.f32 %v2893, %v2920
    %v2926 = vsub.f32 %v2894, %v2924
    %v2927 = vmul.f32 %v2925, 1.442695
    %v2928 = vpow.pop %v2927
    %v2929 = vmul.f32 %v2926, 1.442695
    %v2930 = vpow.pop %v2929
    %v2931 = vsel %vm1859, %v2928, 0.0
    %v2932 = vrot.slane %v2931, 4
    %v2933 = vadd.f32 %v2931, %v2932
    %v2934 = vrot.slane %v2933, 2
    %v2935 = vadd.f32 %v2933, %v2934
    %v2936 = vrot.slane %v2935, 1
    %v2937 = vadd.f32 %v2935, %v2936
    %v2938 = vsel %vm1859, %v2930, 0.0
    %v2939 = vrot.slane %v2938, 4
    %v2940 = vadd.f32 %v2938, %v2939
    %v2941 = vrot.slane %v2940, 2
    %v2942 = vadd.f32 %v2940, %v2941
    %v2943 = vrot.slane %v2942, 1
    %v2944 = vadd.f32 %v2942, %v2943
    %v2945 = vadd.f32 %v2914, %v2937
    %v2946 = vadd.f32 %v2916, %v2944
    %v2947 = vrcp.pop %v2945
    %v2948 = vrcp.pop %v2946
    %2950 = vset.pattern.permute.xlu0 0
    %2951 = vperm.xlu0 %2950, %v2914
    %v2952 = vpop.permute.xlu0 %2951
    %2955 = vset.pattern.permute.xlu0 0
    %2956 = vperm.xlu0 %2955, %v2916
    %v2957 = vpop.permute.xlu0 %2956
    %v2959 = vlaneseq
    %v2960 = vshrl.u32 %v2959, 7
    %v2961 = vsub.s32 0, %v2960
    %v2962 = vrot.slane %v2816, %v2961
    %v2963 = vlaneseq
    %v2964 = vshrl.u32 %v2963, 7
    %v2965 = vsub.s32 0, %v2964
    %v2966 = vrot.slane %v2823, %v2965
    %2967 = vrot.lane.b32.xlu0 %v2962, 96
    %v2968 = vpop.permute.xlu0 %2967
    %2969 = vrot.lane.b32.xlu0 %v2966, 96
    %v2970 = vpop.permute.xlu0 %2969
    %v2973 = vmul.f32 %v2952, %v2968
    %v2974 = vmul.f32 %v2957, %v2970
    %2976 = vset.pattern.permute.xlu0 0
    %2977 = vperm.xlu0 %2976, %v2928
    %v2978 = vpop.permute.xlu0 %2977
    %2981 = vset.pattern.permute.xlu0 0
    %2982 = vperm.xlu0 %2981, %v2930
    %v2983 = vpop.permute.xlu0 %2982
    %v2985 = vmul.f32 %v2978, %v2861
    %v2986 = vmul.f32 %v2983, %v2864
    %v2987 = vsel %vm1952, %v2985, 0.0
    %v2988 = vrot.slane %v2987, 4
    %v2989 = vadd.f32 %v2987, %v2988
    %v2990 = vrot.slane %v2989, 2
    %v2991 = vadd.f32 %v2989, %v2990
    %v2992 = vrot.slane %v2991, 1
    %v2993 = vadd.f32 %v2991, %v2992
    %v2994 = vsel %vm1952, %v2986, 0.0
    %v2995 = vrot.slane %v2994, 4
    %v2996 = vadd.f32 %v2994, %v2995
    %v2997 = vrot.slane %v2996, 2
    %v2998 = vadd.f32 %v2996, %v2997
    %v2999 = vrot.slane %v2998, 1
    %v3000 = vadd.f32 %v2998, %v2999
    %3003 = vrot.lane.b32.xlu0 %v2993, 96
    %v3004 = vpop.permute.xlu0 %3003
    %3005 = vrot.lane.b32.xlu0 %v3000, 96
    %v3006 = vpop.permute.xlu0 %3005
    %v3009 = vadd.f32 %v2973, %v3004
    %v3010 = vadd.f32 %v2974, %v3006
    %3012 = vset.pattern.permute.xlu0 0
    %3013 = vperm.xlu0 %3012, %v2947
    %v3014 = vpop.permute.xlu0 %3013
    %3017 = vset.pattern.permute.xlu0 0
    %3018 = vperm.xlu0 %3017, %v2948
    %v3019 = vpop.permute.xlu0 %3018
    %v3021 = vmul.f32 %v3009, %v3014
    %v3022 = vmul.f32 %v3010, %v3019
    %v3023 = vld [vmem:[#allocation2 + $0x108] sm:$0xf]
    %v3024 = vld [vmem:[#allocation2 + $0x10c] sm:$0xf]
    %v3025 = vld [vmem:[#allocation2 + $0x110] sm:$0xf]
    %v3026 = vld [vmem:[#allocation2 + $0x114] sm:$0xf]
    %v3027 = vld [vmem:[#allocation5 + $0xb0] sm:$0x1]
    %v3028 = vpack.c.bf16 %v3021, %v3021
    %v3029 = vpack.c.bf16 %v3022, %v3022
    %v3030 = vlaneseq
    %v3031 = vshrl.u32 %v3030, 7
    %v3032 = vsub.s32 0, %v3031
    %v3033 = vrot.slane %v3027, %v3032
    %v3036 = vunpack.c.l.b16 %v3028
    %v3037 = vunpack.c.l.b16 %v3029
    %v3038 = vrot.slane %v3037, 7
    %v3039 = vsel %vm1599, %v3038, %v3036
    %v3040 = vpack.c.b16 %v3039, %v3039
    %v3045 = vunpack.c.l.b16 %v3023
    %v3046 = vunpack.c.l.b16 %v3024
    %v3047 = vunpack.c.l.b16 %v3025
    %v3048 = vunpack.c.l.b16 %v3026
    %v3049 = vpack.c.b16 %v3046, %v3045
    %v3050 = vpack.c.b16 %v3048, %v3047
    %v3054 = vsel %vm127, %v3040, 0
    %3056 = vmatprep.subr.bf16.mxu0 0
    %3057 = vmatpush1.bf16.msra.mxu0 %v3049
    %3058 = vmatprep.subr.bf16.mxu0 0
    %3059 = vmatpush1.bf16.msra.mxu0 %v3050
    %3060 = vmatprep.subr.bf16.mxu0 0
    %3061 = vmatpush1.bf16.msra.mxu0 0
    %3062 = vmatprep.subr.bf16.mxu0 0
    %3063 = vmatpush1.bf16.msra.mxu0 0
    %3064 = vmatprep.subr.bf16.mxu0 0
    %3065 = vmatpush1.bf16.msra.mxu0 0
    %3066 = vmatprep.subr.bf16.mxu0 0
    %3067 = vmatpush1.bf16.msra.mxu0 0
    %3068 = vmatprep.subr.bf16.mxu0 0
    %3069 = vmatpush1.bf16.msra.mxu0 0
    %3070 = vmatprep.subr.bf16.mxu0 0
    %3071 = vmatpush1.bf16.msra.mxu0 0
    %3072 = vmatprep.subr.bf16.mxu0 0
    %3073 = vmatpush1.bf16.msra.mxu0 0
    %3074 = vmatprep.subr.bf16.mxu0 0
    %3075 = vmatpush1.bf16.msra.mxu0 0
    %3076 = vmatprep.subr.bf16.mxu0 0
    %3077 = vmatpush1.bf16.msra.mxu0 0
    %3078 = vmatprep.subr.bf16.mxu0 0
    %3079 = vmatpush1.bf16.msra.mxu0 0
    %3080 = vmatprep.subr.bf16.mxu0 0
    %3081 = vmatpush1.bf16.msra.mxu0 0
    %3082 = vmatprep.subr.bf16.mxu0 0
    %3083 = vmatpush1.bf16.msra.mxu0 0
    %3084 = vmatprep.subr.bf16.mxu0 0
    %3085 = vmatpush1.bf16.msra.mxu0 0
    %3086 = vmatprep.subr.bf16.mxu0 0
    %3087 = vmatpush1.bf16.msra.mxu0 0
    %3088 = vmatprep.mubr.bf16.mxu0 0
    %3089 = vmatmul.mubr.bf16.gmra.mrb[0].mxu0 %v3054
    %v3090 = vpop.f32.mrb[0].mxu0
    %v3091 = vadd.f32 %v3033, %v3090
    %v3092 = vpop.f32.mrb[0].mxu0
    %v3093 = vpop.f32.mrb[0].mxu0
    %v3094 = vpop.f32.mrb[0].mxu0
    %3095 = vdwg.mxu0
    %v3098 = vunpack.c.l.s4 1966171168
    %v3099 = vunpack.c.0.s8 %v3098
    %v3100 = vlaneseq
    %v3101 = vshrl.u32 %v3100, 7
    %v3102 = vsub.s32 %v3099, %v3101
    %v3103 = vrot.slane %v3091, %v3102
    %v3104 = vcombine.high %v3103, %v3103
    %v3106 = vunpack.c.l.s4 1966171168
    %v3107 = vunpack.c.0.s8 %v3106
    %v3108 = vlaneseq
    %v3109 = vshrl.u32 %v3108, 7
    %v3110 = vsub.s32 %v3107, %v3109
    %v3111 = vrot.slane %v3103, %v3110
    %v3113 = vunpack.c.l.s4 1966171168
    %v3114 = vunpack.c.0.s8 %v3113
    %v3115 = vlaneseq
    %v3116 = vshrl.u32 %v3115, 7
    %v3117 = vsub.s32 %v3114, %v3116
    %v3118 = vrot.slane %v3104, %v3117
    %v3121 = vld [vmem:[#allocation2 + $0x118] sm:$0xf]
    %v3122 = vld [vmem:[#allocation2 + $0x11c] sm:$0xf]
    %v3123 = vld [vmem:[#allocation2 + $0x120] sm:$0xf]
    %v3124 = vld [vmem:[#allocation2 + $0x124] sm:$0xf]
    %v3125 = vld [vmem:[#allocation5 + $0xb8] sm:$0x1]
    %v3126 = vpack.c.bf16 %v3111, %v3111
    %v3127 = vpack.c.bf16 %v3118, %v3118
    %v3128 = vlaneseq
    %v3129 = vshrl.u32 %v3128, 7
    %v3130 = vsub.s32 0, %v3129
    %v3131 = vrot.slane %v3125, %v3130
    %v3134 = vunpack.c.l.b16 %v3126
    %v3135 = vunpack.c.l.b16 %v3127
    %v3136 = vrot.slane %v3135, 7
    %v3137 = vsel %vm1599, %v3136, %v3134
    %v3138 = vpack.c.b16 %v3137, %v3137
    %v3143 = vunpack.c.l.b16 %v3121
    %v3144 = vunpack.c.l.b16 %v3122
    %v3145 = vunpack.c.l.b16 %v3123
    %v3146 = vunpack.c.l.b16 %v3124
    %v3147 = vpack.c.b16 %v3144, %v3143
    %v3148 = vpack.c.b16 %v3146, %v3145
    %v3152 = vsel %vm127, %v3138, 0
    %3154 = vmatprep.subr.bf16.mxu0 0
    %3155 = vmatpush1.bf16.msra.mxu0 %v3147
    %3156 = vmatprep.subr.bf16.mxu0 0
    %3157 = vmatpush1.bf16.msra.mxu0 %v3148
    %3158 = vmatprep.subr.bf16.mxu0 0
    %3159 = vmatpush1.bf16.msra.mxu0 0
    %3160 = vmatprep.subr.bf16.mxu0 0
    %3161 = vmatpush1.bf16.msra.mxu0 0
    %3162 = vmatprep.subr.bf16.mxu0 0
    %3163 = vmatpush1.bf16.msra.mxu0 0
    %3164 = vmatprep.subr.bf16.mxu0 0
    %3165 = vmatpush1.bf16.msra.mxu0 0
    %3166 = vmatprep.subr.bf16.mxu0 0
    %3167 = vmatpush1.bf16.msra.mxu0 0
    %3168 = vmatprep.subr.bf16.mxu0 0
    %3169 = vmatpush1.bf16.msra.mxu0 0
    %3170 = vmatprep.subr.bf16.mxu0 0
    %3171 = vmatpush1.bf16.msra.mxu0 0
    %3172 = vmatprep.subr.bf16.mxu0 0
    %3173 = vmatpush1.bf16.msra.mxu0 0
    %3174 = vmatprep.subr.bf16.mxu0 0
    %3175 = vmatpush1.bf16.msra.mxu0 0
    %3176 = vmatprep.subr.bf16.mxu0 0
    %3177 = vmatpush1.bf16.msra.mxu0 0
    %3178 = vmatprep.subr.bf16.mxu0 0
    %3179 = vmatpush1.bf16.msra.mxu0 0
    %3180 = vmatprep.subr.bf16.mxu0 0
    %3181 = vmatpush1.bf16.msra.mxu0 0
    %3182 = vmatprep.subr.bf16.mxu0 0
    %3183 = vmatpush1.bf16.msra.mxu0 0
    %3184 = vmatprep.subr.bf16.mxu0 0
    %3185 = vmatpush1.bf16.msra.mxu0 0
    %3186 = vmatprep.mubr.bf16.mxu0 0
    %3187 = vmatmul.mubr.bf16.gmra.mrb[0].mxu0 %v3152
    %v3188 = vpop.f32.mrb[0].mxu0
    %v3189 = vadd.f32 %v3131, %v3188
    %v3190 = vpop.f32.mrb[0].mxu0
    %v3191 = vpop.f32.mrb[0].mxu0
    %v3192 = vpop.f32.mrb[0].mxu0
    %3193 = vdwg.mxu0
    %v3194 = vmax.f32 %v3189, 0.0
    %v3195 = vld [vmem:[#allocation2 + $0x128] sm:$0xf]
    %v3196 = vld [vmem:[#allocation2 + $0x12c] sm:$0xf]
    %v3197 = vld [vmem:[#allocation2 + $0x130] sm:$0xf]
    %v3198 = vld [vmem:[#allocation2 + $0x134] sm:$0xf]
    %v3199 = vld [vmem:[#allocation2 + $0x138] sm:$0xf]
    %v3200 = vld [vmem:[#allocation2 + $0x13c] sm:$0xf]
    %v3201 = vld [vmem:[#allocation2 + $0x140] sm:$0xf]
    %v3202 = vld [vmem:[#allocation2 + $0x144] sm:$0xf]
    %v3203 = vld [vmem:[#allocation2 + $0x148] sm:$0xf]
    %v3204 = vld [vmem:[#allocation2 + $0x14c] sm:$0xf]
    %v3205 = vld [vmem:[#allocation2 + $0x150] sm:$0xf]
    %v3206 = vld [vmem:[#allocation2 + $0x154] sm:$0xf]
    %v3207 = vld [vmem:[#allocation2 + $0x158] sm:$0xf]
    %v3208 = vld [vmem:[#allocation2 + $0x15c] sm:$0xf]
    %v3209 = vld [vmem:[#allocation2 + $0x160] sm:$0xf]
    %v3210 = vld [vmem:[#allocation2 + $0x164] sm:$0xf]
    %v3211 = vld [vmem:[#allocation5 + $0xc0] sm:$0x1]
    %v3212 = vpack.c.bf16 %v3194, %v3194
    %v3213 = vlaneseq
    %v3214 = vshrl.u32 %v3213, 7
    %v3215 = vsub.s32 0, %v3214
    %v3216 = vrot.slane %v3211, %v3215
    %v3233 = vunpack.c.l.b16 %v3195
    %v3234 = vunpack.c.l.b16 %v3196
    %v3235 = vunpack.c.l.b16 %v3197
    %v3236 = vunpack.c.l.b16 %v3198
    %v3237 = vunpack.c.l.b16 %v3199
    %v3238 = vunpack.c.l.b16 %v3200
    %v3239 = vunpack.c.l.b16 %v3201
    %v3240 = vunpack.c.l.b16 %v3202
    %v3241 = vunpack.c.l.b16 %v3203
    %v3242 = vunpack.c.l.b16 %v3204
    %v3243 = vunpack.c.l.b16 %v3205
    %v3244 = vunpack.c.l.b16 %v3206
    %v3245 = vunpack.c.l.b16 %v3207
    %v3246 = vunpack.c.l.b16 %v3208
    %v3247 = vunpack.c.l.b16 %v3209
    %v3248 = vunpack.c.l.b16 %v3210
    %v3249 = vpack.c.b16 %v3234, %v3233
    %v3250 = vpack.c.b16 %v3236, %v3235
    %v3251 = vpack.c.b16 %v3238, %v3237
    %v3252 = vpack.c.b16 %v3240, %v3239
    %v3253 = vpack.c.b16 %v3242, %v3241
    %v3254 = vpack.c.b16 %v3244, %v3243
    %v3255 = vpack.c.b16 %v3246, %v3245
    %v3256 = vpack.c.b16 %v3248, %v3247
    %3265 = vmatprep.subr.bf16.mxu0 0
    %3266 = vmatpush1.bf16.msra.mxu0 %v3249
    %3267 = vmatprep.subr.bf16.mxu0 0
    %3268 = vmatpush1.bf16.msra.mxu0 %v3250
    %3269 = vmatprep.subr.bf16.mxu0 0
    %3270 = vmatpush1.bf16.msra.mxu0 %v3251
    %3271 = vmatprep.subr.bf16.mxu0 0
    %3272 = vmatpush1.bf16.msra.mxu0 %v3252
    %3273 = vmatprep.subr.bf16.mxu0 0
    %3274 = vmatpush1.bf16.msra.mxu0 %v3253
    %3275 = vmatprep.subr.bf16.mxu0 0
    %3276 = vmatpush1.bf16.msra.mxu0 %v3254
    %3277 = vmatprep.subr.bf16.mxu0 0
    %3278 = vmatpush1.bf16.msra.mxu0 %v3255
    %3279 = vmatprep.subr.bf16.mxu0 0
    %3280 = vmatpush1.bf16.msra.mxu0 %v3256
    %3281 = vmatprep.subr.bf16.mxu0 0
    %3282 = vmatpush1.bf16.msra.mxu0 0
    %3283 = vmatprep.subr.bf16.mxu0 0
    %3284 = vmatpush1.bf16.msra.mxu0 0
    %3285 = vmatprep.subr.bf16.mxu0 0
    %3286 = vmatpush1.bf16.msra.mxu0 0
    %3287 = vmatprep.subr.bf16.mxu0 0
    %3288 = vmatpush1.bf16.msra.mxu0 0
    %3289 = vmatprep.subr.bf16.mxu0 0
    %3290 = vmatpush1.bf16.msra.mxu0 0
    %3291 = vmatprep.subr.bf16.mxu0 0
    %3292 = vmatpush1.bf16.msra.mxu0 0
    %3293 = vmatprep.subr.bf16.mxu0 0
    %3294 = vmatpush1.bf16.msra.mxu0 0
    %3295 = vmatprep.subr.bf16.mxu0 0
    %3296 = vmatpush1.bf16.msra.mxu0 0
    %3297 = vmatprep.mubr.bf16.mxu0 0
    %3298 = vmatmul.mubr.bf16.gmra.mrb[0].mxu0 %v3212
    %v3299 = vpop.f32.mrb[0].mxu0
    %v3300 = vadd.f32 %v3216, %v3299
    %v3301 = vpop.f32.mrb[0].mxu0
    %v3302 = vpop.f32.mrb[0].mxu0
    %v3303 = vpop.f32.mrb[0].mxu0
    %3304 = vdwg.mxu0
    %v3305 = vmax.f32 %v3300, 0.0
    %v3306 = vld [vmem:[#allocation2 + $0x168] sm:$0xf]
    %v3307 = vld [vmem:[#allocation2 + $0x16c] sm:$0xf]
    %v3308 = vld [vmem:[#allocation2 + $0x170] sm:$0xf]
    %v3309 = vld [vmem:[#allocation2 + $0x174] sm:$0xf]
    %v3310 = vld [vmem:[#allocation2 + $0x178] sm:$0xf]
    %v3311 = vld [vmem:[#allocation2 + $0x17c] sm:$0xf]
    %v3312 = vld [vmem:[#allocation2 + $0x180] sm:$0xf]
    %v3313 = vld [vmem:[#allocation2 + $0x184] sm:$0xf]
    %v3314 = vld [vmem:[#allocation2 + $0x188] sm:$0xf]
    %v3315 = vld [vmem:[#allocation2 + $0x18c] sm:$0xf]
    %v3316 = vld [vmem:[#allocation2 + $0x190] sm:$0xf]
    %v3317 = vld [vmem:[#allocation2 + $0x194] sm:$0xf]
    %v3318 = vld [vmem:[#allocation2 + $0x198] sm:$0xf]
    %v3319 = vld [vmem:[#allocation2 + $0x19c] sm:$0xf]
    %v3320 = vld [vmem:[#allocation2 + $0x1a0] sm:$0xf]
    %v3321 = vld [vmem:[#allocation2 + $0x1a4] sm:$0xf]
    %v3322 = vld [vmem:[#allocation5 + $0xc8] sm:$0x1]
    %v3323 = vpack.c.bf16 %v3305, %v3305
    %v3324 = vlaneseq
    %v3325 = vshrl.u32 %v3324, 7
    %v3326 = vsub.s32 0, %v3325
    %v3327 = vrot.slane %v3322, %v3326
    %v3344 = vunpack.c.l.b16 %v3306
    %v3345 = vunpack.c.l.b16 %v3307
    %v3346 = vunpack.c.l.b16 %v3308
    %v3347 = vunpack.c.l.b16 %v3309
    %v3348 = vunpack.c.l.b16 %v3310
    %v3349 = vunpack.c.l.b16 %v3311
    %v3350 = vunpack.c.l.b16 %v3312
    %v3351 = vunpack.c.l.b16 %v3313
    %v3352 = vunpack.c.l.b16 %v3314
    %v3353 = vunpack.c.l.b16 %v3315
    %v3354 = vunpack.c.l.b16 %v3316
    %v3355 = vunpack.c.l.b16 %v3317
    %v3356 = vunpack.c.l.b16 %v3318
    %v3357 = vunpack.c.l.b16 %v3319
    %v3358 = vunpack.c.l.b16 %v3320
    %v3359 = vunpack.c.l.b16 %v3321
    %v3360 = vpack.c.b16 %v3345, %v3344
    %v3361 = vpack.c.b16 %v3347, %v3346
    %v3362 = vpack.c.b16 %v3349, %v3348
    %v3363 = vpack.c.b16 %v3351, %v3350
    %v3364 = vpack.c.b16 %v3353, %v3352
    %v3365 = vpack.c.b16 %v3355, %v3354
    %v3366 = vpack.c.b16 %v3357, %v3356
    %v3367 = vpack.c.b16 %v3359, %v3358
    %3376 = vmatprep.subr.bf16.mxu0 0
    %3377 = vmatpush1.bf16.msra.mxu0 %v3360
    %3378 = vmatprep.subr.bf16.mxu0 0
    %3379 = vmatpush1.bf16.msra.mxu0 %v3361
    %3380 = vmatprep.subr.bf16.mxu0 0
    %3381 = vmatpush1.bf16.msra.mxu0 %v3362
    %3382 = vmatprep.subr.bf16.mxu0 0
    %3383 = vmatpush1.bf16.msra.mxu0 %v3363
    %3384 = vmatprep.subr.bf16.mxu0 0
    %3385 = vmatpush1.bf16.msra.mxu0 %v3364
    %3386 = vmatprep.subr.bf16.mxu0 0
    %3387 = vmatpush1.bf16.msra.mxu0 %v3365
    %3388 = vmatprep.subr.bf16.mxu0 0
    %3389 = vmatpush1.bf16.msra.mxu0 %v3366
    %3390 = vmatprep.subr.bf16.mxu0 0
    %3391 = vmatpush1.bf16.msra.mxu0 %v3367
    %3392 = vmatprep.subr.bf16.mxu0 0
    %3393 = vmatpush1.bf16.msra.mxu0 0
    %3394 = vmatprep.subr.bf16.mxu0 0
    %3395 = vmatpush1.bf16.msra.mxu0 0
    %3396 = vmatprep.subr.bf16.mxu0 0
    %3397 = vmatpush1.bf16.msra.mxu0 0
    %3398 = vmatprep.subr.bf16.mxu0 0
    %3399 = vmatpush1.bf16.msra.mxu0 0
    %3400 = vmatprep.subr.bf16.mxu0 0
    %3401 = vmatpush1.bf16.msra.mxu0 0
    %3402 = vmatprep.subr.bf16.mxu0 0
    %3403 = vmatpush1.bf16.msra.mxu0 0
    %3404 = vmatprep.subr.bf16.mxu0 0
    %3405 = vmatpush1.bf16.msra.mxu0 0
    %3406 = vmatprep.subr.bf16.mxu0 0
    %3407 = vmatpush1.bf16.msra.mxu0 0
    %3408 = vmatprep.mubr.bf16.mxu0 0
    %3409 = vmatmul.mubr.bf16.gmra.mrb[0].mxu0 %v3323
    %v3410 = vpop.f32.mrb[0].mxu0
    %v3411 = vadd.f32 %v3327, %v3410
    %v3412 = vpop.f32.mrb[0].mxu0
    %v3413 = vpop.f32.mrb[0].mxu0
    %v3414 = vpop.f32.mrb[0].mxu0
    %3415 = vdwg.mxu0
    %3416 = vst [vmem:[#allocation7] sm:$0x3] %v3411
    // Predicated region
    $region30: #{apply.1} parent=1 // pred_check
      _
    $region31: #{apply.1} parent=1 // pred_check_branch
      %3418 = sbr.rel (0) target = $region33
    $region32: #{apply.1} parent=1 // pred_region
      %s3420 = ssub.s32 32, 32
      %3421 = vsyncadd [#allocation4], %s3420
      %s3423 = sshll.u32 [#allocation7], 4
      %s3424 = int_to_ptr.vmem [resolvable:$true] %s3423
      %3426 = dma.vmem_to_hbm [thread:$0]  %s3424, 32, %s5, [#allocation4]
    $region33: #{apply.1} parent=1 // pred_fallthru
      _
    // Predicated region
    $region34: #{apply.1} parent=1 // pred_check
      _
    $region35: #{apply.1} parent=1 // pred_check_branch
      %3428 = sbr.rel (0) target = $region37
    $region36: #{apply.1} parent=1 // pred_region
      %3429 = dma.done [#allocation4], 32
    $region37: #{apply.1} parent=1 // pred_fallthru
      _
    %3430 = vsyncpa [#allocation3], 1
    %3431 = vsyncpa [#allocation6], 1
    %3432 = vsyncpa [#allocation4], 1

</llo_original>
